<compile_context>
chip_gen: v6e
topology: v6e:2x2x1
jax: 0.10.0
libtpu: 0.0.40
codegen_flags: <defaults>
</compile_context>

<pallas_src>
import functools

import jax
import jax.numpy as jnp
import numpy as np
from jax import lax
from jax.experimental import pallas as pl
from jax.experimental.pallas import tpu as pltpu


# ----------------------------------------------------------------------------
# Fused kernel
# ----------------------------------------------------------------------------
def _lstm_gates(gates, c, H):
    """gates: (B, 4H) pre-activations in PyTorch (i, f, g, o) order."""
    i = jax.nn.sigmoid(gates[:, 0 * H:1 * H])
    f = jax.nn.sigmoid(gates[:, 1 * H:2 * H])
    g = jnp.tanh(gates[:, 2 * H:3 * H])
    o = jax.nn.sigmoid(gates[:, 3 * H:4 * H])
    c_new = f * c + i * g
    h_new = o * jnp.tanh(c_new)
    return h_new, c_new


def _rnn_fused_kernel(T, B, H, n_layers, *refs):
    """Fused bi-LSTM stack + FC.

    Ref layout (inputs, outputs, scratch):
      [0] lens (B,1) i32      [1] x (T*B, E) f32  (time-major rows, batch padded)
      per layer l: wx (Din,8H), whh_f (H,4H), whh_b (H,4H), bias (1,8H)
      fc_wf (H,O), fc_wb (H,O), fc_b (1,O)
      out (B,O)
      scratch: gx (T*B,8H), buf_f0, buf_b0, buf_f1, buf_b1 (each (T*B,H))
    """
    G = 4 * H
    nw = 4 * n_layers
    lens_ref, x_ref = refs[0], refs[1]
    layer_refs = refs[2:2 + nw]
    fc_wf_ref, fc_wb_ref, fc_b_ref = refs[2 + nw:5 + nw]
    out_ref = refs[5 + nw]
    gx_ref = refs[6 + nw]
    bufs = ((refs[7 + nw], refs[8 + nw]), (refs[9 + nw], refs[10 + nw]))

    lens = lens_ref[...]                              # (B, 1) int32

    h_f = c_f = h_b = c_b = None
    prev = None                                       # previous layer's (out_f, out_b)
    for layer in range(n_layers):
        wx_ref, whh_f_ref, whh_b_ref, bias_ref = layer_refs[4 * layer:4 * layer + 4]

        # Hoisted input projection for both directions & all timesteps:
        # one big (T*B, Din) x (Din, 8H) matmul instead of 2*T tiny dots.
        if layer == 0:
            gx = jnp.dot(x_ref[...], wx_ref[...],
                         preferred_element_type=jnp.float32)
        else:
            pf, pb = prev                             # inputs stay in VMEM; no concat:
            gx = (jnp.dot(pf[...], wx_ref[pl.ds(0, H), :],
                          preferred_element_type=jnp.float32)
                  + jnp.dot(pb[...], wx_ref[pl.ds(H, H), :],
                            preferred_element_type=jnp.float32))
        gx_ref[...] = gx + bias_ref[...]              # lanes [0,4H)=fwd, [4H,8H)=bwd

        whh_f = whh_f_ref[...]
        whh_b = whh_b_ref[...]
        write_out = layer < n_layers - 1              # last layer only needs final h
        out_f_ref, out_b_ref = bufs[layer % 2]

        def step(i, carry):
            h_f, c_f, h_b, c_b = carry

            # ---- forward direction, time index i ----
            rf = i * B
            g_f = (gx_ref[pl.ds(rf, B), pl.ds(0, G)]
                   + jnp.dot(h_f, whh_f, preferred_element_type=jnp.float32))
            hf_new, cf_new = _lstm_gates(g_f, c_f, H)
            m_f = lens > i                            # packed-sequence mask
            h_f = jnp.where(m_f, hf_new, h_f)
            c_f = jnp.where(m_f, cf_new, c_f)

            # ---- backward direction, time index T-1-i ----
            tb = T - 1 - i
            rb = tb * B
            g_b = (gx_ref[pl.ds(rb, B), pl.ds(G, G)]
                   + jnp.dot(h_b, whh_b, preferred_element_type=jnp.float32))
            hb_new, cb_new = _lstm_gates(g_b, c_b, H)
            m_b = lens > tb
            h_b = jnp.where(m_b, hb_new, h_b)
            c_b = jnp.where(m_b, cb_new, c_b)

            if write_out:
                # zero-fill padded positions (pad_packed_sequence semantics)
                out_f_ref[pl.ds(rf, B), :] = jnp.where(m_f, hf_new, 0.0)
                out_b_ref[pl.ds(rb, B), :] = jnp.where(m_b, hb_new, 0.0)
            return h_f, c_f, h_b, c_b

        z = jnp.zeros((B, H), jnp.float32)
        h_f, c_f, h_b, c_b = lax.fori_loop(0, T, step, (z, z, z, z),
                                           unroll=True)
        prev = (out_f_ref, out_b_ref)

    # Fused final FC on cat(h_fwd, h_bwd) of the last layer.
    # fc weight rows are split so no in-kernel concat is needed.
    out_ref[...] = (jnp.dot(h_f, fc_wf_ref[...], preferred_element_type=jnp.float32)
                    + jnp.dot(h_b, fc_wb_ref[...], preferred_element_type=jnp.float32)
                    + fc_b_ref[...])


# ----------------------------------------------------------------------------
# Wrapper: embedding gather + padding (glue) and the single pallas_call.
# ----------------------------------------------------------------------------
def rnn_forward(params, text, text_lengths):
    H = params["hidden_dim"]
    layers = params["lstm_layers"]
    n_layers = len(layers)
    T, B = text.shape
    B_pad = max(8, ((B + 7) // 8) * 8)                # fp32 sublane multiple
    O = params["fc_w"].shape[1]

    # Embedding lookup (gather) + batch padding, flattened time-major. (glue)
    emb = params["embedding"][text]                   # (T, B, E)
    E = emb.shape[-1]
    x = jnp.zeros((T, B_pad, E), jnp.float32).at[:, :B, :].set(emb)
    x = x.reshape(T * B_pad, E)

    # Padded batch entries get length 0 -> their state stays zero.
    lens = jnp.zeros((B_pad, 1), jnp.int32).at[:B, 0].set(
        text_lengths.astype(jnp.int32))

    args = [lens, x]
    for lp in layers:
        wx = jnp.concatenate([lp["wih_f"], lp["wih_b"]], axis=1)      # (Din, 8H)
        bias = jnp.concatenate([lp["b_ih_f"] + lp["b_hh_f"],
                                lp["b_ih_b"] + lp["b_hh_b"]]).reshape(1, 8 * H)
        args += [wx, lp["whh_f"], lp["whh_b"], bias]
    args += [params["fc_w"][:H], params["fc_w"][H:],
             params["fc_b"].reshape(1, O)]

    TB = T * B_pad
    kernel = functools.partial(_rnn_fused_kernel, T, B_pad, H, n_layers)
    out = pl.pallas_call(
        kernel,
        out_shape=jax.ShapeDtypeStruct((B_pad, O), jnp.float32),
        scratch_shapes=[
            pltpu.VMEM((TB, 8 * H), jnp.float32),     # hoisted gate projections
            pltpu.VMEM((TB, H), jnp.float32),         # layer outputs (ping, fwd)
            pltpu.VMEM((TB, H), jnp.float32),         # layer outputs (ping, bwd)
            pltpu.VMEM((TB, H), jnp.float32),         # layer outputs (pong, fwd)
            pltpu.VMEM((TB, H), jnp.float32),         # layer outputs (pong, bwd)
        ],
    )(*args)
    return out[:B]


# ----------------------------------------------------------------------------
# Pure-JAX reference (same packed-LSTM semantics) for validation.
# ----------------------------------------------------------------------------
def _ref_bidir_layer(x, lengths, p, H):
    T, B, _ = x.shape
    lens = lengths.reshape(B, 1)

    def cell(xt, h, c, wih, whh, b, mask):
        gates = xt @ wih + h @ whh + b
        i = jax.nn.sigmoid(gates[:, :H])
        f = jax.nn.sigmoid(gates[:, H:2 * H])
        g = jnp.tanh(gates[:, 2 * H:3 * H])
        o = jax.nn.sigmoid(gates[:, 3 * H:4 * H])
        cn = f * c + i * g
        hn = o * jnp.tanh(cn)
        return jnp.where(mask, hn, h), jnp.where(mask, cn, c)

    b_f = p["b_ih_f"] + p["b_hh_f"]
    b_b = p["b_ih_b"] + p["b_hh_b"]
    h = jnp.zeros((B, H)); c = jnp.zeros((B, H)); outs_f = []
    for t in range(T):
        h, c = cell(x[t], h, c, p["wih_f"], p["whh_f"], b_f, lens > t)
        outs_f.append(h)
    hf = h
    h = jnp.zeros((B, H)); c = jnp.zeros((B, H)); outs_b = [None] * T
    for t in range(T - 1, -1, -1):
        h, c = cell(x[t], h, c, p["wih_b"], p["whh_b"], b_b, lens > t)
        outs_b[t] = h
    hb = h
    return jnp.stack(outs_f), jnp.stack(outs_b), hf, hb


def ref_forward(params, text, text_lengths):
    emb = params["embedding"][text]
    x = emb
    hf = hb = None
    H = params["hidden_dim"]
    for lp in params["lstm_layers"]:
        out_f, out_b, hf, hb = _ref_bidir_layer(x, text_lengths, lp, H)
        x = jnp.concatenate([out_f, out_b], axis=-1)
    hidden = jnp.concatenate([hf, hb], axis=-1)
    return hidden @ params["fc_w"] + params["fc_b"]


# ----------------------------------------------------------------------------
# Deterministic parameter construction.
# ----------------------------------------------------------------------------
def init_params(key, vocab_size, output_dim, embedding_dim, hidden_dim,
                n_layers, pad_idx):
    keys = iter(jax.random.split(key, 8 + 8 * n_layers))
    emb = 0.1 * jax.random.normal(next(keys), (vocab_size, embedding_dim),
                                  jnp.float32)
    emb = emb.at[pad_idx].set(0.0)                    # padding_idx row is zero

    layers = []
    for layer in range(n_layers):
        din = embedding_dim if layer == 0 else 2 * hidden_dim
        lp = {}
        for d in ("f", "b"):
            lp[f"wih_{d}"] = 0.1 * jax.random.normal(
                next(keys), (din, 4 * hidden_dim), jnp.float32)
            lp[f"whh_{d}"] = 0.1 * jax.random.normal(
                next(keys), (hidden_dim, 4 * hidden_dim), jnp.float32)
            lp[f"b_ih_{d}"] = 0.1 * jax.random.normal(
                next(keys), (4 * hidden_dim,), jnp.float32)
            lp[f"b_hh_{d}"] = 0.1 * jax.random.normal(
                next(keys), (4 * hidden_dim,), jnp.float32)
        layers.append(lp)

    fc_w = 0.1 * jax.random.normal(next(keys), (2 * hidden_dim, output_dim),
                                   jnp.float32)
    fc_b = 0.1 * jax.random.normal(next(keys), (output_dim,), jnp.float32)
    return {"embedding": emb, "lstm_layers": layers,
            "fc_w": fc_w, "fc_b": fc_b, "hidden_dim": hidden_dim}


if __name__ == "__main__":
    vocab_size, output_dim = 100, 5
    embedding_dim, hidden_dim = 16, 32
    n_layers, pad_idx = 2, 1
    T, B = 8, 4

    key = jax.random.PRNGKey(0)
    kp, kt = jax.random.split(key)
    params = init_params(kp, vocab_size, output_dim, embedding_dim,
                         hidden_dim, n_layers, pad_idx)

    # text: [T, B] int32 token ids, padded with pad_idx past each length.
    text_lengths = jnp.array([8, 6, 5, 3], dtype=jnp.int32)        # [B]
    text = jax.random.randint(kt, (T, B), 2, vocab_size, dtype=jnp.int32)
    time_idx = jnp.arange(T)[:, None]
    text = jnp.where(time_idx < text_lengths[None, :], text, pad_idx)

    out = rnn_forward(params, text, text_lengths)
    out = jax.block_until_ready(out)

    ref = ref_forward(params, text, text_lengths)
    assert out.shape == (B, output_dim)
    np.testing.assert_allclose(np.asarray(out), np.asarray(ref),
                               rtol=2e-3, atol=2e-3)

    # TODO(synk): dropout is modeled as eval-mode identity (no stochastic mask).
    print("KERNEL_OK")
</pallas_src>

<mosaic_0001>
module attributes {stable_mosaic.version = 11 : i64} {
  func.func @_rnn_fused_kernel(%arg0: memref<8x1xi32, #tpu.memory_space<vmem>>, %arg1: memref<64x16xf32, #tpu.memory_space<vmem>>, %arg2: memref<16x256xf32, #tpu.memory_space<vmem>>, %arg3: memref<32x128xf32, #tpu.memory_space<vmem>>, %arg4: memref<32x128xf32, #tpu.memory_space<vmem>>, %arg5: memref<1x256xf32, #tpu.memory_space<vmem>>, %arg6: memref<64x256xf32, #tpu.memory_space<vmem>>, %arg7: memref<32x128xf32, #tpu.memory_space<vmem>>, %arg8: memref<32x128xf32, #tpu.memory_space<vmem>>, %arg9: memref<1x256xf32, #tpu.memory_space<vmem>>, %arg10: memref<32x5xf32, #tpu.memory_space<vmem>>, %arg11: memref<32x5xf32, #tpu.memory_space<vmem>>, %arg12: memref<1x5xf32, #tpu.memory_space<vmem>>, %arg13: memref<8x5xf32, #tpu.memory_space<vmem>>, %arg14: memref<64x256xf32, #tpu.memory_space<vmem>>, %arg15: memref<64x32xf32, #tpu.memory_space<vmem>>, %arg16: memref<64x32xf32, #tpu.memory_space<vmem>>, %arg17: memref<64x32xf32, #tpu.memory_space<vmem>>, %arg18: memref<64x32xf32, #tpu.memory_space<vmem>>) attributes {dimension_semantics = [], scalar_prefetch = 0 : i64, scratch_operands = 5 : i64, tpu.core_type = #tpu.core_type<tc>} {
    %c0 = arith.constant 0 : index
    %c0_0 = arith.constant 0 : index
    %0 = vector.load %arg0[%c0, %c0_0] : memref<8x1xi32, #tpu.memory_space<vmem>>, vector<8x1xi32>
    %c0_1 = arith.constant 0 : index
    %c0_2 = arith.constant 0 : index
    %1 = vector.load %arg1[%c0_1, %c0_2] : memref<64x16xf32, #tpu.memory_space<vmem>>, vector<64x16xf32>
    %c0_3 = arith.constant 0 : index
    %c0_4 = arith.constant 0 : index
    %2 = vector.load %arg2[%c0_3, %c0_4] : memref<16x256xf32, #tpu.memory_space<vmem>>, vector<16x256xf32>
    %cst = arith.constant dense<0.000000e+00> : vector<64x256xf32>
    %3 = tpu.matmul %1, %2, %cst {dimension_numbers = #tpu.dot_dimension_numbers<[1], [0], [0], [1], [0, 0, 1, 1], [], []>} : vector<64x16xf32>, vector<16x256xf32>, vector<64x256xf32> -> vector<64x256xf32>
    %c0_5 = arith.constant 0 : index
    %c0_6 = arith.constant 0 : index
    %4 = vector.load %arg5[%c0_5, %c0_6] : memref<1x256xf32, #tpu.memory_space<vmem>>, vector<1x256xf32>
    %5 = vector.broadcast %4 : vector<1x256xf32> to vector<64x256xf32>
    %6 = arith.addf %3, %5 : vector<64x256xf32>
    %c0_7 = arith.constant 0 : index
    %c0_8 = arith.constant 0 : index
    %7 = vector.load %arg14[%c0_7, %c0_8] : memref<64x256xf32, #tpu.memory_space<vmem>>, vector<64x256xf32>
    tpu.vector_store %arg14[%c0_7, %c0_8], %6 {strides = array<i32>} : memref<64x256xf32, #tpu.memory_space<vmem>>, vector<64x256xf32>,
    %c0_9 = arith.constant 0 : index
    %c0_10 = arith.constant 0 : index
    %8 = vector.load %arg3[%c0_9, %c0_10] : memref<32x128xf32, #tpu.memory_space<vmem>>, vector<32x128xf32>
    %c0_11 = arith.constant 0 : index
    %c0_12 = arith.constant 0 : index
    %9 = vector.load %arg4[%c0_11, %c0_12] : memref<32x128xf32, #tpu.memory_space<vmem>>, vector<32x128xf32>
    %cst_13 = arith.constant 0.000000e+00 : f32
    %10 = vector.broadcast %cst_13 : f32 to vector<8x32xf32>
    %c0_i32 = arith.constant 0 : i32
    %c8_i32 = arith.constant 8 : i32
    %11 = arith.muli %c0_i32, %c8_i32 : i32
    %12 = arith.index_cast %11 : i32 to index
    %c0_14 = arith.constant 0 : index
    %13 = vector.load %arg14[%12, %c0_14] : memref<64x256xf32, #tpu.memory_space<vmem>>, vector<8x128xf32>
    %cst_15 = arith.constant dense<0.000000e+00> : vector<8x128xf32>
    %14 = tpu.matmul %10, %8, %cst_15 {dimension_numbers = #tpu.dot_dimension_numbers<[1], [0], [0], [1], [0, 0, 1, 1], [], []>} : vector<8x32xf32>, vector<32x128xf32>, vector<8x128xf32> -> vector<8x128xf32>
    %15 = arith.addf %13, %14 : vector<8x128xf32>
    %16 = vector.extract_strided_slice %15 {offsets = [0, 0], sizes = [8, 32], strides = [1, 1]} : vector<8x128xf32> to vector<8x32xf32>
    %17 = arith.negf %16 : vector<8x32xf32>
    %18 = math.exp %17 : vector<8x32xf32>
    %cst_16 = arith.constant 1.000000e+00 : f32
    %19 = vector.broadcast %cst_16 : f32 to vector<8x32xf32>
    %20 = arith.addf %19, %18 : vector<8x32xf32>
    %21 = arith.divf %19, %20 : vector<8x32xf32>
    %22 = vector.extract_strided_slice %15 {offsets = [0, 32], sizes = [8, 32], strides = [1, 1]} : vector<8x128xf32> to vector<8x32xf32>
    %23 = arith.negf %22 : vector<8x32xf32>
    %24 = math.exp %23 : vector<8x32xf32>
    %cst_17 = arith.constant 1.000000e+00 : f32
    %25 = vector.broadcast %cst_17 : f32 to vector<8x32xf32>
    %26 = arith.addf %25, %24 : vector<8x32xf32>
    %27 = arith.divf %25, %26 : vector<8x32xf32>
    %28 = vector.extract_strided_slice %15 {offsets = [0, 64], sizes = [8, 32], strides = [1, 1]} : vector<8x128xf32> to vector<8x32xf32>
    %29 = math.tanh %28 : vector<8x32xf32>
    %30 = vector.extract_strided_slice %15 {offsets = [0, 96], sizes = [8, 32], strides = [1, 1]} : vector<8x128xf32> to vector<8x32xf32>
    %31 = arith.negf %30 : vector<8x32xf32>
    %32 = math.exp %31 : vector<8x32xf32>
    %cst_18 = arith.constant 1.000000e+00 : f32
    %33 = vector.broadcast %cst_18 : f32 to vector<8x32xf32>
    %34 = arith.addf %33, %32 : vector<8x32xf32>
    %35 = arith.divf %33, %34 : vector<8x32xf32>
    %36 = arith.mulf %27, %10 : vector<8x32xf32>
    %37 = arith.mulf %21, %29 : vector<8x32xf32>
    %38 = arith.addf %36, %37 : vector<8x32xf32>
    %39 = math.tanh %38 : vector<8x32xf32>
    %40 = arith.mulf %35, %39 : vector<8x32xf32>
    %41 = vector.broadcast %c0_i32 : i32 to vector<8x1xi32>
    %42 = arith.cmpi sgt, %0, %41 : vector<8x1xi32>
    %43 = vector.shape_cast %42 : vector<8x1xi1> to vector<8x1xi1>
    %44 = vector.broadcast %43 : vector<8x1xi1> to vector<8x32xi1>
    %45 = arith.select %44, %40, %10 : vector<8x32xi1>, vector<8x32xf32>
    %46 = vector.shape_cast %42 : vector<8x1xi1> to vector<8x1xi1>
    %47 = vector.broadcast %46 : vector<8x1xi1> to vector<8x32xi1>
    %48 = arith.select %47, %38, %10 : vector<8x32xi1>, vector<8x32xf32>
    %c7_i32 = arith.constant 7 : i32
    %49 = arith.subi %c7_i32, %c0_i32 : i32
    %c8_i32_19 = arith.constant 8 : i32
    %50 = arith.muli %49, %c8_i32_19 : i32
    %51 = arith.index_cast %50 : i32 to index
    %c128 = arith.constant 128 : index
    %52 = vector.load %arg14[%51, %c128] : memref<64x256xf32, #tpu.memory_space<vmem>>, vector<8x128xf32>
    %cst_20 = arith.constant dense<0.000000e+00> : vector<8x128xf32>
    %53 = tpu.matmul %10, %9, %cst_20 {dimension_numbers = #tpu.dot_dimension_numbers<[1], [0], [0], [1], [0, 0, 1, 1], [], []>} : vector<8x32xf32>, vector<32x128xf32>, vector<8x128xf32> -> vector<8x128xf32>
    %54 = arith.addf %52, %53 : vector<8x128xf32>
    %55 = vector.extract_strided_slice %54 {offsets = [0, 0], sizes = [8, 32], strides = [1, 1]} : vector<8x128xf32> to vector<8x32xf32>
    %56 = arith.negf %55 : vector<8x32xf32>
    %57 = math.exp %56 : vector<8x32xf32>
    %cst_21 = arith.constant 1.000000e+00 : f32
    %58 = vector.broadcast %cst_21 : f32 to vector<8x32xf32>
    %59 = arith.addf %58, %57 : vector<8x32xf32>
    %60 = arith.divf %58, %59 : vector<8x32xf32>
    %61 = vector.extract_strided_slice %54 {offsets = [0, 32], sizes = [8, 32], strides = [1, 1]} : vector<8x128xf32> to vector<8x32xf32>
    %62 = arith.negf %61 : vector<8x32xf32>
    %63 = math.exp %62 : vector<8x32xf32>
    %cst_22 = arith.constant 1.000000e+00 : f32
    %64 = vector.broadcast %cst_22 : f32 to vector<8x32xf32>
    %65 = arith.addf %64, %63 : vector<8x32xf32>
    %66 = arith.divf %64, %65 : vector<8x32xf32>
    %67 = vector.extract_strided_slice %54 {offsets = [0, 64], sizes = [8, 32], strides = [1, 1]} : vector<8x128xf32> to vector<8x32xf32>
    %68 = math.tanh %67 : vector<8x32xf32>
    %69 = vector.extract_strided_slice %54 {offsets = [0, 96], sizes = [8, 32], strides = [1, 1]} : vector<8x128xf32> to vector<8x32xf32>
    %70 = arith.negf %69 : vector<8x32xf32>
    %71 = math.exp %70 : vector<8x32xf32>
    %cst_23 = arith.constant 1.000000e+00 : f32
    %72 = vector.broadcast %cst_23 : f32 to vector<8x32xf32>
    %73 = arith.addf %72, %71 : vector<8x32xf32>
    %74 = arith.divf %72, %73 : vector<8x32xf32>
    %75 = arith.mulf %66, %10 : vector<8x32xf32>
    %76 = arith.mulf %60, %68 : vector<8x32xf32>
    %77 = arith.addf %75, %76 : vector<8x32xf32>
    %78 = math.tanh %77 : vector<8x32xf32>
    %79 = arith.mulf %74, %78 : vector<8x32xf32>
    %80 = vector.broadcast %49 : i32 to vector<8x1xi32>
    %81 = arith.cmpi sgt, %0, %80 : vector<8x1xi32>
    %82 = vector.shape_cast %81 : vector<8x1xi1> to vector<8x1xi1>
    %83 = vector.broadcast %82 : vector<8x1xi1> to vector<8x32xi1>
    %84 = arith.select %83, %79, %10 : vector<8x32xi1>, vector<8x32xf32>
    %85 = vector.shape_cast %81 : vector<8x1xi1> to vector<8x1xi1>
    %86 = vector.broadcast %85 : vector<8x1xi1> to vector<8x32xi1>
    %87 = arith.select %86, %77, %10 : vector<8x32xi1>, vector<8x32xf32>
    %cst_24 = arith.constant 0.000000e+00 : f32
    %88 = vector.shape_cast %42 : vector<8x1xi1> to vector<8x1xi1>
    %89 = vector.broadcast %88 : vector<8x1xi1> to vector<8x32xi1>
    %90 = vector.broadcast %cst_24 : f32 to vector<8x32xf32>
    %91 = arith.select %89, %40, %90 : vector<8x32xi1>, vector<8x32xf32>
    %92 = arith.index_cast %11 : i32 to index
    %c0_25 = arith.constant 0 : index
    %93 = vector.load %arg15[%92, %c0_25] : memref<64x32xf32, #tpu.memory_space<vmem>>, vector<8x32xf32>
    tpu.vector_store %arg15[%92, %c0_25], %91 {strides = array<i32>} : memref<64x32xf32, #tpu.memory_space<vmem>>, vector<8x32xf32>,
    %cst_26 = arith.constant 0.000000e+00 : f32
    %94 = vector.shape_cast %81 : vector<8x1xi1> to vector<8x1xi1>
    %95 = vector.broadcast %94 : vector<8x1xi1> to vector<8x32xi1>
    %96 = vector.broadcast %cst_26 : f32 to vector<8x32xf32>
    %97 = arith.select %95, %79, %96 : vector<8x32xi1>, vector<8x32xf32>
    %98 = arith.index_cast %50 : i32 to index
    %c0_27 = arith.constant 0 : index
    %99 = vector.load %arg16[%98, %c0_27] : memref<64x32xf32, #tpu.memory_space<vmem>>, vector<8x32xf32>
    tpu.vector_store %arg16[%98, %c0_27], %97 {strides = array<i32>} : memref<64x32xf32, #tpu.memory_space<vmem>>, vector<8x32xf32>,
    %c1_i32 = arith.constant 1 : i32
    %c8_i32_28 = arith.constant 8 : i32
    %100 = arith.muli %c1_i32, %c8_i32_28 : i32
    %101 = arith.index_cast %100 : i32 to index
    %c0_29 = arith.constant 0 : index
    %102 = vector.load %arg14[%101, %c0_29] : memref<64x256xf32, #tpu.memory_space<vmem>>, vector<8x128xf32>
    %cst_30 = arith.constant dense<0.000000e+00> : vector<8x128xf32>
    %103 = tpu.matmul %45, %8, %cst_30 {dimension_numbers = #tpu.dot_dimension_numbers<[1], [0], [0], [1], [0, 0, 1, 1], [], []>} : vector<8x32xf32>, vector<32x128xf32>, vector<8x128xf32> -> vector<8x128xf32>
    %104 = arith.addf %102, %103 : vector<8x128xf32>
    %105 = vector.extract_strided_slice %104 {offsets = [0, 0], sizes = [8, 32], strides = [1, 1]} : vector<8x128xf32> to vector<8x32xf32>
    %106 = arith.negf %105 : vector<8x32xf32>
    %107 = math.exp %106 : vector<8x32xf32>
    %cst_31 = arith.constant 1.000000e+00 : f32
    %108 = vector.broadcast %cst_31 : f32 to vector<8x32xf32>
    %109 = arith.addf %108, %107 : vector<8x32xf32>
    %110 = arith.divf %108, %109 : vector<8x32xf32>
    %111 = vector.extract_strided_slice %104 {offsets = [0, 32], sizes = [8, 32], strides = [1, 1]} : vector<8x128xf32> to vector<8x32xf32>
    %112 = arith.negf %111 : vector<8x32xf32>
    %113 = math.exp %112 : vector<8x32xf32>
    %cst_32 = arith.constant 1.000000e+00 : f32
    %114 = vector.broadcast %cst_32 : f32 to vector<8x32xf32>
    %115 = arith.addf %114, %113 : vector<8x32xf32>
    %116 = arith.divf %114, %115 : vector<8x32xf32>
    %117 = vector.extract_strided_slice %104 {offsets = [0, 64], sizes = [8, 32], strides = [1, 1]} : vector<8x128xf32> to vector<8x32xf32>
    %118 = math.tanh %117 : vector<8x32xf32>
    %119 = vector.extract_strided_slice %104 {offsets = [0, 96], sizes = [8, 32], strides = [1, 1]} : vector<8x128xf32> to vector<8x32xf32>
    %120 = arith.negf %119 : vector<8x32xf32>
    %121 = math.exp %120 : vector<8x32xf32>
    %cst_33 = arith.constant 1.000000e+00 : f32
    %122 = vector.broadcast %cst_33 : f32 to vector<8x32xf32>
    %123 = arith.addf %122, %121 : vector<8x32xf32>
    %124 = arith.divf %122, %123 : vector<8x32xf32>
    %125 = arith.mulf %116, %48 : vector<8x32xf32>
    %126 = arith.mulf %110, %118 : vector<8x32xf32>
    %127 = arith.addf %125, %126 : vector<8x32xf32>
    %128 = math.tanh %127 : vector<8x32xf32>
    %129 = arith.mulf %124, %128 : vector<8x32xf32>
    %130 = vector.broadcast %c1_i32 : i32 to vector<8x1xi32>
    %131 = arith.cmpi sgt, %0, %130 : vector<8x1xi32>
    %132 = vector.shape_cast %131 : vector<8x1xi1> to vector<8x1xi1>
    %133 = vector.broadcast %132 : vector<8x1xi1> to vector<8x32xi1>
    %134 = arith.select %133, %129, %45 : vector<8x32xi1>, vector<8x32xf32>
    %135 = vector.shape_cast %131 : vector<8x1xi1> to vector<8x1xi1>
    %136 = vector.broadcast %135 : vector<8x1xi1> to vector<8x32xi1>
    %137 = arith.select %136, %127, %48 : vector<8x32xi1>, vector<8x32xf32>
    %c7_i32_34 = arith.constant 7 : i32
    %138 = arith.subi %c7_i32_34, %c1_i32 : i32
    %c8_i32_35 = arith.constant 8 : i32
    %139 = arith.muli %138, %c8_i32_35 : i32
    %140 = arith.index_cast %139 : i32 to index
    %c128_36 = arith.constant 128 : index
    %141 = vector.load %arg14[%140, %c128_36] : memref<64x256xf32, #tpu.memory_space<vmem>>, vector<8x128xf32>
    %cst_37 = arith.constant dense<0.000000e+00> : vector<8x128xf32>
    %142 = tpu.matmul %84, %9, %cst_37 {dimension_numbers = #tpu.dot_dimension_numbers<[1], [0], [0], [1], [0, 0, 1, 1], [], []>} : vector<8x32xf32>, vector<32x128xf32>, vector<8x128xf32> -> vector<8x128xf32>
    %143 = arith.addf %141, %142 : vector<8x128xf32>
    %144 = vector.extract_strided_slice %143 {offsets = [0, 0], sizes = [8, 32], strides = [1, 1]} : vector<8x128xf32> to vector<8x32xf32>
    %145 = arith.negf %144 : vector<8x32xf32>
    %146 = math.exp %145 : vector<8x32xf32>
    %cst_38 = arith.constant 1.000000e+00 : f32
    %147 = vector.broadcast %cst_38 : f32 to vector<8x32xf32>
    %148 = arith.addf %147, %146 : vector<8x32xf32>
    %149 = arith.divf %147, %148 : vector<8x32xf32>
    %150 = vector.extract_strided_slice %143 {offsets = [0, 32], sizes = [8, 32], strides = [1, 1]} : vector<8x128xf32> to vector<8x32xf32>
    %151 = arith.negf %150 : vector<8x32xf32>
    %152 = math.exp %151 : vector<8x32xf32>
    %cst_39 = arith.constant 1.000000e+00 : f32
    %153 = vector.broadcast %cst_39 : f32 to vector<8x32xf32>
    %154 = arith.addf %153, %152 : vector<8x32xf32>
    %155 = arith.divf %153, %154 : vector<8x32xf32>
    %156 = vector.extract_strided_slice %143 {offsets = [0, 64], sizes = [8, 32], strides = [1, 1]} : vector<8x128xf32> to vector<8x32xf32>
    %157 = math.tanh %156 : vector<8x32xf32>
    %158 = vector.extract_strided_slice %143 {offsets = [0, 96], sizes = [8, 32], strides = [1, 1]} : vector<8x128xf32> to vector<8x32xf32>
    %159 = arith.negf %158 : vector<8x32xf32>
    %160 = math.exp %159 : vector<8x32xf32>
    %cst_40 = arith.constant 1.000000e+00 : f32
    %161 = vector.broadcast %cst_40 : f32 to vector<8x32xf32>
    %162 = arith.addf %161, %160 : vector<8x32xf32>
    %163 = arith.divf %161, %162 : vector<8x32xf32>
    %164 = arith.mulf %155, %87 : vector<8x32xf32>
    %165 = arith.mulf %149, %157 : vector<8x32xf32>
    %166 = arith.addf %164, %165 : vector<8x32xf32>
    %167 = math.tanh %166 : vector<8x32xf32>
    %168 = arith.mulf %163, %167 : vector<8x32xf32>
    %169 = vector.broadcast %138 : i32 to vector<8x1xi32>
    %170 = arith.cmpi sgt, %0, %169 : vector<8x1xi32>
    %171 = vector.shape_cast %170 : vector<8x1xi1> to vector<8x1xi1>
    %172 = vector.broadcast %171 : vector<8x1xi1> to vector<8x32xi1>
    %173 = arith.select %172, %168, %84 : vector<8x32xi1>, vector<8x32xf32>
    %174 = vector.shape_cast %170 : vector<8x1xi1> to vector<8x1xi1>
    %175 = vector.broadcast %174 : vector<8x1xi1> to vector<8x32xi1>
    %176 = arith.select %175, %166, %87 : vector<8x32xi1>, vector<8x32xf32>
    %cst_41 = arith.constant 0.000000e+00 : f32
    %177 = vector.shape_cast %131 : vector<8x1xi1> to vector<8x1xi1>
    %178 = vector.broadcast %177 : vector<8x1xi1> to vector<8x32xi1>
    %179 = vector.broadcast %cst_41 : f32 to vector<8x32xf32>
    %180 = arith.select %178, %129, %179 : vector<8x32xi1>, vector<8x32xf32>
    %181 = arith.index_cast %100 : i32 to index
    %c0_42 = arith.constant 0 : index
    %182 = vector.load %arg15[%181, %c0_42] : memref<64x32xf32, #tpu.memory_space<vmem>>, vector<8x32xf32>
    tpu.vector_store %arg15[%181, %c0_42], %180 {strides = array<i32>} : memref<64x32xf32, #tpu.memory_space<vmem>>, vector<8x32xf32>,
    %cst_43 = arith.constant 0.000000e+00 : f32
    %183 = vector.shape_cast %170 : vector<8x1xi1> to vector<8x1xi1>
    %184 = vector.broadcast %183 : vector<8x1xi1> to vector<8x32xi1>
    %185 = vector.broadcast %cst_43 : f32 to vector<8x32xf32>
    %186 = arith.select %184, %168, %185 : vector<8x32xi1>, vector<8x32xf32>
    %187 = arith.index_cast %139 : i32 to index
    %c0_44 = arith.constant 0 : index
    %188 = vector.load %arg16[%187, %c0_44] : memref<64x32xf32, #tpu.memory_space<vmem>>, vector<8x32xf32>
    tpu.vector_store %arg16[%187, %c0_44], %186 {strides = array<i32>} : memref<64x32xf32, #tpu.memory_space<vmem>>, vector<8x32xf32>,
    %c2_i32 = arith.constant 2 : i32
    %c8_i32_45 = arith.constant 8 : i32
    %189 = arith.muli %c2_i32, %c8_i32_45 : i32
    %190 = arith.index_cast %189 : i32 to index
    %c0_46 = arith.constant 0 : index
    %191 = vector.load %arg14[%190, %c0_46] : memref<64x256xf32, #tpu.memory_space<vmem>>, vector<8x128xf32>
    %cst_47 = arith.constant dense<0.000000e+00> : vector<8x128xf32>
    %192 = tpu.matmul %134, %8, %cst_47 {dimension_numbers = #tpu.dot_dimension_numbers<[1], [0], [0], [1], [0, 0, 1, 1], [], []>} : vector<8x32xf32>, vector<32x128xf32>, vector<8x128xf32> -> vector<8x128xf32>
    %193 = arith.addf %191, %192 : vector<8x128xf32>
    %194 = vector.extract_strided_slice %193 {offsets = [0, 0], sizes = [8, 32], strides = [1, 1]} : vector<8x128xf32> to vector<8x32xf32>
    %195 = arith.negf %194 : vector<8x32xf32>
    %196 = math.exp %195 : vector<8x32xf32>
    %cst_48 = arith.constant 1.000000e+00 : f32
    %197 = vector.broadcast %cst_48 : f32 to vector<8x32xf32>
    %198 = arith.addf %197, %196 : vector<8x32xf32>
    %199 = arith.divf %197, %198 : vector<8x32xf32>
    %200 = vector.extract_strided_slice %193 {offsets = [0, 32], sizes = [8, 32], strides = [1, 1]} : vector<8x128xf32> to vector<8x32xf32>
    %201 = arith.negf %200 : vector<8x32xf32>
    %202 = math.exp %201 : vector<8x32xf32>
    %cst_49 = arith.constant 1.000000e+00 : f32
    %203 = vector.broadcast %cst_49 : f32 to vector<8x32xf32>
    %204 = arith.addf %203, %202 : vector<8x32xf32>
    %205 = arith.divf %203, %204 : vector<8x32xf32>
    %206 = vector.extract_strided_slice %193 {offsets = [0, 64], sizes = [8, 32], strides = [1, 1]} : vector<8x128xf32> to vector<8x32xf32>
    %207 = math.tanh %206 : vector<8x32xf32>
    %208 = vector.extract_strided_slice %193 {offsets = [0, 96], sizes = [8, 32], strides = [1, 1]} : vector<8x128xf32> to vector<8x32xf32>
    %209 = arith.negf %208 : vector<8x32xf32>
    %210 = math.exp %209 : vector<8x32xf32>
    %cst_50 = arith.constant 1.000000e+00 : f32
    %211 = vector.broadcast %cst_50 : f32 to vector<8x32xf32>
    %212 = arith.addf %211, %210 : vector<8x32xf32>
    %213 = arith.divf %211, %212 : vector<8x32xf32>
    %214 = arith.mulf %205, %137 : vector<8x32xf32>
    %215 = arith.mulf %199, %207 : vector<8x32xf32>
    %216 = arith.addf %214, %215 : vector<8x32xf32>
    %217 = math.tanh %216 : vector<8x32xf32>
    %218 = arith.mulf %213, %217 : vector<8x32xf32>
    %219 = vector.broadcast %c2_i32 : i32 to vector<8x1xi32>
    %220 = arith.cmpi sgt, %0, %219 : vector<8x1xi32>
    %221 = vector.shape_cast %220 : vector<8x1xi1> to vector<8x1xi1>
    %222 = vector.broadcast %221 : vector<8x1xi1> to vector<8x32xi1>
    %223 = arith.select %222, %218, %134 : vector<8x32xi1>, vector<8x32xf32>
    %224 = vector.shape_cast %220 : vector<8x1xi1> to vector<8x1xi1>
    %225 = vector.broadcast %224 : vector<8x1xi1> to vector<8x32xi1>
    %226 = arith.select %225, %216, %137 : vector<8x32xi1>, vector<8x32xf32>
    %c7_i32_51 = arith.constant 7 : i32
    %227 = arith.subi %c7_i32_51, %c2_i32 : i32
    %c8_i32_52 = arith.constant 8 : i32
    %228 = arith.muli %227, %c8_i32_52 : i32
    %229 = arith.index_cast %228 : i32 to index
    %c128_53 = arith.constant 128 : index
    %230 = vector.load %arg14[%229, %c128_53] : memref<64x256xf32, #tpu.memory_space<vmem>>, vector<8x128xf32>
    %cst_54 = arith.constant dense<0.000000e+00> : vector<8x128xf32>
    %231 = tpu.matmul %173, %9, %cst_54 {dimension_numbers = #tpu.dot_dimension_numbers<[1], [0], [0], [1], [0, 0, 1, 1], [], []>} : vector<8x32xf32>, vector<32x128xf32>, vector<8x128xf32> -> vector<8x128xf32>
    %232 = arith.addf %230, %231 : vector<8x128xf32>
    %233 = vector.extract_strided_slice %232 {offsets = [0, 0], sizes = [8, 32], strides = [1, 1]} : vector<8x128xf32> to vector<8x32xf32>
    %234 = arith.negf %233 : vector<8x32xf32>
    %235 = math.exp %234 : vector<8x32xf32>
    %cst_55 = arith.constant 1.000000e+00 : f32
    %236 = vector.broadcast %cst_55 : f32 to vector<8x32xf32>
    %237 = arith.addf %236, %235 : vector<8x32xf32>
    %238 = arith.divf %236, %237 : vector<8x32xf32>
    %239 = vector.extract_strided_slice %232 {offsets = [0, 32], sizes = [8, 32], strides = [1, 1]} : vector<8x128xf32> to vector<8x32xf32>
    %240 = arith.negf %239 : vector<8x32xf32>
    %241 = math.exp %240 : vector<8x32xf32>
    %cst_56 = arith.constant 1.000000e+00 : f32
    %242 = vector.broadcast %cst_56 : f32 to vector<8x32xf32>
    %243 = arith.addf %242, %241 : vector<8x32xf32>
    %244 = arith.divf %242, %243 : vector<8x32xf32>
    %245 = vector.extract_strided_slice %232 {offsets = [0, 64], sizes = [8, 32], strides = [1, 1]} : vector<8x128xf32> to vector<8x32xf32>
    %246 = math.tanh %245 : vector<8x32xf32>
    %247 = vector.extract_strided_slice %232 {offsets = [0, 96], sizes = [8, 32], strides = [1, 1]} : vector<8x128xf32> to vector<8x32xf32>
    %248 = arith.negf %247 : vector<8x32xf32>
    %249 = math.exp %248 : vector<8x32xf32>
    %cst_57 = arith.constant 1.000000e+00 : f32
    %250 = vector.broadcast %cst_57 : f32 to vector<8x32xf32>
    %251 = arith.addf %250, %249 : vector<8x32xf32>
    %252 = arith.divf %250, %251 : vector<8x32xf32>
    %253 = arith.mulf %244, %176 : vector<8x32xf32>
    %254 = arith.mulf %238, %246 : vector<8x32xf32>
    %255 = arith.addf %253, %254 : vector<8x32xf32>
    %256 = math.tanh %255 : vector<8x32xf32>
    %257 = arith.mulf %252, %256 : vector<8x32xf32>
    %258 = vector.broadcast %227 : i32 to vector<8x1xi32>
    %259 = arith.cmpi sgt, %0, %258 : vector<8x1xi32>
    %260 = vector.shape_cast %259 : vector<8x1xi1> to vector<8x1xi1>
    %261 = vector.broadcast %260 : vector<8x1xi1> to vector<8x32xi1>
    %262 = arith.select %261, %257, %173 : vector<8x32xi1>, vector<8x32xf32>
    %263 = vector.shape_cast %259 : vector<8x1xi1> to vector<8x1xi1>
    %264 = vector.broadcast %263 : vector<8x1xi1> to vector<8x32xi1>
    %265 = arith.select %264, %255, %176 : vector<8x32xi1>, vector<8x32xf32>
    %cst_58 = arith.constant 0.000000e+00 : f32
    %266 = vector.shape_cast %220 : vector<8x1xi1> to vector<8x1xi1>
    %267 = vector.broadcast %266 : vector<8x1xi1> to vector<8x32xi1>
    %268 = vector.broadcast %cst_58 : f32 to vector<8x32xf32>
    %269 = arith.select %267, %218, %268 : vector<8x32xi1>, vector<8x32xf32>
    %270 = arith.index_cast %189 : i32 to index
    %c0_59 = arith.constant 0 : index
    %271 = vector.load %arg15[%270, %c0_59] : memref<64x32xf32, #tpu.memory_space<vmem>>, vector<8x32xf32>
    tpu.vector_store %arg15[%270, %c0_59], %269 {strides = array<i32>} : memref<64x32xf32, #tpu.memory_space<vmem>>, vector<8x32xf32>,
    %cst_60 = arith.constant 0.000000e+00 : f32
    %272 = vector.shape_cast %259 : vector<8x1xi1> to vector<8x1xi1>
    %273 = vector.broadcast %272 : vector<8x1xi1> to vector<8x32xi1>
    %274 = vector.broadcast %cst_60 : f32 to vector<8x32xf32>
    %275 = arith.select %273, %257, %274 : vector<8x32xi1>, vector<8x32xf32>
    %276 = arith.index_cast %228 : i32 to index
    %c0_61 = arith.constant 0 : index
    %277 = vector.load %arg16[%276, %c0_61] : memref<64x32xf32, #tpu.memory_space<vmem>>, vector<8x32xf32>
    tpu.vector_store %arg16[%276, %c0_61], %275 {strides = array<i32>} : memref<64x32xf32, #tpu.memory_space<vmem>>, vector<8x32xf32>,
    %c3_i32 = arith.constant 3 : i32
    %c8_i32_62 = arith.constant 8 : i32
    %278 = arith.muli %c3_i32, %c8_i32_62 : i32
    %279 = arith.index_cast %278 : i32 to index
    %c0_63 = arith.constant 0 : index
    %280 = vector.load %arg14[%279, %c0_63] : memref<64x256xf32, #tpu.memory_space<vmem>>, vector<8x128xf32>
    %cst_64 = arith.constant dense<0.000000e+00> : vector<8x128xf32>
    %281 = tpu.matmul %223, %8, %cst_64 {dimension_numbers = #tpu.dot_dimension_numbers<[1], [0], [0], [1], [0, 0, 1, 1], [], []>} : vector<8x32xf32>, vector<32x128xf32>, vector<8x128xf32> -> vector<8x128xf32>
    %282 = arith.addf %280, %281 : vector<8x128xf32>
    %283 = vector.extract_strided_slice %282 {offsets = [0, 0], sizes = [8, 32], strides = [1, 1]} : vector<8x128xf32> to vector<8x32xf32>
    %284 = arith.negf %283 : vector<8x32xf32>
    %285 = math.exp %284 : vector<8x32xf32>
    %cst_65 = arith.constant 1.000000e+00 : f32
    %286 = vector.broadcast %cst_65 : f32 to vector<8x32xf32>
    %287 = arith.addf %286, %285 : vector<8x32xf32>
    %288 = arith.divf %286, %287 : vector<8x32xf32>
    %289 = vector.extract_strided_slice %282 {offsets = [0, 32], sizes = [8, 32], strides = [1, 1]} : vector<8x128xf32> to vector<8x32xf32>
    %290 = arith.negf %289 : vector<8x32xf32>
    %291 = math.exp %290 : vector<8x32xf32>
    %cst_66 = arith.constant 1.000000e+00 : f32
    %292 = vector.broadcast %cst_66 : f32 to vector<8x32xf32>
    %293 = arith.addf %292, %291 : vector<8x32xf32>
    %294 = arith.divf %292, %293 : vector<8x32xf32>
    %295 = vector.extract_strided_slice %282 {offsets = [0, 64], sizes = [8, 32], strides = [1, 1]} : vector<8x128xf32> to vector<8x32xf32>
    %296 = math.tanh %295 : vector<8x32xf32>
    %297 = vector.extract_strided_slice %282 {offsets = [0, 96], sizes = [8, 32], strides = [1, 1]} : vector<8x128xf32> to vector<8x32xf32>
    %298 = arith.negf %297 : vector<8x32xf32>
    %299 = math.exp %298 : vector<8x32xf32>
    %cst_67 = arith.constant 1.000000e+00 : f32
    %300 = vector.broadcast %cst_67 : f32 to vector<8x32xf32>
    %301 = arith.addf %300, %299 : vector<8x32xf32>
    %302 = arith.divf %300, %301 : vector<8x32xf32>
    %303 = arith.mulf %294, %226 : vector<8x32xf32>
    %304 = arith.mulf %288, %296 : vector<8x32xf32>
    %305 = arith.addf %303, %304 : vector<8x32xf32>
    %306 = math.tanh %305 : vector<8x32xf32>
    %307 = arith.mulf %302, %306 : vector<8x32xf32>
    %308 = vector.broadcast %c3_i32 : i32 to vector<8x1xi32>
    %309 = arith.cmpi sgt, %0, %308 : vector<8x1xi32>
    %310 = vector.shape_cast %309 : vector<8x1xi1> to vector<8x1xi1>
    %311 = vector.broadcast %310 : vector<8x1xi1> to vector<8x32xi1>
    %312 = arith.select %311, %307, %223 : vector<8x32xi1>, vector<8x32xf32>
    %313 = vector.shape_cast %309 : vector<8x1xi1> to vector<8x1xi1>
    %314 = vector.broadcast %313 : vector<8x1xi1> to vector<8x32xi1>
    %315 = arith.select %314, %305, %226 : vector<8x32xi1>, vector<8x32xf32>
    %c7_i32_68 = arith.constant 7 : i32
    %316 = arith.subi %c7_i32_68, %c3_i32 : i32
    %c8_i32_69 = arith.constant 8 : i32
    %317 = arith.muli %316, %c8_i32_69 : i32
    %318 = arith.index_cast %317 : i32 to index
    %c128_70 = arith.constant 128 : index
    %319 = vector.load %arg14[%318, %c128_70] : memref<64x256xf32, #tpu.memory_space<vmem>>, vector<8x128xf32>
    %cst_71 = arith.constant dense<0.000000e+00> : vector<8x128xf32>
    %320 = tpu.matmul %262, %9, %cst_71 {dimension_numbers = #tpu.dot_dimension_numbers<[1], [0], [0], [1], [0, 0, 1, 1], [], []>} : vector<8x32xf32>, vector<32x128xf32>, vector<8x128xf32> -> vector<8x128xf32>
    %321 = arith.addf %319, %320 : vector<8x128xf32>
    %322 = vector.extract_strided_slice %321 {offsets = [0, 0], sizes = [8, 32], strides = [1, 1]} : vector<8x128xf32> to vector<8x32xf32>
    %323 = arith.negf %322 : vector<8x32xf32>
    %324 = math.exp %323 : vector<8x32xf32>
    %cst_72 = arith.constant 1.000000e+00 : f32
    %325 = vector.broadcast %cst_72 : f32 to vector<8x32xf32>
    %326 = arith.addf %325, %324 : vector<8x32xf32>
    %327 = arith.divf %325, %326 : vector<8x32xf32>
    %328 = vector.extract_strided_slice %321 {offsets = [0, 32], sizes = [8, 32], strides = [1, 1]} : vector<8x128xf32> to vector<8x32xf32>
    %329 = arith.negf %328 : vector<8x32xf32>
    %330 = math.exp %329 : vector<8x32xf32>
    %cst_73 = arith.constant 1.000000e+00 : f32
    %331 = vector.broadcast %cst_73 : f32 to vector<8x32xf32>
    %332 = arith.addf %331, %330 : vector<8x32xf32>
    %333 = arith.divf %331, %332 : vector<8x32xf32>
    %334 = vector.extract_strided_slice %321 {offsets = [0, 64], sizes = [8, 32], strides = [1, 1]} : vector<8x128xf32> to vector<8x32xf32>
    %335 = math.tanh %334 : vector<8x32xf32>
    %336 = vector.extract_strided_slice %321 {offsets = [0, 96], sizes = [8, 32], strides = [1, 1]} : vector<8x128xf32> to vector<8x32xf32>
    %337 = arith.negf %336 : vector<8x32xf32>
    %338 = math.exp %337 : vector<8x32xf32>
    %cst_74 = arith.constant 1.000000e+00 : f32
    %339 = vector.broadcast %cst_74 : f32 to vector<8x32xf32>
    %340 = arith.addf %339, %338 : vector<8x32xf32>
    %341 = arith.divf %339, %340 : vector<8x32xf32>
    %342 = arith.mulf %333, %265 : vector<8x32xf32>
    %343 = arith.mulf %327, %335 : vector<8x32xf32>
    %344 = arith.addf %342, %343 : vector<8x32xf32>
    %345 = math.tanh %344 : vector<8x32xf32>
    %346 = arith.mulf %341, %345 : vector<8x32xf32>
    %347 = vector.broadcast %316 : i32 to vector<8x1xi32>
    %348 = arith.cmpi sgt, %0, %347 : vector<8x1xi32>
    %349 = vector.shape_cast %348 : vector<8x1xi1> to vector<8x1xi1>
    %350 = vector.broadcast %349 : vector<8x1xi1> to vector<8x32xi1>
    %351 = arith.select %350, %346, %262 : vector<8x32xi1>, vector<8x32xf32>
    %352 = vector.shape_cast %348 : vector<8x1xi1> to vector<8x1xi1>
    %353 = vector.broadcast %352 : vector<8x1xi1> to vector<8x32xi1>
    %354 = arith.select %353, %344, %265 : vector<8x32xi1>, vector<8x32xf32>
    %cst_75 = arith.constant 0.000000e+00 : f32
    %355 = vector.shape_cast %309 : vector<8x1xi1> to vector<8x1xi1>
    %356 = vector.broadcast %355 : vector<8x1xi1> to vector<8x32xi1>
    %357 = vector.broadcast %cst_75 : f32 to vector<8x32xf32>
    %358 = arith.select %356, %307, %357 : vector<8x32xi1>, vector<8x32xf32>
    %359 = arith.index_cast %278 : i32 to index
    %c0_76 = arith.constant 0 : index
    %360 = vector.load %arg15[%359, %c0_76] : memref<64x32xf32, #tpu.memory_space<vmem>>, vector<8x32xf32>
    tpu.vector_store %arg15[%359, %c0_76], %358 {strides = array<i32>} : memref<64x32xf32, #tpu.memory_space<vmem>>, vector<8x32xf32>,
    %cst_77 = arith.constant 0.000000e+00 : f32
    %361 = vector.shape_cast %348 : vector<8x1xi1> to vector<8x1xi1>
    %362 = vector.broadcast %361 : vector<8x1xi1> to vector<8x32xi1>
    %363 = vector.broadcast %cst_77 : f32 to vector<8x32xf32>
    %364 = arith.select %362, %346, %363 : vector<8x32xi1>, vector<8x32xf32>
    %365 = arith.index_cast %317 : i32 to index
    %c0_78 = arith.constant 0 : index
    %366 = vector.load %arg16[%365, %c0_78] : memref<64x32xf32, #tpu.memory_space<vmem>>, vector<8x32xf32>
    tpu.vector_store %arg16[%365, %c0_78], %364 {strides = array<i32>} : memref<64x32xf32, #tpu.memory_space<vmem>>, vector<8x32xf32>,
    %c4_i32 = arith.constant 4 : i32
    %c8_i32_79 = arith.constant 8 : i32
    %367 = arith.muli %c4_i32, %c8_i32_79 : i32
    %368 = arith.index_cast %367 : i32 to index
    %c0_80 = arith.constant 0 : index
    %369 = vector.load %arg14[%368, %c0_80] : memref<64x256xf32, #tpu.memory_space<vmem>>, vector<8x128xf32>
    %cst_81 = arith.constant dense<0.000000e+00> : vector<8x128xf32>
    %370 = tpu.matmul %312, %8, %cst_81 {dimension_numbers = #tpu.dot_dimension_numbers<[1], [0], [0], [1], [0, 0, 1, 1], [], []>} : vector<8x32xf32>, vector<32x128xf32>, vector<8x128xf32> -> vector<8x128xf32>
    %371 = arith.addf %369, %370 : vector<8x128xf32>
    %372 = vector.extract_strided_slice %371 {offsets = [0, 0], sizes = [8, 32], strides = [1, 1]} : vector<8x128xf32> to vector<8x32xf32>
    %373 = arith.negf %372 : vector<8x32xf32>
    %374 = math.exp %373 : vector<8x32xf32>
    %cst_82 = arith.constant 1.000000e+00 : f32
    %375 = vector.broadcast %cst_82 : f32 to vector<8x32xf32>
    %376 = arith.addf %375, %374 : vector<8x32xf32>
    %377 = arith.divf %375, %376 : vector<8x32xf32>
    %378 = vector.extract_strided_slice %371 {offsets = [0, 32], sizes = [8, 32], strides = [1, 1]} : vector<8x128xf32> to vector<8x32xf32>
    %379 = arith.negf %378 : vector<8x32xf32>
    %380 = math.exp %379 : vector<8x32xf32>
    %cst_83 = arith.constant 1.000000e+00 : f32
    %381 = vector.broadcast %cst_83 : f32 to vector<8x32xf32>
    %382 = arith.addf %381, %380 : vector<8x32xf32>
    %383 = arith.divf %381, %382 : vector<8x32xf32>
    %384 = vector.extract_strided_slice %371 {offsets = [0, 64], sizes = [8, 32], strides = [1, 1]} : vector<8x128xf32> to vector<8x32xf32>
    %385 = math.tanh %384 : vector<8x32xf32>
    %386 = vector.extract_strided_slice %371 {offsets = [0, 96], sizes = [8, 32], strides = [1, 1]} : vector<8x128xf32> to vector<8x32xf32>
    %387 = arith.negf %386 : vector<8x32xf32>
    %388 = math.exp %387 : vector<8x32xf32>
    %cst_84 = arith.constant 1.000000e+00 : f32
    %389 = vector.broadcast %cst_84 : f32 to vector<8x32xf32>
    %390 = arith.addf %389, %388 : vector<8x32xf32>
    %391 = arith.divf %389, %390 : vector<8x32xf32>
    %392 = arith.mulf %383, %315 : vector<8x32xf32>
    %393 = arith.mulf %377, %385 : vector<8x32xf32>
    %394 = arith.addf %392, %393 : vector<8x32xf32>
    %395 = math.tanh %394 : vector<8x32xf32>
    %396 = arith.mulf %391, %395 : vector<8x32xf32>
    %397 = vector.broadcast %c4_i32 : i32 to vector<8x1xi32>
    %398 = arith.cmpi sgt, %0, %397 : vector<8x1xi32>
    %399 = vector.shape_cast %398 : vector<8x1xi1> to vector<8x1xi1>
    %400 = vector.broadcast %399 : vector<8x1xi1> to vector<8x32xi1>
    %401 = arith.select %400, %396, %312 : vector<8x32xi1>, vector<8x32xf32>
    %402 = vector.shape_cast %398 : vector<8x1xi1> to vector<8x1xi1>
    %403 = vector.broadcast %402 : vector<8x1xi1> to vector<8x32xi1>
    %404 = arith.select %403, %394, %315 : vector<8x32xi1>, vector<8x32xf32>
    %c7_i32_85 = arith.constant 7 : i32
    %405 = arith.subi %c7_i32_85, %c4_i32 : i32
    %c8_i32_86 = arith.constant 8 : i32
    %406 = arith.muli %405, %c8_i32_86 : i32
    %407 = arith.index_cast %406 : i32 to index
    %c128_87 = arith.constant 128 : index
    %408 = vector.load %arg14[%407, %c128_87] : memref<64x256xf32, #tpu.memory_space<vmem>>, vector<8x128xf32>
    %cst_88 = arith.constant dense<0.000000e+00> : vector<8x128xf32>
    %409 = tpu.matmul %351, %9, %cst_88 {dimension_numbers = #tpu.dot_dimension_numbers<[1], [0], [0], [1], [0, 0, 1, 1], [], []>} : vector<8x32xf32>, vector<32x128xf32>, vector<8x128xf32> -> vector<8x128xf32>
    %410 = arith.addf %408, %409 : vector<8x128xf32>
    %411 = vector.extract_strided_slice %410 {offsets = [0, 0], sizes = [8, 32], strides = [1, 1]} : vector<8x128xf32> to vector<8x32xf32>
    %412 = arith.negf %411 : vector<8x32xf32>
    %413 = math.exp %412 : vector<8x32xf32>
    %cst_89 = arith.constant 1.000000e+00 : f32
    %414 = vector.broadcast %cst_89 : f32 to vector<8x32xf32>
    %415 = arith.addf %414, %413 : vector<8x32xf32>
    %416 = arith.divf %414, %415 : vector<8x32xf32>
    %417 = vector.extract_strided_slice %410 {offsets = [0, 32], sizes = [8, 32], strides = [1, 1]} : vector<8x128xf32> to vector<8x32xf32>
    %418 = arith.negf %417 : vector<8x32xf32>
    %419 = math.exp %418 : vector<8x32xf32>
    %cst_90 = arith.constant 1.000000e+00 : f32
    %420 = vector.broadcast %cst_90 : f32 to vector<8x32xf32>
    %421 = arith.addf %420, %419 : vector<8x32xf32>
    %422 = arith.divf %420, %421 : vector<8x32xf32>
    %423 = vector.extract_strided_slice %410 {offsets = [0, 64], sizes = [8, 32], strides = [1, 1]} : vector<8x128xf32> to vector<8x32xf32>
    %424 = math.tanh %423 : vector<8x32xf32>
    %425 = vector.extract_strided_slice %410 {offsets = [0, 96], sizes = [8, 32], strides = [1, 1]} : vector<8x128xf32> to vector<8x32xf32>
    %426 = arith.negf %425 : vector<8x32xf32>
    %427 = math.exp %426 : vector<8x32xf32>
    %cst_91 = arith.constant 1.000000e+00 : f32
    %428 = vector.broadcast %cst_91 : f32 to vector<8x32xf32>
    %429 = arith.addf %428, %427 : vector<8x32xf32>
    %430 = arith.divf %428, %429 : vector<8x32xf32>
    %431 = arith.mulf %422, %354 : vector<8x32xf32>
    %432 = arith.mulf %416, %424 : vector<8x32xf32>
    %433 = arith.addf %431, %432 : vector<8x32xf32>
    %434 = math.tanh %433 : vector<8x32xf32>
    %435 = arith.mulf %430, %434 : vector<8x32xf32>
    %436 = vector.broadcast %405 : i32 to vector<8x1xi32>
    %437 = arith.cmpi sgt, %0, %436 : vector<8x1xi32>
    %438 = vector.shape_cast %437 : vector<8x1xi1> to vector<8x1xi1>
    %439 = vector.broadcast %438 : vector<8x1xi1> to vector<8x32xi1>
    %440 = arith.select %439, %435, %351 : vector<8x32xi1>, vector<8x32xf32>
    %441 = vector.shape_cast %437 : vector<8x1xi1> to vector<8x1xi1>
    %442 = vector.broadcast %441 : vector<8x1xi1> to vector<8x32xi1>
    %443 = arith.select %442, %433, %354 : vector<8x32xi1>, vector<8x32xf32>
    %cst_92 = arith.constant 0.000000e+00 : f32
    %444 = vector.shape_cast %398 : vector<8x1xi1> to vector<8x1xi1>
    %445 = vector.broadcast %444 : vector<8x1xi1> to vector<8x32xi1>
    %446 = vector.broadcast %cst_92 : f32 to vector<8x32xf32>
    %447 = arith.select %445, %396, %446 : vector<8x32xi1>, vector<8x32xf32>
    %448 = arith.index_cast %367 : i32 to index
    %c0_93 = arith.constant 0 : index
    %449 = vector.load %arg15[%448, %c0_93] : memref<64x32xf32, #tpu.memory_space<vmem>>, vector<8x32xf32>
    tpu.vector_store %arg15[%448, %c0_93], %447 {strides = array<i32>} : memref<64x32xf32, #tpu.memory_space<vmem>>, vector<8x32xf32>,
    %cst_94 = arith.constant 0.000000e+00 : f32
    %450 = vector.shape_cast %437 : vector<8x1xi1> to vector<8x1xi1>
    %451 = vector.broadcast %450 : vector<8x1xi1> to vector<8x32xi1>
    %452 = vector.broadcast %cst_94 : f32 to vector<8x32xf32>
    %453 = arith.select %451, %435, %452 : vector<8x32xi1>, vector<8x32xf32>
    %454 = arith.index_cast %406 : i32 to index
    %c0_95 = arith.constant 0 : index
    %455 = vector.load %arg16[%454, %c0_95] : memref<64x32xf32, #tpu.memory_space<vmem>>, vector<8x32xf32>
    tpu.vector_store %arg16[%454, %c0_95], %453 {strides = array<i32>} : memref<64x32xf32, #tpu.memory_space<vmem>>, vector<8x32xf32>,
    %c5_i32 = arith.constant 5 : i32
    %c8_i32_96 = arith.constant 8 : i32
    %456 = arith.muli %c5_i32, %c8_i32_96 : i32
    %457 = arith.index_cast %456 : i32 to index
    %c0_97 = arith.constant 0 : index
    %458 = vector.load %arg14[%457, %c0_97] : memref<64x256xf32, #tpu.memory_space<vmem>>, vector<8x128xf32>
    %cst_98 = arith.constant dense<0.000000e+00> : vector<8x128xf32>
    %459 = tpu.matmul %401, %8, %cst_98 {dimension_numbers = #tpu.dot_dimension_numbers<[1], [0], [0], [1], [0, 0, 1, 1], [], []>} : vector<8x32xf32>, vector<32x128xf32>, vector<8x128xf32> -> vector<8x128xf32>
    %460 = arith.addf %458, %459 : vector<8x128xf32>
    %461 = vector.extract_strided_slice %460 {offsets = [0, 0], sizes = [8, 32], strides = [1, 1]} : vector<8x128xf32> to vector<8x32xf32>
    %462 = arith.negf %461 : vector<8x32xf32>
    %463 = math.exp %462 : vector<8x32xf32>
    %cst_99 = arith.constant 1.000000e+00 : f32
    %464 = vector.broadcast %cst_99 : f32 to vector<8x32xf32>
    %465 = arith.addf %464, %463 : vector<8x32xf32>
    %466 = arith.divf %464, %465 : vector<8x32xf32>
    %467 = vector.extract_strided_slice %460 {offsets = [0, 32], sizes = [8, 32], strides = [1, 1]} : vector<8x128xf32> to vector<8x32xf32>
    %468 = arith.negf %467 : vector<8x32xf32>
    %469 = math.exp %468 : vector<8x32xf32>
    %cst_100 = arith.constant 1.000000e+00 : f32
    %470 = vector.broadcast %cst_100 : f32 to vector<8x32xf32>
    %471 = arith.addf %470, %469 : vector<8x32xf32>
    %472 = arith.divf %470, %471 : vector<8x32xf32>
    %473 = vector.extract_strided_slice %460 {offsets = [0, 64], sizes = [8, 32], strides = [1, 1]} : vector<8x128xf32> to vector<8x32xf32>
    %474 = math.tanh %473 : vector<8x32xf32>
    %475 = vector.extract_strided_slice %460 {offsets = [0, 96], sizes = [8, 32], strides = [1, 1]} : vector<8x128xf32> to vector<8x32xf32>
    %476 = arith.negf %475 : vector<8x32xf32>
    %477 = math.exp %476 : vector<8x32xf32>
    %cst_101 = arith.constant 1.000000e+00 : f32
    %478 = vector.broadcast %cst_101 : f32 to vector<8x32xf32>
    %479 = arith.addf %478, %477 : vector<8x32xf32>
    %480 = arith.divf %478, %479 : vector<8x32xf32>
    %481 = arith.mulf %472, %404 : vector<8x32xf32>
    %482 = arith.mulf %466, %474 : vector<8x32xf32>
    %483 = arith.addf %481, %482 : vector<8x32xf32>
    %484 = math.tanh %483 : vector<8x32xf32>
    %485 = arith.mulf %480, %484 : vector<8x32xf32>
    %486 = vector.broadcast %c5_i32 : i32 to vector<8x1xi32>
    %487 = arith.cmpi sgt, %0, %486 : vector<8x1xi32>
    %488 = vector.shape_cast %487 : vector<8x1xi1> to vector<8x1xi1>
    %489 = vector.broadcast %488 : vector<8x1xi1> to vector<8x32xi1>
    %490 = arith.select %489, %485, %401 : vector<8x32xi1>, vector<8x32xf32>
    %491 = vector.shape_cast %487 : vector<8x1xi1> to vector<8x1xi1>
    %492 = vector.broadcast %491 : vector<8x1xi1> to vector<8x32xi1>
    %493 = arith.select %492, %483, %404 : vector<8x32xi1>, vector<8x32xf32>
    %c7_i32_102 = arith.constant 7 : i32
    %494 = arith.subi %c7_i32_102, %c5_i32 : i32
    %c8_i32_103 = arith.constant 8 : i32
    %495 = arith.muli %494, %c8_i32_103 : i32
    %496 = arith.index_cast %495 : i32 to index
    %c128_104 = arith.constant 128 : index
    %497 = vector.load %arg14[%496, %c128_104] : memref<64x256xf32, #tpu.memory_space<vmem>>, vector<8x128xf32>
    %cst_105 = arith.constant dense<0.000000e+00> : vector<8x128xf32>
    %498 = tpu.matmul %440, %9, %cst_105 {dimension_numbers = #tpu.dot_dimension_numbers<[1], [0], [0], [1], [0, 0, 1, 1], [], []>} : vector<8x32xf32>, vector<32x128xf32>, vector<8x128xf32> -> vector<8x128xf32>
    %499 = arith.addf %497, %498 : vector<8x128xf32>
    %500 = vector.extract_strided_slice %499 {offsets = [0, 0], sizes = [8, 32], strides = [1, 1]} : vector<8x128xf32> to vector<8x32xf32>
    %501 = arith.negf %500 : vector<8x32xf32>
    %502 = math.exp %501 : vector<8x32xf32>
    %cst_106 = arith.constant 1.000000e+00 : f32
    %503 = vector.broadcast %cst_106 : f32 to vector<8x32xf32>
    %504 = arith.addf %503, %502 : vector<8x32xf32>
    %505 = arith.divf %503, %504 : vector<8x32xf32>
    %506 = vector.extract_strided_slice %499 {offsets = [0, 32], sizes = [8, 32], strides = [1, 1]} : vector<8x128xf32> to vector<8x32xf32>
    %507 = arith.negf %506 : vector<8x32xf32>
    %508 = math.exp %507 : vector<8x32xf32>
    %cst_107 = arith.constant 1.000000e+00 : f32
    %509 = vector.broadcast %cst_107 : f32 to vector<8x32xf32>
    %510 = arith.addf %509, %508 : vector<8x32xf32>
    %511 = arith.divf %509, %510 : vector<8x32xf32>
    %512 = vector.extract_strided_slice %499 {offsets = [0, 64], sizes = [8, 32], strides = [1, 1]} : vector<8x128xf32> to vector<8x32xf32>
    %513 = math.tanh %512 : vector<8x32xf32>
    %514 = vector.extract_strided_slice %499 {offsets = [0, 96], sizes = [8, 32], strides = [1, 1]} : vector<8x128xf32> to vector<8x32xf32>
    %515 = arith.negf %514 : vector<8x32xf32>
    %516 = math.exp %515 : vector<8x32xf32>
    %cst_108 = arith.constant 1.000000e+00 : f32
    %517 = vector.broadcast %cst_108 : f32 to vector<8x32xf32>
    %518 = arith.addf %517, %516 : vector<8x32xf32>
    %519 = arith.divf %517, %518 : vector<8x32xf32>
    %520 = arith.mulf %511, %443 : vector<8x32xf32>
    %521 = arith.mulf %505, %513 : vector<8x32xf32>
    %522 = arith.addf %520, %521 : vector<8x32xf32>
    %523 = math.tanh %522 : vector<8x32xf32>
    %524 = arith.mulf %519, %523 : vector<8x32xf32>
    %525 = vector.broadcast %494 : i32 to vector<8x1xi32>
    %526 = arith.cmpi sgt, %0, %525 : vector<8x1xi32>
    %527 = vector.shape_cast %526 : vector<8x1xi1> to vector<8x1xi1>
    %528 = vector.broadcast %527 : vector<8x1xi1> to vector<8x32xi1>
    %529 = arith.select %528, %524, %440 : vector<8x32xi1>, vector<8x32xf32>
    %530 = vector.shape_cast %526 : vector<8x1xi1> to vector<8x1xi1>
    %531 = vector.broadcast %530 : vector<8x1xi1> to vector<8x32xi1>
    %532 = arith.select %531, %522, %443 : vector<8x32xi1>, vector<8x32xf32>
    %cst_109 = arith.constant 0.000000e+00 : f32
    %533 = vector.shape_cast %487 : vector<8x1xi1> to vector<8x1xi1>
    %534 = vector.broadcast %533 : vector<8x1xi1> to vector<8x32xi1>
    %535 = vector.broadcast %cst_109 : f32 to vector<8x32xf32>
    %536 = arith.select %534, %485, %535 : vector<8x32xi1>, vector<8x32xf32>
    %537 = arith.index_cast %456 : i32 to index
    %c0_110 = arith.constant 0 : index
    %538 = vector.load %arg15[%537, %c0_110] : memref<64x32xf32, #tpu.memory_space<vmem>>, vector<8x32xf32>
    tpu.vector_store %arg15[%537, %c0_110], %536 {strides = array<i32>} : memref<64x32xf32, #tpu.memory_space<vmem>>, vector<8x32xf32>,
    %cst_111 = arith.constant 0.000000e+00 : f32
    %539 = vector.shape_cast %526 : vector<8x1xi1> to vector<8x1xi1>
    %540 = vector.broadcast %539 : vector<8x1xi1> to vector<8x32xi1>
    %541 = vector.broadcast %cst_111 : f32 to vector<8x32xf32>
    %542 = arith.select %540, %524, %541 : vector<8x32xi1>, vector<8x32xf32>
    %543 = arith.index_cast %495 : i32 to index
    %c0_112 = arith.constant 0 : index
    %544 = vector.load %arg16[%543, %c0_112] : memref<64x32xf32, #tpu.memory_space<vmem>>, vector<8x32xf32>
    tpu.vector_store %arg16[%543, %c0_112], %542 {strides = array<i32>} : memref<64x32xf32, #tpu.memory_space<vmem>>, vector<8x32xf32>,
    %c6_i32 = arith.constant 6 : i32
    %c8_i32_113 = arith.constant 8 : i32
    %545 = arith.muli %c6_i32, %c8_i32_113 : i32
    %546 = arith.index_cast %545 : i32 to index
    %c0_114 = arith.constant 0 : index
    %547 = vector.load %arg14[%546, %c0_114] : memref<64x256xf32, #tpu.memory_space<vmem>>, vector<8x128xf32>
    %cst_115 = arith.constant dense<0.000000e+00> : vector<8x128xf32>
    %548 = tpu.matmul %490, %8, %cst_115 {dimension_numbers = #tpu.dot_dimension_numbers<[1], [0], [0], [1], [0, 0, 1, 1], [], []>} : vector<8x32xf32>, vector<32x128xf32>, vector<8x128xf32> -> vector<8x128xf32>
    %549 = arith.addf %547, %548 : vector<8x128xf32>
    %550 = vector.extract_strided_slice %549 {offsets = [0, 0], sizes = [8, 32], strides = [1, 1]} : vector<8x128xf32> to vector<8x32xf32>
    %551 = arith.negf %550 : vector<8x32xf32>
    %552 = math.exp %551 : vector<8x32xf32>
    %cst_116 = arith.constant 1.000000e+00 : f32
    %553 = vector.broadcast %cst_116 : f32 to vector<8x32xf32>
    %554 = arith.addf %553, %552 : vector<8x32xf32>
    %555 = arith.divf %553, %554 : vector<8x32xf32>
    %556 = vector.extract_strided_slice %549 {offsets = [0, 32], sizes = [8, 32], strides = [1, 1]} : vector<8x128xf32> to vector<8x32xf32>
    %557 = arith.negf %556 : vector<8x32xf32>
    %558 = math.exp %557 : vector<8x32xf32>
    %cst_117 = arith.constant 1.000000e+00 : f32
    %559 = vector.broadcast %cst_117 : f32 to vector<8x32xf32>
    %560 = arith.addf %559, %558 : vector<8x32xf32>
    %561 = arith.divf %559, %560 : vector<8x32xf32>
    %562 = vector.extract_strided_slice %549 {offsets = [0, 64], sizes = [8, 32], strides = [1, 1]} : vector<8x128xf32> to vector<8x32xf32>
    %563 = math.tanh %562 : vector<8x32xf32>
    %564 = vector.extract_strided_slice %549 {offsets = [0, 96], sizes = [8, 32], strides = [1, 1]} : vector<8x128xf32> to vector<8x32xf32>
    %565 = arith.negf %564 : vector<8x32xf32>
    %566 = math.exp %565 : vector<8x32xf32>
    %cst_118 = arith.constant 1.000000e+00 : f32
    %567 = vector.broadcast %cst_118 : f32 to vector<8x32xf32>
    %568 = arith.addf %567, %566 : vector<8x32xf32>
    %569 = arith.divf %567, %568 : vector<8x32xf32>
    %570 = arith.mulf %561, %493 : vector<8x32xf32>
    %571 = arith.mulf %555, %563 : vector<8x32xf32>
    %572 = arith.addf %570, %571 : vector<8x32xf32>
    %573 = math.tanh %572 : vector<8x32xf32>
    %574 = arith.mulf %569, %573 : vector<8x32xf32>
    %575 = vector.broadcast %c6_i32 : i32 to vector<8x1xi32>
    %576 = arith.cmpi sgt, %0, %575 : vector<8x1xi32>
    %577 = vector.shape_cast %576 : vector<8x1xi1> to vector<8x1xi1>
    %578 = vector.broadcast %577 : vector<8x1xi1> to vector<8x32xi1>
    %579 = arith.select %578, %574, %490 : vector<8x32xi1>, vector<8x32xf32>
    %580 = vector.shape_cast %576 : vector<8x1xi1> to vector<8x1xi1>
    %581 = vector.broadcast %580 : vector<8x1xi1> to vector<8x32xi1>
    %582 = arith.select %581, %572, %493 : vector<8x32xi1>, vector<8x32xf32>
    %c7_i32_119 = arith.constant 7 : i32
    %583 = arith.subi %c7_i32_119, %c6_i32 : i32
    %c8_i32_120 = arith.constant 8 : i32
    %584 = arith.muli %583, %c8_i32_120 : i32
    %585 = arith.index_cast %584 : i32 to index
    %c128_121 = arith.constant 128 : index
    %586 = vector.load %arg14[%585, %c128_121] : memref<64x256xf32, #tpu.memory_space<vmem>>, vector<8x128xf32>
    %cst_122 = arith.constant dense<0.000000e+00> : vector<8x128xf32>
    %587 = tpu.matmul %529, %9, %cst_122 {dimension_numbers = #tpu.dot_dimension_numbers<[1], [0], [0], [1], [0, 0, 1, 1], [], []>} : vector<8x32xf32>, vector<32x128xf32>, vector<8x128xf32> -> vector<8x128xf32>
    %588 = arith.addf %586, %587 : vector<8x128xf32>
    %589 = vector.extract_strided_slice %588 {offsets = [0, 0], sizes = [8, 32], strides = [1, 1]} : vector<8x128xf32> to vector<8x32xf32>
    %590 = arith.negf %589 : vector<8x32xf32>
    %591 = math.exp %590 : vector<8x32xf32>
    %cst_123 = arith.constant 1.000000e+00 : f32
    %592 = vector.broadcast %cst_123 : f32 to vector<8x32xf32>
    %593 = arith.addf %592, %591 : vector<8x32xf32>
    %594 = arith.divf %592, %593 : vector<8x32xf32>
    %595 = vector.extract_strided_slice %588 {offsets = [0, 32], sizes = [8, 32], strides = [1, 1]} : vector<8x128xf32> to vector<8x32xf32>
    %596 = arith.negf %595 : vector<8x32xf32>
    %597 = math.exp %596 : vector<8x32xf32>
    %cst_124 = arith.constant 1.000000e+00 : f32
    %598 = vector.broadcast %cst_124 : f32 to vector<8x32xf32>
    %599 = arith.addf %598, %597 : vector<8x32xf32>
    %600 = arith.divf %598, %599 : vector<8x32xf32>
    %601 = vector.extract_strided_slice %588 {offsets = [0, 64], sizes = [8, 32], strides = [1, 1]} : vector<8x128xf32> to vector<8x32xf32>
    %602 = math.tanh %601 : vector<8x32xf32>
    %603 = vector.extract_strided_slice %588 {offsets = [0, 96], sizes = [8, 32], strides = [1, 1]} : vector<8x128xf32> to vector<8x32xf32>
    %604 = arith.negf %603 : vector<8x32xf32>
    %605 = math.exp %604 : vector<8x32xf32>
    %cst_125 = arith.constant 1.000000e+00 : f32
    %606 = vector.broadcast %cst_125 : f32 to vector<8x32xf32>
    %607 = arith.addf %606, %605 : vector<8x32xf32>
    %608 = arith.divf %606, %607 : vector<8x32xf32>
    %609 = arith.mulf %600, %532 : vector<8x32xf32>
    %610 = arith.mulf %594, %602 : vector<8x32xf32>
    %611 = arith.addf %609, %610 : vector<8x32xf32>
    %612 = math.tanh %611 : vector<8x32xf32>
    %613 = arith.mulf %608, %612 : vector<8x32xf32>
    %614 = vector.broadcast %583 : i32 to vector<8x1xi32>
    %615 = arith.cmpi sgt, %0, %614 : vector<8x1xi32>
    %616 = vector.shape_cast %615 : vector<8x1xi1> to vector<8x1xi1>
    %617 = vector.broadcast %616 : vector<8x1xi1> to vector<8x32xi1>
    %618 = arith.select %617, %613, %529 : vector<8x32xi1>, vector<8x32xf32>
    %619 = vector.shape_cast %615 : vector<8x1xi1> to vector<8x1xi1>
    %620 = vector.broadcast %619 : vector<8x1xi1> to vector<8x32xi1>
    %621 = arith.select %620, %611, %532 : vector<8x32xi1>, vector<8x32xf32>
    %cst_126 = arith.constant 0.000000e+00 : f32
    %622 = vector.shape_cast %576 : vector<8x1xi1> to vector<8x1xi1>
    %623 = vector.broadcast %622 : vector<8x1xi1> to vector<8x32xi1>
    %624 = vector.broadcast %cst_126 : f32 to vector<8x32xf32>
    %625 = arith.select %623, %574, %624 : vector<8x32xi1>, vector<8x32xf32>
    %626 = arith.index_cast %545 : i32 to index
    %c0_127 = arith.constant 0 : index
    %627 = vector.load %arg15[%626, %c0_127] : memref<64x32xf32, #tpu.memory_space<vmem>>, vector<8x32xf32>
    tpu.vector_store %arg15[%626, %c0_127], %625 {strides = array<i32>} : memref<64x32xf32, #tpu.memory_space<vmem>>, vector<8x32xf32>,
    %cst_128 = arith.constant 0.000000e+00 : f32
    %628 = vector.shape_cast %615 : vector<8x1xi1> to vector<8x1xi1>
    %629 = vector.broadcast %628 : vector<8x1xi1> to vector<8x32xi1>
    %630 = vector.broadcast %cst_128 : f32 to vector<8x32xf32>
    %631 = arith.select %629, %613, %630 : vector<8x32xi1>, vector<8x32xf32>
    %632 = arith.index_cast %584 : i32 to index
    %c0_129 = arith.constant 0 : index
    %633 = vector.load %arg16[%632, %c0_129] : memref<64x32xf32, #tpu.memory_space<vmem>>, vector<8x32xf32>
    tpu.vector_store %arg16[%632, %c0_129], %631 {strides = array<i32>} : memref<64x32xf32, #tpu.memory_space<vmem>>, vector<8x32xf32>,
    %c7_i32_130 = arith.constant 7 : i32
    %c8_i32_131 = arith.constant 8 : i32
    %634 = arith.muli %c7_i32_130, %c8_i32_131 : i32
    %635 = arith.index_cast %634 : i32 to index
    %c0_132 = arith.constant 0 : index
    %636 = vector.load %arg14[%635, %c0_132] : memref<64x256xf32, #tpu.memory_space<vmem>>, vector<8x128xf32>
    %cst_133 = arith.constant dense<0.000000e+00> : vector<8x128xf32>
    %637 = tpu.matmul %579, %8, %cst_133 {dimension_numbers = #tpu.dot_dimension_numbers<[1], [0], [0], [1], [0, 0, 1, 1], [], []>} : vector<8x32xf32>, vector<32x128xf32>, vector<8x128xf32> -> vector<8x128xf32>
    %638 = arith.addf %636, %637 : vector<8x128xf32>
    %639 = vector.extract_strided_slice %638 {offsets = [0, 0], sizes = [8, 32], strides = [1, 1]} : vector<8x128xf32> to vector<8x32xf32>
    %640 = arith.negf %639 : vector<8x32xf32>
    %641 = math.exp %640 : vector<8x32xf32>
    %cst_134 = arith.constant 1.000000e+00 : f32
    %642 = vector.broadcast %cst_134 : f32 to vector<8x32xf32>
    %643 = arith.addf %642, %641 : vector<8x32xf32>
    %644 = arith.divf %642, %643 : vector<8x32xf32>
    %645 = vector.extract_strided_slice %638 {offsets = [0, 32], sizes = [8, 32], strides = [1, 1]} : vector<8x128xf32> to vector<8x32xf32>
    %646 = arith.negf %645 : vector<8x32xf32>
    %647 = math.exp %646 : vector<8x32xf32>
    %cst_135 = arith.constant 1.000000e+00 : f32
    %648 = vector.broadcast %cst_135 : f32 to vector<8x32xf32>
    %649 = arith.addf %648, %647 : vector<8x32xf32>
    %650 = arith.divf %648, %649 : vector<8x32xf32>
    %651 = vector.extract_strided_slice %638 {offsets = [0, 64], sizes = [8, 32], strides = [1, 1]} : vector<8x128xf32> to vector<8x32xf32>
    %652 = math.tanh %651 : vector<8x32xf32>
    %653 = vector.extract_strided_slice %638 {offsets = [0, 96], sizes = [8, 32], strides = [1, 1]} : vector<8x128xf32> to vector<8x32xf32>
    %654 = arith.negf %653 : vector<8x32xf32>
    %655 = math.exp %654 : vector<8x32xf32>
    %cst_136 = arith.constant 1.000000e+00 : f32
    %656 = vector.broadcast %cst_136 : f32 to vector<8x32xf32>
    %657 = arith.addf %656, %655 : vector<8x32xf32>
    %658 = arith.divf %656, %657 : vector<8x32xf32>
    %659 = arith.mulf %650, %582 : vector<8x32xf32>
    %660 = arith.mulf %644, %652 : vector<8x32xf32>
    %661 = arith.addf %659, %660 : vector<8x32xf32>
    %662 = math.tanh %661 : vector<8x32xf32>
    %663 = arith.mulf %658, %662 : vector<8x32xf32>
    %664 = vector.broadcast %c7_i32_130 : i32 to vector<8x1xi32>
    %665 = arith.cmpi sgt, %0, %664 : vector<8x1xi32>
    %666 = vector.shape_cast %665 : vector<8x1xi1> to vector<8x1xi1>
    %667 = vector.broadcast %666 : vector<8x1xi1> to vector<8x32xi1>
    %668 = arith.select %667, %663, %579 : vector<8x32xi1>, vector<8x32xf32>
    %669 = vector.shape_cast %665 : vector<8x1xi1> to vector<8x1xi1>
    %670 = vector.broadcast %669 : vector<8x1xi1> to vector<8x32xi1>
    %671 = arith.select %670, %661, %582 : vector<8x32xi1>, vector<8x32xf32>
    %c7_i32_137 = arith.constant 7 : i32
    %672 = arith.subi %c7_i32_137, %c7_i32_130 : i32
    %c8_i32_138 = arith.constant 8 : i32
    %673 = arith.muli %672, %c8_i32_138 : i32
    %674 = arith.index_cast %673 : i32 to index
    %c128_139 = arith.constant 128 : index
    %675 = vector.load %arg14[%674, %c128_139] : memref<64x256xf32, #tpu.memory_space<vmem>>, vector<8x128xf32>
    %cst_140 = arith.constant dense<0.000000e+00> : vector<8x128xf32>
    %676 = tpu.matmul %618, %9, %cst_140 {dimension_numbers = #tpu.dot_dimension_numbers<[1], [0], [0], [1], [0, 0, 1, 1], [], []>} : vector<8x32xf32>, vector<32x128xf32>, vector<8x128xf32> -> vector<8x128xf32>
    %677 = arith.addf %675, %676 : vector<8x128xf32>
    %678 = vector.extract_strided_slice %677 {offsets = [0, 0], sizes = [8, 32], strides = [1, 1]} : vector<8x128xf32> to vector<8x32xf32>
    %679 = arith.negf %678 : vector<8x32xf32>
    %680 = math.exp %679 : vector<8x32xf32>
    %cst_141 = arith.constant 1.000000e+00 : f32
    %681 = vector.broadcast %cst_141 : f32 to vector<8x32xf32>
    %682 = arith.addf %681, %680 : vector<8x32xf32>
    %683 = arith.divf %681, %682 : vector<8x32xf32>
    %684 = vector.extract_strided_slice %677 {offsets = [0, 32], sizes = [8, 32], strides = [1, 1]} : vector<8x128xf32> to vector<8x32xf32>
    %685 = arith.negf %684 : vector<8x32xf32>
    %686 = math.exp %685 : vector<8x32xf32>
    %cst_142 = arith.constant 1.000000e+00 : f32
    %687 = vector.broadcast %cst_142 : f32 to vector<8x32xf32>
    %688 = arith.addf %687, %686 : vector<8x32xf32>
    %689 = arith.divf %687, %688 : vector<8x32xf32>
    %690 = vector.extract_strided_slice %677 {offsets = [0, 64], sizes = [8, 32], strides = [1, 1]} : vector<8x128xf32> to vector<8x32xf32>
    %691 = math.tanh %690 : vector<8x32xf32>
    %692 = vector.extract_strided_slice %677 {offsets = [0, 96], sizes = [8, 32], strides = [1, 1]} : vector<8x128xf32> to vector<8x32xf32>
    %693 = arith.negf %692 : vector<8x32xf32>
    %694 = math.exp %693 : vector<8x32xf32>
    %cst_143 = arith.constant 1.000000e+00 : f32
    %695 = vector.broadcast %cst_143 : f32 to vector<8x32xf32>
    %696 = arith.addf %695, %694 : vector<8x32xf32>
    %697 = arith.divf %695, %696 : vector<8x32xf32>
    %698 = arith.mulf %689, %621 : vector<8x32xf32>
    %699 = arith.mulf %683, %691 : vector<8x32xf32>
    %700 = arith.addf %698, %699 : vector<8x32xf32>
    %701 = math.tanh %700 : vector<8x32xf32>
    %702 = arith.mulf %697, %701 : vector<8x32xf32>
    %703 = vector.broadcast %672 : i32 to vector<8x1xi32>
    %704 = arith.cmpi sgt, %0, %703 : vector<8x1xi32>
    %705 = vector.shape_cast %704 : vector<8x1xi1> to vector<8x1xi1>
    %706 = vector.broadcast %705 : vector<8x1xi1> to vector<8x32xi1>
    %707 = arith.select %706, %702, %618 : vector<8x32xi1>, vector<8x32xf32>
    %708 = vector.shape_cast %704 : vector<8x1xi1> to vector<8x1xi1>
    %709 = vector.broadcast %708 : vector<8x1xi1> to vector<8x32xi1>
    %710 = arith.select %709, %700, %621 : vector<8x32xi1>, vector<8x32xf32>
    %cst_144 = arith.constant 0.000000e+00 : f32
    %711 = vector.shape_cast %665 : vector<8x1xi1> to vector<8x1xi1>
    %712 = vector.broadcast %711 : vector<8x1xi1> to vector<8x32xi1>
    %713 = vector.broadcast %cst_144 : f32 to vector<8x32xf32>
    %714 = arith.select %712, %663, %713 : vector<8x32xi1>, vector<8x32xf32>
    %715 = arith.index_cast %634 : i32 to index
    %c0_145 = arith.constant 0 : index
    %716 = vector.load %arg15[%715, %c0_145] : memref<64x32xf32, #tpu.memory_space<vmem>>, vector<8x32xf32>
    tpu.vector_store %arg15[%715, %c0_145], %714 {strides = array<i32>} : memref<64x32xf32, #tpu.memory_space<vmem>>, vector<8x32xf32>,
    %cst_146 = arith.constant 0.000000e+00 : f32
    %717 = vector.shape_cast %704 : vector<8x1xi1> to vector<8x1xi1>
    %718 = vector.broadcast %717 : vector<8x1xi1> to vector<8x32xi1>
    %719 = vector.broadcast %cst_146 : f32 to vector<8x32xf32>
    %720 = arith.select %718, %702, %719 : vector<8x32xi1>, vector<8x32xf32>
    %721 = arith.index_cast %673 : i32 to index
    %c0_147 = arith.constant 0 : index
    %722 = vector.load %arg16[%721, %c0_147] : memref<64x32xf32, #tpu.memory_space<vmem>>, vector<8x32xf32>
    tpu.vector_store %arg16[%721, %c0_147], %720 {strides = array<i32>} : memref<64x32xf32, #tpu.memory_space<vmem>>, vector<8x32xf32>,
    %c8_i32_148 = arith.constant 8 : i32
    %c0_149 = arith.constant 0 : index
    %c0_150 = arith.constant 0 : index
    %723 = vector.load %arg15[%c0_149, %c0_150] : memref<64x32xf32, #tpu.memory_space<vmem>>, vector<64x32xf32>
    %c0_151 = arith.constant 0 : index
    %c0_152 = arith.constant 0 : index
    %724 = vector.load %arg6[%c0_151, %c0_152] : memref<64x256xf32, #tpu.memory_space<vmem>>, vector<32x256xf32>
    %cst_153 = arith.constant dense<0.000000e+00> : vector<64x256xf32>
    %725 = tpu.matmul %723, %724, %cst_153 {dimension_numbers = #tpu.dot_dimension_numbers<[1], [0], [0], [1], [0, 0, 1, 1], [], []>} : vector<64x32xf32>, vector<32x256xf32>, vector<64x256xf32> -> vector<64x256xf32>
    %c0_154 = arith.constant 0 : index
    %c0_155 = arith.constant 0 : index
    %726 = vector.load %arg16[%c0_154, %c0_155] : memref<64x32xf32, #tpu.memory_space<vmem>>, vector<64x32xf32>
    %c32 = arith.constant 32 : index
    %c0_156 = arith.constant 0 : index
    %727 = vector.load %arg6[%c32, %c0_156] : memref<64x256xf32, #tpu.memory_space<vmem>>, vector<32x256xf32>
    %cst_157 = arith.constant dense<0.000000e+00> : vector<64x256xf32>
    %728 = tpu.matmul %726, %727, %cst_157 {dimension_numbers = #tpu.dot_dimension_numbers<[1], [0], [0], [1], [0, 0, 1, 1], [], []>} : vector<64x32xf32>, vector<32x256xf32>, vector<64x256xf32> -> vector<64x256xf32>
    %729 = arith.addf %725, %728 : vector<64x256xf32>
    %c0_158 = arith.constant 0 : index
    %c0_159 = arith.constant 0 : index
    %730 = vector.load %arg9[%c0_158, %c0_159] : memref<1x256xf32, #tpu.memory_space<vmem>>, vector<1x256xf32>
    %731 = vector.broadcast %730 : vector<1x256xf32> to vector<64x256xf32>
    %732 = arith.addf %729, %731 : vector<64x256xf32>
    %c0_160 = arith.constant 0 : index
    %c0_161 = arith.constant 0 : index
    %733 = vector.load %arg14[%c0_160, %c0_161] : memref<64x256xf32, #tpu.memory_space<vmem>>, vector<64x256xf32>
    tpu.vector_store %arg14[%c0_160, %c0_161], %732 {strides = array<i32>} : memref<64x256xf32, #tpu.memory_space<vmem>>, vector<64x256xf32>,
    %c0_162 = arith.constant 0 : index
    %c0_163 = arith.constant 0 : index
    %734 = vector.load %arg7[%c0_162, %c0_163] : memref<32x128xf32, #tpu.memory_space<vmem>>, vector<32x128xf32>
    %c0_164 = arith.constant 0 : index
    %c0_165 = arith.constant 0 : index
    %735 = vector.load %arg8[%c0_164, %c0_165] : memref<32x128xf32, #tpu.memory_space<vmem>>, vector<32x128xf32>
    %cst_166 = arith.constant 0.000000e+00 : f32
    %736 = vector.broadcast %cst_166 : f32 to vector<8x32xf32>
    %c0_i32_167 = arith.constant 0 : i32
    %c8_i32_168 = arith.constant 8 : i32
    %737 = arith.muli %c0_i32_167, %c8_i32_168 : i32
    %738 = arith.index_cast %737 : i32 to index
    %c0_169 = arith.constant 0 : index
    %739 = vector.load %arg14[%738, %c0_169] : memref<64x256xf32, #tpu.memory_space<vmem>>, vector<8x128xf32>
    %cst_170 = arith.constant dense<0.000000e+00> : vector<8x128xf32>
    %740 = tpu.matmul %736, %734, %cst_170 {dimension_numbers = #tpu.dot_dimension_numbers<[1], [0], [0], [1], [0, 0, 1, 1], [], []>} : vector<8x32xf32>, vector<32x128xf32>, vector<8x128xf32> -> vector<8x128xf32>
    %741 = arith.addf %739, %740 : vector<8x128xf32>
    %742 = vector.extract_strided_slice %741 {offsets = [0, 0], sizes = [8, 32], strides = [1, 1]} : vector<8x128xf32> to vector<8x32xf32>
    %743 = arith.negf %742 : vector<8x32xf32>
    %744 = math.exp %743 : vector<8x32xf32>
    %cst_171 = arith.constant 1.000000e+00 : f32
    %745 = vector.broadcast %cst_171 : f32 to vector<8x32xf32>
    %746 = arith.addf %745, %744 : vector<8x32xf32>
    %747 = arith.divf %745, %746 : vector<8x32xf32>
    %748 = vector.extract_strided_slice %741 {offsets = [0, 32], sizes = [8, 32], strides = [1, 1]} : vector<8x128xf32> to vector<8x32xf32>
    %749 = arith.negf %748 : vector<8x32xf32>
    %750 = math.exp %749 : vector<8x32xf32>
    %cst_172 = arith.constant 1.000000e+00 : f32
    %751 = vector.broadcast %cst_172 : f32 to vector<8x32xf32>
    %752 = arith.addf %751, %750 : vector<8x32xf32>
    %753 = arith.divf %751, %752 : vector<8x32xf32>
    %754 = vector.extract_strided_slice %741 {offsets = [0, 64], sizes = [8, 32], strides = [1, 1]} : vector<8x128xf32> to vector<8x32xf32>
    %755 = math.tanh %754 : vector<8x32xf32>
    %756 = vector.extract_strided_slice %741 {offsets = [0, 96], sizes = [8, 32], strides = [1, 1]} : vector<8x128xf32> to vector<8x32xf32>
    %757 = arith.negf %756 : vector<8x32xf32>
    %758 = math.exp %757 : vector<8x32xf32>
    %cst_173 = arith.constant 1.000000e+00 : f32
    %759 = vector.broadcast %cst_173 : f32 to vector<8x32xf32>
    %760 = arith.addf %759, %758 : vector<8x32xf32>
    %761 = arith.divf %759, %760 : vector<8x32xf32>
    %762 = arith.mulf %753, %736 : vector<8x32xf32>
    %763 = arith.mulf %747, %755 : vector<8x32xf32>
    %764 = arith.addf %762, %763 : vector<8x32xf32>
    %765 = math.tanh %764 : vector<8x32xf32>
    %766 = arith.mulf %761, %765 : vector<8x32xf32>
    %767 = vector.broadcast %c0_i32_167 : i32 to vector<8x1xi32>
    %768 = arith.cmpi sgt, %0, %767 : vector<8x1xi32>
    %769 = vector.shape_cast %768 : vector<8x1xi1> to vector<8x1xi1>
    %770 = vector.broadcast %769 : vector<8x1xi1> to vector<8x32xi1>
    %771 = arith.select %770, %766, %736 : vector<8x32xi1>, vector<8x32xf32>
    %772 = vector.shape_cast %768 : vector<8x1xi1> to vector<8x1xi1>
    %773 = vector.broadcast %772 : vector<8x1xi1> to vector<8x32xi1>
    %774 = arith.select %773, %764, %736 : vector<8x32xi1>, vector<8x32xf32>
    %c7_i32_174 = arith.constant 7 : i32
    %775 = arith.subi %c7_i32_174, %c0_i32_167 : i32
    %c8_i32_175 = arith.constant 8 : i32
    %776 = arith.muli %775, %c8_i32_175 : i32
    %777 = arith.index_cast %776 : i32 to index
    %c128_176 = arith.constant 128 : index
    %778 = vector.load %arg14[%777, %c128_176] : memref<64x256xf32, #tpu.memory_space<vmem>>, vector<8x128xf32>
    %cst_177 = arith.constant dense<0.000000e+00> : vector<8x128xf32>
    %779 = tpu.matmul %736, %735, %cst_177 {dimension_numbers = #tpu.dot_dimension_numbers<[1], [0], [0], [1], [0, 0, 1, 1], [], []>} : vector<8x32xf32>, vector<32x128xf32>, vector<8x128xf32> -> vector<8x128xf32>
    %780 = arith.addf %778, %779 : vector<8x128xf32>
    %781 = vector.extract_strided_slice %780 {offsets = [0, 0], sizes = [8, 32], strides = [1, 1]} : vector<8x128xf32> to vector<8x32xf32>
    %782 = arith.negf %781 : vector<8x32xf32>
    %783 = math.exp %782 : vector<8x32xf32>
    %cst_178 = arith.constant 1.000000e+00 : f32
    %784 = vector.broadcast %cst_178 : f32 to vector<8x32xf32>
    %785 = arith.addf %784, %783 : vector<8x32xf32>
    %786 = arith.divf %784, %785 : vector<8x32xf32>
    %787 = vector.extract_strided_slice %780 {offsets = [0, 32], sizes = [8, 32], strides = [1, 1]} : vector<8x128xf32> to vector<8x32xf32>
    %788 = arith.negf %787 : vector<8x32xf32>
    %789 = math.exp %788 : vector<8x32xf32>
    %cst_179 = arith.constant 1.000000e+00 : f32
    %790 = vector.broadcast %cst_179 : f32 to vector<8x32xf32>
    %791 = arith.addf %790, %789 : vector<8x32xf32>
    %792 = arith.divf %790, %791 : vector<8x32xf32>
    %793 = vector.extract_strided_slice %780 {offsets = [0, 64], sizes = [8, 32], strides = [1, 1]} : vector<8x128xf32> to vector<8x32xf32>
    %794 = math.tanh %793 : vector<8x32xf32>
    %795 = vector.extract_strided_slice %780 {offsets = [0, 96], sizes = [8, 32], strides = [1, 1]} : vector<8x128xf32> to vector<8x32xf32>
    %796 = arith.negf %795 : vector<8x32xf32>
    %797 = math.exp %796 : vector<8x32xf32>
    %cst_180 = arith.constant 1.000000e+00 : f32
    %798 = vector.broadcast %cst_180 : f32 to vector<8x32xf32>
    %799 = arith.addf %798, %797 : vector<8x32xf32>
    %800 = arith.divf %798, %799 : vector<8x32xf32>
    %801 = arith.mulf %792, %736 : vector<8x32xf32>
    %802 = arith.mulf %786, %794 : vector<8x32xf32>
    %803 = arith.addf %801, %802 : vector<8x32xf32>
    %804 = math.tanh %803 : vector<8x32xf32>
    %805 = arith.mulf %800, %804 : vector<8x32xf32>
    %806 = vector.broadcast %775 : i32 to vector<8x1xi32>
    %807 = arith.cmpi sgt, %0, %806 : vector<8x1xi32>
    %808 = vector.shape_cast %807 : vector<8x1xi1> to vector<8x1xi1>
    %809 = vector.broadcast %808 : vector<8x1xi1> to vector<8x32xi1>
    %810 = arith.select %809, %805, %736 : vector<8x32xi1>, vector<8x32xf32>
    %811 = vector.shape_cast %807 : vector<8x1xi1> to vector<8x1xi1>
    %812 = vector.broadcast %811 : vector<8x1xi1> to vector<8x32xi1>
    %813 = arith.select %812, %803, %736 : vector<8x32xi1>, vector<8x32xf32>
    %c1_i32_181 = arith.constant 1 : i32
    %c8_i32_182 = arith.constant 8 : i32
    %814 = arith.muli %c1_i32_181, %c8_i32_182 : i32
    %815 = arith.index_cast %814 : i32 to index
    %c0_183 = arith.constant 0 : index
    %816 = vector.load %arg14[%815, %c0_183] : memref<64x256xf32, #tpu.memory_space<vmem>>, vector<8x128xf32>
    %cst_184 = arith.constant dense<0.000000e+00> : vector<8x128xf32>
    %817 = tpu.matmul %771, %734, %cst_184 {dimension_numbers = #tpu.dot_dimension_numbers<[1], [0], [0], [1], [0, 0, 1, 1], [], []>} : vector<8x32xf32>, vector<32x128xf32>, vector<8x128xf32> -> vector<8x128xf32>
    %818 = arith.addf %816, %817 : vector<8x128xf32>
    %819 = vector.extract_strided_slice %818 {offsets = [0, 0], sizes = [8, 32], strides = [1, 1]} : vector<8x128xf32> to vector<8x32xf32>
    %820 = arith.negf %819 : vector<8x32xf32>
    %821 = math.exp %820 : vector<8x32xf32>
    %cst_185 = arith.constant 1.000000e+00 : f32
    %822 = vector.broadcast %cst_185 : f32 to vector<8x32xf32>
    %823 = arith.addf %822, %821 : vector<8x32xf32>
    %824 = arith.divf %822, %823 : vector<8x32xf32>
    %825 = vector.extract_strided_slice %818 {offsets = [0, 32], sizes = [8, 32], strides = [1, 1]} : vector<8x128xf32> to vector<8x32xf32>
    %826 = arith.negf %825 : vector<8x32xf32>
    %827 = math.exp %826 : vector<8x32xf32>
    %cst_186 = arith.constant 1.000000e+00 : f32
    %828 = vector.broadcast %cst_186 : f32 to vector<8x32xf32>
    %829 = arith.addf %828, %827 : vector<8x32xf32>
    %830 = arith.divf %828, %829 : vector<8x32xf32>
    %831 = vector.extract_strided_slice %818 {offsets = [0, 64], sizes = [8, 32], strides = [1, 1]} : vector<8x128xf32> to vector<8x32xf32>
    %832 = math.tanh %831 : vector<8x32xf32>
    %833 = vector.extract_strided_slice %818 {offsets = [0, 96], sizes = [8, 32], strides = [1, 1]} : vector<8x128xf32> to vector<8x32xf32>
    %834 = arith.negf %833 : vector<8x32xf32>
    %835 = math.exp %834 : vector<8x32xf32>
    %cst_187 = arith.constant 1.000000e+00 : f32
    %836 = vector.broadcast %cst_187 : f32 to vector<8x32xf32>
    %837 = arith.addf %836, %835 : vector<8x32xf32>
    %838 = arith.divf %836, %837 : vector<8x32xf32>
    %839 = arith.mulf %830, %774 : vector<8x32xf32>
    %840 = arith.mulf %824, %832 : vector<8x32xf32>
    %841 = arith.addf %839, %840 : vector<8x32xf32>
    %842 = math.tanh %841 : vector<8x32xf32>
    %843 = arith.mulf %838, %842 : vector<8x32xf32>
    %844 = vector.broadcast %c1_i32_181 : i32 to vector<8x1xi32>
    %845 = arith.cmpi sgt, %0, %844 : vector<8x1xi32>
    %846 = vector.shape_cast %845 : vector<8x1xi1> to vector<8x1xi1>
    %847 = vector.broadcast %846 : vector<8x1xi1> to vector<8x32xi1>
    %848 = arith.select %847, %843, %771 : vector<8x32xi1>, vector<8x32xf32>
    %849 = vector.shape_cast %845 : vector<8x1xi1> to vector<8x1xi1>
    %850 = vector.broadcast %849 : vector<8x1xi1> to vector<8x32xi1>
    %851 = arith.select %850, %841, %774 : vector<8x32xi1>, vector<8x32xf32>
    %c7_i32_188 = arith.constant 7 : i32
    %852 = arith.subi %c7_i32_188, %c1_i32_181 : i32
    %c8_i32_189 = arith.constant 8 : i32
    %853 = arith.muli %852, %c8_i32_189 : i32
    %854 = arith.index_cast %853 : i32 to index
    %c128_190 = arith.constant 128 : index
    %855 = vector.load %arg14[%854, %c128_190] : memref<64x256xf32, #tpu.memory_space<vmem>>, vector<8x128xf32>
    %cst_191 = arith.constant dense<0.000000e+00> : vector<8x128xf32>
    %856 = tpu.matmul %810, %735, %cst_191 {dimension_numbers = #tpu.dot_dimension_numbers<[1], [0], [0], [1], [0, 0, 1, 1], [], []>} : vector<8x32xf32>, vector<32x128xf32>, vector<8x128xf32> -> vector<8x128xf32>
    %857 = arith.addf %855, %856 : vector<8x128xf32>
    %858 = vector.extract_strided_slice %857 {offsets = [0, 0], sizes = [8, 32], strides = [1, 1]} : vector<8x128xf32> to vector<8x32xf32>
    %859 = arith.negf %858 : vector<8x32xf32>
    %860 = math.exp %859 : vector<8x32xf32>
    %cst_192 = arith.constant 1.000000e+00 : f32
    %861 = vector.broadcast %cst_192 : f32 to vector<8x32xf32>
    %862 = arith.addf %861, %860 : vector<8x32xf32>
    %863 = arith.divf %861, %862 : vector<8x32xf32>
    %864 = vector.extract_strided_slice %857 {offsets = [0, 32], sizes = [8, 32], strides = [1, 1]} : vector<8x128xf32> to vector<8x32xf32>
    %865 = arith.negf %864 : vector<8x32xf32>
    %866 = math.exp %865 : vector<8x32xf32>
    %cst_193 = arith.constant 1.000000e+00 : f32
    %867 = vector.broadcast %cst_193 : f32 to vector<8x32xf32>
    %868 = arith.addf %867, %866 : vector<8x32xf32>
    %869 = arith.divf %867, %868 : vector<8x32xf32>
    %870 = vector.extract_strided_slice %857 {offsets = [0, 64], sizes = [8, 32], strides = [1, 1]} : vector<8x128xf32> to vector<8x32xf32>
    %871 = math.tanh %870 : vector<8x32xf32>
    %872 = vector.extract_strided_slice %857 {offsets = [0, 96], sizes = [8, 32], strides = [1, 1]} : vector<8x128xf32> to vector<8x32xf32>
    %873 = arith.negf %872 : vector<8x32xf32>
    %874 = math.exp %873 : vector<8x32xf32>
    %cst_194 = arith.constant 1.000000e+00 : f32
    %875 = vector.broadcast %cst_194 : f32 to vector<8x32xf32>
    %876 = arith.addf %875, %874 : vector<8x32xf32>
    %877 = arith.divf %875, %876 : vector<8x32xf32>
    %878 = arith.mulf %869, %813 : vector<8x32xf32>
    %879 = arith.mulf %863, %871 : vector<8x32xf32>
    %880 = arith.addf %878, %879 : vector<8x32xf32>
    %881 = math.tanh %880 : vector<8x32xf32>
    %882 = arith.mulf %877, %881 : vector<8x32xf32>
    %883 = vector.broadcast %852 : i32 to vector<8x1xi32>
    %884 = arith.cmpi sgt, %0, %883 : vector<8x1xi32>
    %885 = vector.shape_cast %884 : vector<8x1xi1> to vector<8x1xi1>
    %886 = vector.broadcast %885 : vector<8x1xi1> to vector<8x32xi1>
    %887 = arith.select %886, %882, %810 : vector<8x32xi1>, vector<8x32xf32>
    %888 = vector.shape_cast %884 : vector<8x1xi1> to vector<8x1xi1>
    %889 = vector.broadcast %888 : vector<8x1xi1> to vector<8x32xi1>
    %890 = arith.select %889, %880, %813 : vector<8x32xi1>, vector<8x32xf32>
    %c2_i32_195 = arith.constant 2 : i32
    %c8_i32_196 = arith.constant 8 : i32
    %891 = arith.muli %c2_i32_195, %c8_i32_196 : i32
    %892 = arith.index_cast %891 : i32 to index
    %c0_197 = arith.constant 0 : index
    %893 = vector.load %arg14[%892, %c0_197] : memref<64x256xf32, #tpu.memory_space<vmem>>, vector<8x128xf32>
    %cst_198 = arith.constant dense<0.000000e+00> : vector<8x128xf32>
    %894 = tpu.matmul %848, %734, %cst_198 {dimension_numbers = #tpu.dot_dimension_numbers<[1], [0], [0], [1], [0, 0, 1, 1], [], []>} : vector<8x32xf32>, vector<32x128xf32>, vector<8x128xf32> -> vector<8x128xf32>
    %895 = arith.addf %893, %894 : vector<8x128xf32>
    %896 = vector.extract_strided_slice %895 {offsets = [0, 0], sizes = [8, 32], strides = [1, 1]} : vector<8x128xf32> to vector<8x32xf32>
    %897 = arith.negf %896 : vector<8x32xf32>
    %898 = math.exp %897 : vector<8x32xf32>
    %cst_199 = arith.constant 1.000000e+00 : f32
    %899 = vector.broadcast %cst_199 : f32 to vector<8x32xf32>
    %900 = arith.addf %899, %898 : vector<8x32xf32>
    %901 = arith.divf %899, %900 : vector<8x32xf32>
    %902 = vector.extract_strided_slice %895 {offsets = [0, 32], sizes = [8, 32], strides = [1, 1]} : vector<8x128xf32> to vector<8x32xf32>
    %903 = arith.negf %902 : vector<8x32xf32>
    %904 = math.exp %903 : vector<8x32xf32>
    %cst_200 = arith.constant 1.000000e+00 : f32
    %905 = vector.broadcast %cst_200 : f32 to vector<8x32xf32>
    %906 = arith.addf %905, %904 : vector<8x32xf32>
    %907 = arith.divf %905, %906 : vector<8x32xf32>
    %908 = vector.extract_strided_slice %895 {offsets = [0, 64], sizes = [8, 32], strides = [1, 1]} : vector<8x128xf32> to vector<8x32xf32>
    %909 = math.tanh %908 : vector<8x32xf32>
    %910 = vector.extract_strided_slice %895 {offsets = [0, 96], sizes = [8, 32], strides = [1, 1]} : vector<8x128xf32> to vector<8x32xf32>
    %911 = arith.negf %910 : vector<8x32xf32>
    %912 = math.exp %911 : vector<8x32xf32>
    %cst_201 = arith.constant 1.000000e+00 : f32
    %913 = vector.broadcast %cst_201 : f32 to vector<8x32xf32>
    %914 = arith.addf %913, %912 : vector<8x32xf32>
    %915 = arith.divf %913, %914 : vector<8x32xf32>
    %916 = arith.mulf %907, %851 : vector<8x32xf32>
    %917 = arith.mulf %901, %909 : vector<8x32xf32>
    %918 = arith.addf %916, %917 : vector<8x32xf32>
    %919 = math.tanh %918 : vector<8x32xf32>
    %920 = arith.mulf %915, %919 : vector<8x32xf32>
    %921 = vector.broadcast %c2_i32_195 : i32 to vector<8x1xi32>
    %922 = arith.cmpi sgt, %0, %921 : vector<8x1xi32>
    %923 = vector.shape_cast %922 : vector<8x1xi1> to vector<8x1xi1>
    %924 = vector.broadcast %923 : vector<8x1xi1> to vector<8x32xi1>
    %925 = arith.select %924, %920, %848 : vector<8x32xi1>, vector<8x32xf32>
    %926 = vector.shape_cast %922 : vector<8x1xi1> to vector<8x1xi1>
    %927 = vector.broadcast %926 : vector<8x1xi1> to vector<8x32xi1>
    %928 = arith.select %927, %918, %851 : vector<8x32xi1>, vector<8x32xf32>
    %c7_i32_202 = arith.constant 7 : i32
    %929 = arith.subi %c7_i32_202, %c2_i32_195 : i32
    %c8_i32_203 = arith.constant 8 : i32
    %930 = arith.muli %929, %c8_i32_203 : i32
    %931 = arith.index_cast %930 : i32 to index
    %c128_204 = arith.constant 128 : index
    %932 = vector.load %arg14[%931, %c128_204] : memref<64x256xf32, #tpu.memory_space<vmem>>, vector<8x128xf32>
    %cst_205 = arith.constant dense<0.000000e+00> : vector<8x128xf32>
    %933 = tpu.matmul %887, %735, %cst_205 {dimension_numbers = #tpu.dot_dimension_numbers<[1], [0], [0], [1], [0, 0, 1, 1], [], []>} : vector<8x32xf32>, vector<32x128xf32>, vector<8x128xf32> -> vector<8x128xf32>
    %934 = arith.addf %932, %933 : vector<8x128xf32>
    %935 = vector.extract_strided_slice %934 {offsets = [0, 0], sizes = [8, 32], strides = [1, 1]} : vector<8x128xf32> to vector<8x32xf32>
    %936 = arith.negf %935 : vector<8x32xf32>
    %937 = math.exp %936 : vector<8x32xf32>
    %cst_206 = arith.constant 1.000000e+00 : f32
    %938 = vector.broadcast %cst_206 : f32 to vector<8x32xf32>
    %939 = arith.addf %938, %937 : vector<8x32xf32>
    %940 = arith.divf %938, %939 : vector<8x32xf32>
    %941 = vector.extract_strided_slice %934 {offsets = [0, 32], sizes = [8, 32], strides = [1, 1]} : vector<8x128xf32> to vector<8x32xf32>
    %942 = arith.negf %941 : vector<8x32xf32>
    %943 = math.exp %942 : vector<8x32xf32>
    %cst_207 = arith.constant 1.000000e+00 : f32
    %944 = vector.broadcast %cst_207 : f32 to vector<8x32xf32>
    %945 = arith.addf %944, %943 : vector<8x32xf32>
    %946 = arith.divf %944, %945 : vector<8x32xf32>
    %947 = vector.extract_strided_slice %934 {offsets = [0, 64], sizes = [8, 32], strides = [1, 1]} : vector<8x128xf32> to vector<8x32xf32>
    %948 = math.tanh %947 : vector<8x32xf32>
    %949 = vector.extract_strided_slice %934 {offsets = [0, 96], sizes = [8, 32], strides = [1, 1]} : vector<8x128xf32> to vector<8x32xf32>
    %950 = arith.negf %949 : vector<8x32xf32>
    %951 = math.exp %950 : vector<8x32xf32>
    %cst_208 = arith.constant 1.000000e+00 : f32
    %952 = vector.broadcast %cst_208 : f32 to vector<8x32xf32>
    %953 = arith.addf %952, %951 : vector<8x32xf32>
    %954 = arith.divf %952, %953 : vector<8x32xf32>
    %955 = arith.mulf %946, %890 : vector<8x32xf32>
    %956 = arith.mulf %940, %948 : vector<8x32xf32>
    %957 = arith.addf %955, %956 : vector<8x32xf32>
    %958 = math.tanh %957 : vector<8x32xf32>
    %959 = arith.mulf %954, %958 : vector<8x32xf32>
    %960 = vector.broadcast %929 : i32 to vector<8x1xi32>
    %961 = arith.cmpi sgt, %0, %960 : vector<8x1xi32>
    %962 = vector.shape_cast %961 : vector<8x1xi1> to vector<8x1xi1>
    %963 = vector.broadcast %962 : vector<8x1xi1> to vector<8x32xi1>
    %964 = arith.select %963, %959, %887 : vector<8x32xi1>, vector<8x32xf32>
    %965 = vector.shape_cast %961 : vector<8x1xi1> to vector<8x1xi1>
    %966 = vector.broadcast %965 : vector<8x1xi1> to vector<8x32xi1>
    %967 = arith.select %966, %957, %890 : vector<8x32xi1>, vector<8x32xf32>
    %c3_i32_209 = arith.constant 3 : i32
    %c8_i32_210 = arith.constant 8 : i32
    %968 = arith.muli %c3_i32_209, %c8_i32_210 : i32
    %969 = arith.index_cast %968 : i32 to index
    %c0_211 = arith.constant 0 : index
    %970 = vector.load %arg14[%969, %c0_211] : memref<64x256xf32, #tpu.memory_space<vmem>>, vector<8x128xf32>
    %cst_212 = arith.constant dense<0.000000e+00> : vector<8x128xf32>
    %971 = tpu.matmul %925, %734, %cst_212 {dimension_numbers = #tpu.dot_dimension_numbers<[1], [0], [0], [1], [0, 0, 1, 1], [], []>} : vector<8x32xf32>, vector<32x128xf32>, vector<8x128xf32> -> vector<8x128xf32>
    %972 = arith.addf %970, %971 : vector<8x128xf32>
    %973 = vector.extract_strided_slice %972 {offsets = [0, 0], sizes = [8, 32], strides = [1, 1]} : vector<8x128xf32> to vector<8x32xf32>
    %974 = arith.negf %973 : vector<8x32xf32>
    %975 = math.exp %974 : vector<8x32xf32>
    %cst_213 = arith.constant 1.000000e+00 : f32
    %976 = vector.broadcast %cst_213 : f32 to vector<8x32xf32>
    %977 = arith.addf %976, %975 : vector<8x32xf32>
    %978 = arith.divf %976, %977 : vector<8x32xf32>
    %979 = vector.extract_strided_slice %972 {offsets = [0, 32], sizes = [8, 32], strides = [1, 1]} : vector<8x128xf32> to vector<8x32xf32>
    %980 = arith.negf %979 : vector<8x32xf32>
    %981 = math.exp %980 : vector<8x32xf32>
    %cst_214 = arith.constant 1.000000e+00 : f32
    %982 = vector.broadcast %cst_214 : f32 to vector<8x32xf32>
    %983 = arith.addf %982, %981 : vector<8x32xf32>
    %984 = arith.divf %982, %983 : vector<8x32xf32>
    %985 = vector.extract_strided_slice %972 {offsets = [0, 64], sizes = [8, 32], strides = [1, 1]} : vector<8x128xf32> to vector<8x32xf32>
    %986 = math.tanh %985 : vector<8x32xf32>
    %987 = vector.extract_strided_slice %972 {offsets = [0, 96], sizes = [8, 32], strides = [1, 1]} : vector<8x128xf32> to vector<8x32xf32>
    %988 = arith.negf %987 : vector<8x32xf32>
    %989 = math.exp %988 : vector<8x32xf32>
    %cst_215 = arith.constant 1.000000e+00 : f32
    %990 = vector.broadcast %cst_215 : f32 to vector<8x32xf32>
    %991 = arith.addf %990, %989 : vector<8x32xf32>
    %992 = arith.divf %990, %991 : vector<8x32xf32>
    %993 = arith.mulf %984, %928 : vector<8x32xf32>
    %994 = arith.mulf %978, %986 : vector<8x32xf32>
    %995 = arith.addf %993, %994 : vector<8x32xf32>
    %996 = math.tanh %995 : vector<8x32xf32>
    %997 = arith.mulf %992, %996 : vector<8x32xf32>
    %998 = vector.broadcast %c3_i32_209 : i32 to vector<8x1xi32>
    %999 = arith.cmpi sgt, %0, %998 : vector<8x1xi32>
    %1000 = vector.shape_cast %999 : vector<8x1xi1> to vector<8x1xi1>
    %1001 = vector.broadcast %1000 : vector<8x1xi1> to vector<8x32xi1>
    %1002 = arith.select %1001, %997, %925 : vector<8x32xi1>, vector<8x32xf32>
    %1003 = vector.shape_cast %999 : vector<8x1xi1> to vector<8x1xi1>
    %1004 = vector.broadcast %1003 : vector<8x1xi1> to vector<8x32xi1>
    %1005 = arith.select %1004, %995, %928 : vector<8x32xi1>, vector<8x32xf32>
    %c7_i32_216 = arith.constant 7 : i32
    %1006 = arith.subi %c7_i32_216, %c3_i32_209 : i32
    %c8_i32_217 = arith.constant 8 : i32
    %1007 = arith.muli %1006, %c8_i32_217 : i32
    %1008 = arith.index_cast %1007 : i32 to index
    %c128_218 = arith.constant 128 : index
    %1009 = vector.load %arg14[%1008, %c128_218] : memref<64x256xf32, #tpu.memory_space<vmem>>, vector<8x128xf32>
    %cst_219 = arith.constant dense<0.000000e+00> : vector<8x128xf32>
    %1010 = tpu.matmul %964, %735, %cst_219 {dimension_numbers = #tpu.dot_dimension_numbers<[1], [0], [0], [1], [0, 0, 1, 1], [], []>} : vector<8x32xf32>, vector<32x128xf32>, vector<8x128xf32> -> vector<8x128xf32>
    %1011 = arith.addf %1009, %1010 : vector<8x128xf32>
    %1012 = vector.extract_strided_slice %1011 {offsets = [0, 0], sizes = [8, 32], strides = [1, 1]} : vector<8x128xf32> to vector<8x32xf32>
    %1013 = arith.negf %1012 : vector<8x32xf32>
    %1014 = math.exp %1013 : vector<8x32xf32>
    %cst_220 = arith.constant 1.000000e+00 : f32
    %1015 = vector.broadcast %cst_220 : f32 to vector<8x32xf32>
    %1016 = arith.addf %1015, %1014 : vector<8x32xf32>
    %1017 = arith.divf %1015, %1016 : vector<8x32xf32>
    %1018 = vector.extract_strided_slice %1011 {offsets = [0, 32], sizes = [8, 32], strides = [1, 1]} : vector<8x128xf32> to vector<8x32xf32>
    %1019 = arith.negf %1018 : vector<8x32xf32>
    %1020 = math.exp %1019 : vector<8x32xf32>
    %cst_221 = arith.constant 1.000000e+00 : f32
    %1021 = vector.broadcast %cst_221 : f32 to vector<8x32xf32>
    %1022 = arith.addf %1021, %1020 : vector<8x32xf32>
    %1023 = arith.divf %1021, %1022 : vector<8x32xf32>
    %1024 = vector.extract_strided_slice %1011 {offsets = [0, 64], sizes = [8, 32], strides = [1, 1]} : vector<8x128xf32> to vector<8x32xf32>
    %1025 = math.tanh %1024 : vector<8x32xf32>
    %1026 = vector.extract_strided_slice %1011 {offsets = [0, 96], sizes = [8, 32], strides = [1, 1]} : vector<8x128xf32> to vector<8x32xf32>
    %1027 = arith.negf %1026 : vector<8x32xf32>
    %1028 = math.exp %1027 : vector<8x32xf32>
    %cst_222 = arith.constant 1.000000e+00 : f32
    %1029 = vector.broadcast %cst_222 : f32 to vector<8x32xf32>
    %1030 = arith.addf %1029, %1028 : vector<8x32xf32>
    %1031 = arith.divf %1029, %1030 : vector<8x32xf32>
    %1032 = arith.mulf %1023, %967 : vector<8x32xf32>
    %1033 = arith.mulf %1017, %1025 : vector<8x32xf32>
    %1034 = arith.addf %1032, %1033 : vector<8x32xf32>
    %1035 = math.tanh %1034 : vector<8x32xf32>
    %1036 = arith.mulf %1031, %1035 : vector<8x32xf32>
    %1037 = vector.broadcast %1006 : i32 to vector<8x1xi32>
    %1038 = arith.cmpi sgt, %0, %1037 : vector<8x1xi32>
    %1039 = vector.shape_cast %1038 : vector<8x1xi1> to vector<8x1xi1>
    %1040 = vector.broadcast %1039 : vector<8x1xi1> to vector<8x32xi1>
    %1041 = arith.select %1040, %1036, %964 : vector<8x32xi1>, vector<8x32xf32>
    %1042 = vector.shape_cast %1038 : vector<8x1xi1> to vector<8x1xi1>
    %1043 = vector.broadcast %1042 : vector<8x1xi1> to vector<8x32xi1>
    %1044 = arith.select %1043, %1034, %967 : vector<8x32xi1>, vector<8x32xf32>
    %c4_i32_223 = arith.constant 4 : i32
    %c8_i32_224 = arith.constant 8 : i32
    %1045 = arith.muli %c4_i32_223, %c8_i32_224 : i32
    %1046 = arith.index_cast %1045 : i32 to index
    %c0_225 = arith.constant 0 : index
    %1047 = vector.load %arg14[%1046, %c0_225] : memref<64x256xf32, #tpu.memory_space<vmem>>, vector<8x128xf32>
    %cst_226 = arith.constant dense<0.000000e+00> : vector<8x128xf32>
    %1048 = tpu.matmul %1002, %734, %cst_226 {dimension_numbers = #tpu.dot_dimension_numbers<[1], [0], [0], [1], [0, 0, 1, 1], [], []>} : vector<8x32xf32>, vector<32x128xf32>, vector<8x128xf32> -> vector<8x128xf32>
    %1049 = arith.addf %1047, %1048 : vector<8x128xf32>
    %1050 = vector.extract_strided_slice %1049 {offsets = [0, 0], sizes = [8, 32], strides = [1, 1]} : vector<8x128xf32> to vector<8x32xf32>
    %1051 = arith.negf %1050 : vector<8x32xf32>
    %1052 = math.exp %1051 : vector<8x32xf32>
    %cst_227 = arith.constant 1.000000e+00 : f32
    %1053 = vector.broadcast %cst_227 : f32 to vector<8x32xf32>
    %1054 = arith.addf %1053, %1052 : vector<8x32xf32>
    %1055 = arith.divf %1053, %1054 : vector<8x32xf32>
    %1056 = vector.extract_strided_slice %1049 {offsets = [0, 32], sizes = [8, 32], strides = [1, 1]} : vector<8x128xf32> to vector<8x32xf32>
    %1057 = arith.negf %1056 : vector<8x32xf32>
    %1058 = math.exp %1057 : vector<8x32xf32>
    %cst_228 = arith.constant 1.000000e+00 : f32
    %1059 = vector.broadcast %cst_228 : f32 to vector<8x32xf32>
    %1060 = arith.addf %1059, %1058 : vector<8x32xf32>
    %1061 = arith.divf %1059, %1060 : vector<8x32xf32>
    %1062 = vector.extract_strided_slice %1049 {offsets = [0, 64], sizes = [8, 32], strides = [1, 1]} : vector<8x128xf32> to vector<8x32xf32>
    %1063 = math.tanh %1062 : vector<8x32xf32>
    %1064 = vector.extract_strided_slice %1049 {offsets = [0, 96], sizes = [8, 32], strides = [1, 1]} : vector<8x128xf32> to vector<8x32xf32>
    %1065 = arith.negf %1064 : vector<8x32xf32>
    %1066 = math.exp %1065 : vector<8x32xf32>
    %cst_229 = arith.constant 1.000000e+00 : f32
    %1067 = vector.broadcast %cst_229 : f32 to vector<8x32xf32>
    %1068 = arith.addf %1067, %1066 : vector<8x32xf32>
    %1069 = arith.divf %1067, %1068 : vector<8x32xf32>
    %1070 = arith.mulf %1061, %1005 : vector<8x32xf32>
    %1071 = arith.mulf %1055, %1063 : vector<8x32xf32>
    %1072 = arith.addf %1070, %1071 : vector<8x32xf32>
    %1073 = math.tanh %1072 : vector<8x32xf32>
    %1074 = arith.mulf %1069, %1073 : vector<8x32xf32>
    %1075 = vector.broadcast %c4_i32_223 : i32 to vector<8x1xi32>
    %1076 = arith.cmpi sgt, %0, %1075 : vector<8x1xi32>
    %1077 = vector.shape_cast %1076 : vector<8x1xi1> to vector<8x1xi1>
    %1078 = vector.broadcast %1077 : vector<8x1xi1> to vector<8x32xi1>
    %1079 = arith.select %1078, %1074, %1002 : vector<8x32xi1>, vector<8x32xf32>
    %1080 = vector.shape_cast %1076 : vector<8x1xi1> to vector<8x1xi1>
    %1081 = vector.broadcast %1080 : vector<8x1xi1> to vector<8x32xi1>
    %1082 = arith.select %1081, %1072, %1005 : vector<8x32xi1>, vector<8x32xf32>
    %c7_i32_230 = arith.constant 7 : i32
    %1083 = arith.subi %c7_i32_230, %c4_i32_223 : i32
    %c8_i32_231 = arith.constant 8 : i32
    %1084 = arith.muli %1083, %c8_i32_231 : i32
    %1085 = arith.index_cast %1084 : i32 to index
    %c128_232 = arith.constant 128 : index
    %1086 = vector.load %arg14[%1085, %c128_232] : memref<64x256xf32, #tpu.memory_space<vmem>>, vector<8x128xf32>
    %cst_233 = arith.constant dense<0.000000e+00> : vector<8x128xf32>
    %1087 = tpu.matmul %1041, %735, %cst_233 {dimension_numbers = #tpu.dot_dimension_numbers<[1], [0], [0], [1], [0, 0, 1, 1], [], []>} : vector<8x32xf32>, vector<32x128xf32>, vector<8x128xf32> -> vector<8x128xf32>
    %1088 = arith.addf %1086, %1087 : vector<8x128xf32>
    %1089 = vector.extract_strided_slice %1088 {offsets = [0, 0], sizes = [8, 32], strides = [1, 1]} : vector<8x128xf32> to vector<8x32xf32>
    %1090 = arith.negf %1089 : vector<8x32xf32>
    %1091 = math.exp %1090 : vector<8x32xf32>
    %cst_234 = arith.constant 1.000000e+00 : f32
    %1092 = vector.broadcast %cst_234 : f32 to vector<8x32xf32>
    %1093 = arith.addf %1092, %1091 : vector<8x32xf32>
    %1094 = arith.divf %1092, %1093 : vector<8x32xf32>
    %1095 = vector.extract_strided_slice %1088 {offsets = [0, 32], sizes = [8, 32], strides = [1, 1]} : vector<8x128xf32> to vector<8x32xf32>
    %1096 = arith.negf %1095 : vector<8x32xf32>
    %1097 = math.exp %1096 : vector<8x32xf32>
    %cst_235 = arith.constant 1.000000e+00 : f32
    %1098 = vector.broadcast %cst_235 : f32 to vector<8x32xf32>
    %1099 = arith.addf %1098, %1097 : vector<8x32xf32>
    %1100 = arith.divf %1098, %1099 : vector<8x32xf32>
    %1101 = vector.extract_strided_slice %1088 {offsets = [0, 64], sizes = [8, 32], strides = [1, 1]} : vector<8x128xf32> to vector<8x32xf32>
    %1102 = math.tanh %1101 : vector<8x32xf32>
    %1103 = vector.extract_strided_slice %1088 {offsets = [0, 96], sizes = [8, 32], strides = [1, 1]} : vector<8x128xf32> to vector<8x32xf32>
    %1104 = arith.negf %1103 : vector<8x32xf32>
    %1105 = math.exp %1104 : vector<8x32xf32>
    %cst_236 = arith.constant 1.000000e+00 : f32
    %1106 = vector.broadcast %cst_236 : f32 to vector<8x32xf32>
    %1107 = arith.addf %1106, %1105 : vector<8x32xf32>
    %1108 = arith.divf %1106, %1107 : vector<8x32xf32>
    %1109 = arith.mulf %1100, %1044 : vector<8x32xf32>
    %1110 = arith.mulf %1094, %1102 : vector<8x32xf32>
    %1111 = arith.addf %1109, %1110 : vector<8x32xf32>
    %1112 = math.tanh %1111 : vector<8x32xf32>
    %1113 = arith.mulf %1108, %1112 : vector<8x32xf32>
    %1114 = vector.broadcast %1083 : i32 to vector<8x1xi32>
    %1115 = arith.cmpi sgt, %0, %1114 : vector<8x1xi32>
    %1116 = vector.shape_cast %1115 : vector<8x1xi1> to vector<8x1xi1>
    %1117 = vector.broadcast %1116 : vector<8x1xi1> to vector<8x32xi1>
    %1118 = arith.select %1117, %1113, %1041 : vector<8x32xi1>, vector<8x32xf32>
    %1119 = vector.shape_cast %1115 : vector<8x1xi1> to vector<8x1xi1>
    %1120 = vector.broadcast %1119 : vector<8x1xi1> to vector<8x32xi1>
    %1121 = arith.select %1120, %1111, %1044 : vector<8x32xi1>, vector<8x32xf32>
    %c5_i32_237 = arith.constant 5 : i32
    %c8_i32_238 = arith.constant 8 : i32
    %1122 = arith.muli %c5_i32_237, %c8_i32_238 : i32
    %1123 = arith.index_cast %1122 : i32 to index
    %c0_239 = arith.constant 0 : index
    %1124 = vector.load %arg14[%1123, %c0_239] : memref<64x256xf32, #tpu.memory_space<vmem>>, vector<8x128xf32>
    %cst_240 = arith.constant dense<0.000000e+00> : vector<8x128xf32>
    %1125 = tpu.matmul %1079, %734, %cst_240 {dimension_numbers = #tpu.dot_dimension_numbers<[1], [0], [0], [1], [0, 0, 1, 1], [], []>} : vector<8x32xf32>, vector<32x128xf32>, vector<8x128xf32> -> vector<8x128xf32>
    %1126 = arith.addf %1124, %1125 : vector<8x128xf32>
    %1127 = vector.extract_strided_slice %1126 {offsets = [0, 0], sizes = [8, 32], strides = [1, 1]} : vector<8x128xf32> to vector<8x32xf32>
    %1128 = arith.negf %1127 : vector<8x32xf32>
    %1129 = math.exp %1128 : vector<8x32xf32>
    %cst_241 = arith.constant 1.000000e+00 : f32
    %1130 = vector.broadcast %cst_241 : f32 to vector<8x32xf32>
    %1131 = arith.addf %1130, %1129 : vector<8x32xf32>
    %1132 = arith.divf %1130, %1131 : vector<8x32xf32>
    %1133 = vector.extract_strided_slice %1126 {offsets = [0, 32], sizes = [8, 32], strides = [1, 1]} : vector<8x128xf32> to vector<8x32xf32>
    %1134 = arith.negf %1133 : vector<8x32xf32>
    %1135 = math.exp %1134 : vector<8x32xf32>
    %cst_242 = arith.constant 1.000000e+00 : f32
    %1136 = vector.broadcast %cst_242 : f32 to vector<8x32xf32>
    %1137 = arith.addf %1136, %1135 : vector<8x32xf32>
    %1138 = arith.divf %1136, %1137 : vector<8x32xf32>
    %1139 = vector.extract_strided_slice %1126 {offsets = [0, 64], sizes = [8, 32], strides = [1, 1]} : vector<8x128xf32> to vector<8x32xf32>
    %1140 = math.tanh %1139 : vector<8x32xf32>
    %1141 = vector.extract_strided_slice %1126 {offsets = [0, 96], sizes = [8, 32], strides = [1, 1]} : vector<8x128xf32> to vector<8x32xf32>
    %1142 = arith.negf %1141 : vector<8x32xf32>
    %1143 = math.exp %1142 : vector<8x32xf32>
    %cst_243 = arith.constant 1.000000e+00 : f32
    %1144 = vector.broadcast %cst_243 : f32 to vector<8x32xf32>
    %1145 = arith.addf %1144, %1143 : vector<8x32xf32>
    %1146 = arith.divf %1144, %1145 : vector<8x32xf32>
    %1147 = arith.mulf %1138, %1082 : vector<8x32xf32>
    %1148 = arith.mulf %1132, %1140 : vector<8x32xf32>
    %1149 = arith.addf %1147, %1148 : vector<8x32xf32>
    %1150 = math.tanh %1149 : vector<8x32xf32>
    %1151 = arith.mulf %1146, %1150 : vector<8x32xf32>
    %1152 = vector.broadcast %c5_i32_237 : i32 to vector<8x1xi32>
    %1153 = arith.cmpi sgt, %0, %1152 : vector<8x1xi32>
    %1154 = vector.shape_cast %1153 : vector<8x1xi1> to vector<8x1xi1>
    %1155 = vector.broadcast %1154 : vector<8x1xi1> to vector<8x32xi1>
    %1156 = arith.select %1155, %1151, %1079 : vector<8x32xi1>, vector<8x32xf32>
    %1157 = vector.shape_cast %1153 : vector<8x1xi1> to vector<8x1xi1>
    %1158 = vector.broadcast %1157 : vector<8x1xi1> to vector<8x32xi1>
    %1159 = arith.select %1158, %1149, %1082 : vector<8x32xi1>, vector<8x32xf32>
    %c7_i32_244 = arith.constant 7 : i32
    %1160 = arith.subi %c7_i32_244, %c5_i32_237 : i32
    %c8_i32_245 = arith.constant 8 : i32
    %1161 = arith.muli %1160, %c8_i32_245 : i32
    %1162 = arith.index_cast %1161 : i32 to index
    %c128_246 = arith.constant 128 : index
    %1163 = vector.load %arg14[%1162, %c128_246] : memref<64x256xf32, #tpu.memory_space<vmem>>, vector<8x128xf32>
    %cst_247 = arith.constant dense<0.000000e+00> : vector<8x128xf32>
    %1164 = tpu.matmul %1118, %735, %cst_247 {dimension_numbers = #tpu.dot_dimension_numbers<[1], [0], [0], [1], [0, 0, 1, 1], [], []>} : vector<8x32xf32>, vector<32x128xf32>, vector<8x128xf32> -> vector<8x128xf32>
    %1165 = arith.addf %1163, %1164 : vector<8x128xf32>
    %1166 = vector.extract_strided_slice %1165 {offsets = [0, 0], sizes = [8, 32], strides = [1, 1]} : vector<8x128xf32> to vector<8x32xf32>
    %1167 = arith.negf %1166 : vector<8x32xf32>
    %1168 = math.exp %1167 : vector<8x32xf32>
    %cst_248 = arith.constant 1.000000e+00 : f32
    %1169 = vector.broadcast %cst_248 : f32 to vector<8x32xf32>
    %1170 = arith.addf %1169, %1168 : vector<8x32xf32>
    %1171 = arith.divf %1169, %1170 : vector<8x32xf32>
    %1172 = vector.extract_strided_slice %1165 {offsets = [0, 32], sizes = [8, 32], strides = [1, 1]} : vector<8x128xf32> to vector<8x32xf32>
    %1173 = arith.negf %1172 : vector<8x32xf32>
    %1174 = math.exp %1173 : vector<8x32xf32>
    %cst_249 = arith.constant 1.000000e+00 : f32
    %1175 = vector.broadcast %cst_249 : f32 to vector<8x32xf32>
    %1176 = arith.addf %1175, %1174 : vector<8x32xf32>
    %1177 = arith.divf %1175, %1176 : vector<8x32xf32>
    %1178 = vector.extract_strided_slice %1165 {offsets = [0, 64], sizes = [8, 32], strides = [1, 1]} : vector<8x128xf32> to vector<8x32xf32>
    %1179 = math.tanh %1178 : vector<8x32xf32>
    %1180 = vector.extract_strided_slice %1165 {offsets = [0, 96], sizes = [8, 32], strides = [1, 1]} : vector<8x128xf32> to vector<8x32xf32>
    %1181 = arith.negf %1180 : vector<8x32xf32>
    %1182 = math.exp %1181 : vector<8x32xf32>
    %cst_250 = arith.constant 1.000000e+00 : f32
    %1183 = vector.broadcast %cst_250 : f32 to vector<8x32xf32>
    %1184 = arith.addf %1183, %1182 : vector<8x32xf32>
    %1185 = arith.divf %1183, %1184 : vector<8x32xf32>
    %1186 = arith.mulf %1177, %1121 : vector<8x32xf32>
    %1187 = arith.mulf %1171, %1179 : vector<8x32xf32>
    %1188 = arith.addf %1186, %1187 : vector<8x32xf32>
    %1189 = math.tanh %1188 : vector<8x32xf32>
    %1190 = arith.mulf %1185, %1189 : vector<8x32xf32>
    %1191 = vector.broadcast %1160 : i32 to vector<8x1xi32>
    %1192 = arith.cmpi sgt, %0, %1191 : vector<8x1xi32>
    %1193 = vector.shape_cast %1192 : vector<8x1xi1> to vector<8x1xi1>
    %1194 = vector.broadcast %1193 : vector<8x1xi1> to vector<8x32xi1>
    %1195 = arith.select %1194, %1190, %1118 : vector<8x32xi1>, vector<8x32xf32>
    %1196 = vector.shape_cast %1192 : vector<8x1xi1> to vector<8x1xi1>
    %1197 = vector.broadcast %1196 : vector<8x1xi1> to vector<8x32xi1>
    %1198 = arith.select %1197, %1188, %1121 : vector<8x32xi1>, vector<8x32xf32>
    %c6_i32_251 = arith.constant 6 : i32
    %c8_i32_252 = arith.constant 8 : i32
    %1199 = arith.muli %c6_i32_251, %c8_i32_252 : i32
    %1200 = arith.index_cast %1199 : i32 to index
    %c0_253 = arith.constant 0 : index
    %1201 = vector.load %arg14[%1200, %c0_253] : memref<64x256xf32, #tpu.memory_space<vmem>>, vector<8x128xf32>
    %cst_254 = arith.constant dense<0.000000e+00> : vector<8x128xf32>
    %1202 = tpu.matmul %1156, %734, %cst_254 {dimension_numbers = #tpu.dot_dimension_numbers<[1], [0], [0], [1], [0, 0, 1, 1], [], []>} : vector<8x32xf32>, vector<32x128xf32>, vector<8x128xf32> -> vector<8x128xf32>
    %1203 = arith.addf %1201, %1202 : vector<8x128xf32>
    %1204 = vector.extract_strided_slice %1203 {offsets = [0, 0], sizes = [8, 32], strides = [1, 1]} : vector<8x128xf32> to vector<8x32xf32>
    %1205 = arith.negf %1204 : vector<8x32xf32>
    %1206 = math.exp %1205 : vector<8x32xf32>
    %cst_255 = arith.constant 1.000000e+00 : f32
    %1207 = vector.broadcast %cst_255 : f32 to vector<8x32xf32>
    %1208 = arith.addf %1207, %1206 : vector<8x32xf32>
    %1209 = arith.divf %1207, %1208 : vector<8x32xf32>
    %1210 = vector.extract_strided_slice %1203 {offsets = [0, 32], sizes = [8, 32], strides = [1, 1]} : vector<8x128xf32> to vector<8x32xf32>
    %1211 = arith.negf %1210 : vector<8x32xf32>
    %1212 = math.exp %1211 : vector<8x32xf32>
    %cst_256 = arith.constant 1.000000e+00 : f32
    %1213 = vector.broadcast %cst_256 : f32 to vector<8x32xf32>
    %1214 = arith.addf %1213, %1212 : vector<8x32xf32>
    %1215 = arith.divf %1213, %1214 : vector<8x32xf32>
    %1216 = vector.extract_strided_slice %1203 {offsets = [0, 64], sizes = [8, 32], strides = [1, 1]} : vector<8x128xf32> to vector<8x32xf32>
    %1217 = math.tanh %1216 : vector<8x32xf32>
    %1218 = vector.extract_strided_slice %1203 {offsets = [0, 96], sizes = [8, 32], strides = [1, 1]} : vector<8x128xf32> to vector<8x32xf32>
    %1219 = arith.negf %1218 : vector<8x32xf32>
    %1220 = math.exp %1219 : vector<8x32xf32>
    %cst_257 = arith.constant 1.000000e+00 : f32
    %1221 = vector.broadcast %cst_257 : f32 to vector<8x32xf32>
    %1222 = arith.addf %1221, %1220 : vector<8x32xf32>
    %1223 = arith.divf %1221, %1222 : vector<8x32xf32>
    %1224 = arith.mulf %1215, %1159 : vector<8x32xf32>
    %1225 = arith.mulf %1209, %1217 : vector<8x32xf32>
    %1226 = arith.addf %1224, %1225 : vector<8x32xf32>
    %1227 = math.tanh %1226 : vector<8x32xf32>
    %1228 = arith.mulf %1223, %1227 : vector<8x32xf32>
    %1229 = vector.broadcast %c6_i32_251 : i32 to vector<8x1xi32>
    %1230 = arith.cmpi sgt, %0, %1229 : vector<8x1xi32>
    %1231 = vector.shape_cast %1230 : vector<8x1xi1> to vector<8x1xi1>
    %1232 = vector.broadcast %1231 : vector<8x1xi1> to vector<8x32xi1>
    %1233 = arith.select %1232, %1228, %1156 : vector<8x32xi1>, vector<8x32xf32>
    %1234 = vector.shape_cast %1230 : vector<8x1xi1> to vector<8x1xi1>
    %1235 = vector.broadcast %1234 : vector<8x1xi1> to vector<8x32xi1>
    %1236 = arith.select %1235, %1226, %1159 : vector<8x32xi1>, vector<8x32xf32>
    %c7_i32_258 = arith.constant 7 : i32
    %1237 = arith.subi %c7_i32_258, %c6_i32_251 : i32
    %c8_i32_259 = arith.constant 8 : i32
    %1238 = arith.muli %1237, %c8_i32_259 : i32
    %1239 = arith.index_cast %1238 : i32 to index
    %c128_260 = arith.constant 128 : index
    %1240 = vector.load %arg14[%1239, %c128_260] : memref<64x256xf32, #tpu.memory_space<vmem>>, vector<8x128xf32>
    %cst_261 = arith.constant dense<0.000000e+00> : vector<8x128xf32>
    %1241 = tpu.matmul %1195, %735, %cst_261 {dimension_numbers = #tpu.dot_dimension_numbers<[1], [0], [0], [1], [0, 0, 1, 1], [], []>} : vector<8x32xf32>, vector<32x128xf32>, vector<8x128xf32> -> vector<8x128xf32>
    %1242 = arith.addf %1240, %1241 : vector<8x128xf32>
    %1243 = vector.extract_strided_slice %1242 {offsets = [0, 0], sizes = [8, 32], strides = [1, 1]} : vector<8x128xf32> to vector<8x32xf32>
    %1244 = arith.negf %1243 : vector<8x32xf32>
    %1245 = math.exp %1244 : vector<8x32xf32>
    %cst_262 = arith.constant 1.000000e+00 : f32
    %1246 = vector.broadcast %cst_262 : f32 to vector<8x32xf32>
    %1247 = arith.addf %1246, %1245 : vector<8x32xf32>
    %1248 = arith.divf %1246, %1247 : vector<8x32xf32>
    %1249 = vector.extract_strided_slice %1242 {offsets = [0, 32], sizes = [8, 32], strides = [1, 1]} : vector<8x128xf32> to vector<8x32xf32>
    %1250 = arith.negf %1249 : vector<8x32xf32>
    %1251 = math.exp %1250 : vector<8x32xf32>
    %cst_263 = arith.constant 1.000000e+00 : f32
    %1252 = vector.broadcast %cst_263 : f32 to vector<8x32xf32>
    %1253 = arith.addf %1252, %1251 : vector<8x32xf32>
    %1254 = arith.divf %1252, %1253 : vector<8x32xf32>
    %1255 = vector.extract_strided_slice %1242 {offsets = [0, 64], sizes = [8, 32], strides = [1, 1]} : vector<8x128xf32> to vector<8x32xf32>
    %1256 = math.tanh %1255 : vector<8x32xf32>
    %1257 = vector.extract_strided_slice %1242 {offsets = [0, 96], sizes = [8, 32], strides = [1, 1]} : vector<8x128xf32> to vector<8x32xf32>
    %1258 = arith.negf %1257 : vector<8x32xf32>
    %1259 = math.exp %1258 : vector<8x32xf32>
    %cst_264 = arith.constant 1.000000e+00 : f32
    %1260 = vector.broadcast %cst_264 : f32 to vector<8x32xf32>
    %1261 = arith.addf %1260, %1259 : vector<8x32xf32>
    %1262 = arith.divf %1260, %1261 : vector<8x32xf32>
    %1263 = arith.mulf %1254, %1198 : vector<8x32xf32>
    %1264 = arith.mulf %1248, %1256 : vector<8x32xf32>
    %1265 = arith.addf %1263, %1264 : vector<8x32xf32>
    %1266 = math.tanh %1265 : vector<8x32xf32>
    %1267 = arith.mulf %1262, %1266 : vector<8x32xf32>
    %1268 = vector.broadcast %1237 : i32 to vector<8x1xi32>
    %1269 = arith.cmpi sgt, %0, %1268 : vector<8x1xi32>
    %1270 = vector.shape_cast %1269 : vector<8x1xi1> to vector<8x1xi1>
    %1271 = vector.broadcast %1270 : vector<8x1xi1> to vector<8x32xi1>
    %1272 = arith.select %1271, %1267, %1195 : vector<8x32xi1>, vector<8x32xf32>
    %1273 = vector.shape_cast %1269 : vector<8x1xi1> to vector<8x1xi1>
    %1274 = vector.broadcast %1273 : vector<8x1xi1> to vector<8x32xi1>
    %1275 = arith.select %1274, %1265, %1198 : vector<8x32xi1>, vector<8x32xf32>
    %c7_i32_265 = arith.constant 7 : i32
    %c8_i32_266 = arith.constant 8 : i32
    %1276 = arith.muli %c7_i32_265, %c8_i32_266 : i32
    %1277 = arith.index_cast %1276 : i32 to index
    %c0_267 = arith.constant 0 : index
    %1278 = vector.load %arg14[%1277, %c0_267] : memref<64x256xf32, #tpu.memory_space<vmem>>, vector<8x128xf32>
    %cst_268 = arith.constant dense<0.000000e+00> : vector<8x128xf32>
    %1279 = tpu.matmul %1233, %734, %cst_268 {dimension_numbers = #tpu.dot_dimension_numbers<[1], [0], [0], [1], [0, 0, 1, 1], [], []>} : vector<8x32xf32>, vector<32x128xf32>, vector<8x128xf32> -> vector<8x128xf32>
    %1280 = arith.addf %1278, %1279 : vector<8x128xf32>
    %1281 = vector.extract_strided_slice %1280 {offsets = [0, 0], sizes = [8, 32], strides = [1, 1]} : vector<8x128xf32> to vector<8x32xf32>
    %1282 = arith.negf %1281 : vector<8x32xf32>
    %1283 = math.exp %1282 : vector<8x32xf32>
    %cst_269 = arith.constant 1.000000e+00 : f32
    %1284 = vector.broadcast %cst_269 : f32 to vector<8x32xf32>
    %1285 = arith.addf %1284, %1283 : vector<8x32xf32>
    %1286 = arith.divf %1284, %1285 : vector<8x32xf32>
    %1287 = vector.extract_strided_slice %1280 {offsets = [0, 32], sizes = [8, 32], strides = [1, 1]} : vector<8x128xf32> to vector<8x32xf32>
    %1288 = arith.negf %1287 : vector<8x32xf32>
    %1289 = math.exp %1288 : vector<8x32xf32>
    %cst_270 = arith.constant 1.000000e+00 : f32
    %1290 = vector.broadcast %cst_270 : f32 to vector<8x32xf32>
    %1291 = arith.addf %1290, %1289 : vector<8x32xf32>
    %1292 = arith.divf %1290, %1291 : vector<8x32xf32>
    %1293 = vector.extract_strided_slice %1280 {offsets = [0, 64], sizes = [8, 32], strides = [1, 1]} : vector<8x128xf32> to vector<8x32xf32>
    %1294 = math.tanh %1293 : vector<8x32xf32>
    %1295 = vector.extract_strided_slice %1280 {offsets = [0, 96], sizes = [8, 32], strides = [1, 1]} : vector<8x128xf32> to vector<8x32xf32>
    %1296 = arith.negf %1295 : vector<8x32xf32>
    %1297 = math.exp %1296 : vector<8x32xf32>
    %cst_271 = arith.constant 1.000000e+00 : f32
    %1298 = vector.broadcast %cst_271 : f32 to vector<8x32xf32>
    %1299 = arith.addf %1298, %1297 : vector<8x32xf32>
    %1300 = arith.divf %1298, %1299 : vector<8x32xf32>
    %1301 = arith.mulf %1292, %1236 : vector<8x32xf32>
    %1302 = arith.mulf %1286, %1294 : vector<8x32xf32>
    %1303 = arith.addf %1301, %1302 : vector<8x32xf32>
    %1304 = math.tanh %1303 : vector<8x32xf32>
    %1305 = arith.mulf %1300, %1304 : vector<8x32xf32>
    %1306 = vector.broadcast %c7_i32_265 : i32 to vector<8x1xi32>
    %1307 = arith.cmpi sgt, %0, %1306 : vector<8x1xi32>
    %1308 = vector.shape_cast %1307 : vector<8x1xi1> to vector<8x1xi1>
    %1309 = vector.broadcast %1308 : vector<8x1xi1> to vector<8x32xi1>
    %1310 = arith.select %1309, %1305, %1233 : vector<8x32xi1>, vector<8x32xf32>
    %1311 = vector.shape_cast %1307 : vector<8x1xi1> to vector<8x1xi1>
    %1312 = vector.broadcast %1311 : vector<8x1xi1> to vector<8x32xi1>
    %1313 = arith.select %1312, %1303, %1236 : vector<8x32xi1>, vector<8x32xf32>
    %c7_i32_272 = arith.constant 7 : i32
    %1314 = arith.subi %c7_i32_272, %c7_i32_265 : i32
    %c8_i32_273 = arith.constant 8 : i32
    %1315 = arith.muli %1314, %c8_i32_273 : i32
    %1316 = arith.index_cast %1315 : i32 to index
    %c128_274 = arith.constant 128 : index
    %1317 = vector.load %arg14[%1316, %c128_274] : memref<64x256xf32, #tpu.memory_space<vmem>>, vector<8x128xf32>
    %cst_275 = arith.constant dense<0.000000e+00> : vector<8x128xf32>
    %1318 = tpu.matmul %1272, %735, %cst_275 {dimension_numbers = #tpu.dot_dimension_numbers<[1], [0], [0], [1], [0, 0, 1, 1], [], []>} : vector<8x32xf32>, vector<32x128xf32>, vector<8x128xf32> -> vector<8x128xf32>
    %1319 = arith.addf %1317, %1318 : vector<8x128xf32>
    %1320 = vector.extract_strided_slice %1319 {offsets = [0, 0], sizes = [8, 32], strides = [1, 1]} : vector<8x128xf32> to vector<8x32xf32>
    %1321 = arith.negf %1320 : vector<8x32xf32>
    %1322 = math.exp %1321 : vector<8x32xf32>
    %cst_276 = arith.constant 1.000000e+00 : f32
    %1323 = vector.broadcast %cst_276 : f32 to vector<8x32xf32>
    %1324 = arith.addf %1323, %1322 : vector<8x32xf32>
    %1325 = arith.divf %1323, %1324 : vector<8x32xf32>
    %1326 = vector.extract_strided_slice %1319 {offsets = [0, 32], sizes = [8, 32], strides = [1, 1]} : vector<8x128xf32> to vector<8x32xf32>
    %1327 = arith.negf %1326 : vector<8x32xf32>
    %1328 = math.exp %1327 : vector<8x32xf32>
    %cst_277 = arith.constant 1.000000e+00 : f32
    %1329 = vector.broadcast %cst_277 : f32 to vector<8x32xf32>
    %1330 = arith.addf %1329, %1328 : vector<8x32xf32>
    %1331 = arith.divf %1329, %1330 : vector<8x32xf32>
    %1332 = vector.extract_strided_slice %1319 {offsets = [0, 64], sizes = [8, 32], strides = [1, 1]} : vector<8x128xf32> to vector<8x32xf32>
    %1333 = math.tanh %1332 : vector<8x32xf32>
    %1334 = vector.extract_strided_slice %1319 {offsets = [0, 96], sizes = [8, 32], strides = [1, 1]} : vector<8x128xf32> to vector<8x32xf32>
    %1335 = arith.negf %1334 : vector<8x32xf32>
    %1336 = math.exp %1335 : vector<8x32xf32>
    %cst_278 = arith.constant 1.000000e+00 : f32
    %1337 = vector.broadcast %cst_278 : f32 to vector<8x32xf32>
    %1338 = arith.addf %1337, %1336 : vector<8x32xf32>
    %1339 = arith.divf %1337, %1338 : vector<8x32xf32>
    %1340 = arith.mulf %1331, %1275 : vector<8x32xf32>
    %1341 = arith.mulf %1325, %1333 : vector<8x32xf32>
    %1342 = arith.addf %1340, %1341 : vector<8x32xf32>
    %1343 = math.tanh %1342 : vector<8x32xf32>
    %1344 = arith.mulf %1339, %1343 : vector<8x32xf32>
    %1345 = vector.broadcast %1314 : i32 to vector<8x1xi32>
    %1346 = arith.cmpi sgt, %0, %1345 : vector<8x1xi32>
    %1347 = vector.shape_cast %1346 : vector<8x1xi1> to vector<8x1xi1>
    %1348 = vector.broadcast %1347 : vector<8x1xi1> to vector<8x32xi1>
    %1349 = arith.select %1348, %1344, %1272 : vector<8x32xi1>, vector<8x32xf32>
    %1350 = vector.shape_cast %1346 : vector<8x1xi1> to vector<8x1xi1>
    %1351 = vector.broadcast %1350 : vector<8x1xi1> to vector<8x32xi1>
    %1352 = arith.select %1351, %1342, %1275 : vector<8x32xi1>, vector<8x32xf32>
    %c8_i32_279 = arith.constant 8 : i32
    %c0_280 = arith.constant 0 : index
    %c0_281 = arith.constant 0 : index
    %1353 = vector.load %arg10[%c0_280, %c0_281] : memref<32x5xf32, #tpu.memory_space<vmem>>, vector<32x5xf32>
    %cst_282 = arith.constant dense<0.000000e+00> : vector<8x5xf32>
    %1354 = tpu.matmul %1310, %1353, %cst_282 {dimension_numbers = #tpu.dot_dimension_numbers<[1], [0], [0], [1], [0, 0, 1, 1], [], []>} : vector<8x32xf32>, vector<32x5xf32>, vector<8x5xf32> -> vector<8x5xf32>
    %c0_283 = arith.constant 0 : index
    %c0_284 = arith.constant 0 : index
    %1355 = vector.load %arg11[%c0_283, %c0_284] : memref<32x5xf32, #tpu.memory_space<vmem>>, vector<32x5xf32>
    %cst_285 = arith.constant dense<0.000000e+00> : vector<8x5xf32>
    %1356 = tpu.matmul %1349, %1355, %cst_285 {dimension_numbers = #tpu.dot_dimension_numbers<[1], [0], [0], [1], [0, 0, 1, 1], [], []>} : vector<8x32xf32>, vector<32x5xf32>, vector<8x5xf32> -> vector<8x5xf32>
    %1357 = arith.addf %1354, %1356 : vector<8x5xf32>
    %c0_286 = arith.constant 0 : index
    %c0_287 = arith.constant 0 : index
    %1358 = vector.load %arg12[%c0_286, %c0_287] : memref<1x5xf32, #tpu.memory_space<vmem>>, vector<1x5xf32>
    %1359 = vector.broadcast %1358 : vector<1x5xf32> to vector<8x5xf32>
    %1360 = arith.addf %1357, %1359 : vector<8x5xf32>
    %c0_288 = arith.constant 0 : index
    %c0_289 = arith.constant 0 : index
    %1361 = vector.load %arg13[%c0_288, %c0_289] : memref<8x5xf32, #tpu.memory_space<vmem>>, vector<8x5xf32>
    tpu.vector_store %arg13[%c0_288, %c0_289], %1360 {strides = array<i32>} : memref<8x5xf32, #tpu.memory_space<vmem>>, vector<8x5xf32>,
    return
  }
}

</mosaic_0001>

<llo_original>
// kernel: tpu_custom_call.1
$region0: #{tpu_custom_call.1}
  #allocation0 [shape = 'u32[]', space=smem, size = 0x4, offset = 0x4, fixed_abs, tag = 'smem constant byte address 0x4 - core index']
  #allocation1 [shape = 'u32[144,128]{1,0:T(1,128)}', space=vmem, size = 0x12000, scoped, tag = 'internal scratch']
  #allocation2 [shape = 'f32[64,256]{1,0:T(8,128)}', space=vmem, size = 0x10000, scoped, tag = 'scratch operand']
  #allocation3 [shape = 'f32[64,32]{1,0:T(8,128)}', space=vmem, size = 0x8000, scoped, tag = 'scratch operand']
  #allocation4 [shape = 'f32[64,32]{1,0:T(8,128)}', space=vmem, size = 0x8000, scoped, tag = 'scratch operand']
  #allocation5 [shape = 'f32[64,32]{1,0:T(8,128)}', space=vmem, size = 0x8000, scoped, tag = 'scratch operand']
  #allocation6 [shape = 'f32[64,32]{1,0:T(8,128)}', space=vmem, size = 0x8000, scoped, tag = 'scratch operand']
  %s0 = inlined_call_operand.vmem [shape: s32[8,1], index: 0, kind: input, shape index: {}]
  %s1 = inlined_call_operand.vmem [shape: f32[64,16], index: 1, kind: input, shape index: {}]
  %s2 = inlined_call_operand.vmem [shape: f32[16,256], index: 2, kind: input, shape index: {}]
  %s3 = inlined_call_operand.hbm [shape: f32[32,128], index: 3, kind: input, shape index: {}]
  %s4 = inlined_call_operand.hbm [shape: f32[32,128], index: 4, kind: input, shape index: {}]
  %s5 = inlined_call_operand.vmem [shape: f32[1,256], index: 5, kind: input, shape index: {}]
  %s6 = inlined_call_operand.vmem [shape: f32[64,256], index: 6, kind: input, shape index: {}]
  %s7 = inlined_call_operand.hbm [shape: f32[32,128], index: 7, kind: input, shape index: {}]
  %s8 = inlined_call_operand.hbm [shape: f32[32,128], index: 8, kind: input, shape index: {}]
  %s9 = inlined_call_operand.vmem [shape: f32[1,256], index: 9, kind: input, shape index: {}]
  %s10 = inlined_call_operand.vmem [shape: f32[32,5], index: 10, kind: input, shape index: {}]
  %s11 = inlined_call_operand.vmem [shape: f32[32,5], index: 11, kind: input, shape index: {}]
  %s12 = inlined_call_operand.vmem [shape: f32[1,5], index: 12, kind: input, shape index: {}]
  %s13 = inlined_call_operand.hbm [shape: f32[8,5], index: 13, kind: output, shape index: {}]
  %s14 = sld [smem:[#allocation0]]
  $region78: #{tpu_custom_call.1} parent=0
    _
  %s16 = ssub.s32 1, %s14
  %s17 = scalar_select 0, %s16, %s14
  $region1: #{tpu_custom_call.1} parent=0
    #allocation7 [shape = 'u8[16384]{0}', space=vmem, size = 0x4000, scoped, tag = 'input window, operand 3, single buffered']
    #allocation8 [shape = 's32[1]{0}', space=sflag, size = 0x4, scoped, tag = 'scoped memory for tpu_custom_call.1']
    #allocation9 [shape = 's32[1]{0}', space=sflag, size = 0x4, scoped, tag = 'scoped memory for tpu_custom_call.1']
    #allocation10 [shape = 'u8[16384]{0}', space=vmem, size = 0x4000, scoped, tag = 'input window, operand 4, single buffered']
    #allocation11 [shape = 's32[1]{0}', space=sflag, size = 0x4, scoped, tag = 'scoped memory for tpu_custom_call.1']
    #allocation12 [shape = 'u8[16384]{0}', space=vmem, size = 0x4000, scoped, tag = 'input window, operand 7, single buffered']
    #allocation13 [shape = 'u8[16384]{0}', space=vmem, size = 0x4000, scoped, tag = 'input window, operand 8, single buffered']
    #allocation14 [shape = 's32[1]{0}', space=sflag, size = 0x4, scoped, tag = 'scoped memory for tpu_custom_call.1']
    #allocation15 [shape = 'u8[4096]{0}', space=vmem, size = 0x1000, scoped, tag = 'output window, operand 0, single buffered']
    %18 = vsyncpa [#allocation8], 0
    %19 = vsyncpa [#allocation11], 0
    %20 = vsyncpa [#allocation14], 0
    %21 = vsyncpa [#allocation9], 0
    // Predicated region
    $region2: #{tpu_custom_call.1} parent=1 // pred_check
      _
    $region3: #{tpu_custom_call.1} parent=1 // pred_check_branch
      %23 = sbr.rel (0) target = $region5
    $region4: #{tpu_custom_call.1} parent=1 // pred_region
      _
    $region5: #{tpu_custom_call.1} parent=1 // pred_fallthru
      _
    // Predicated region
    $region6: #{tpu_custom_call.1} parent=1 // pred_check
      _
    $region7: #{tpu_custom_call.1} parent=1 // pred_check_branch
      %25 = sbr.rel (0) target = $region9
    $region8: #{tpu_custom_call.1} parent=1 // pred_region
      _
    $region9: #{tpu_custom_call.1} parent=1 // pred_fallthru
      _
    // Predicated region
    $region10: #{tpu_custom_call.1} parent=1 // pred_check
      _
    $region11: #{tpu_custom_call.1} parent=1 // pred_check_branch
      %27 = sbr.rel (0) target = $region13
    $region12: #{tpu_custom_call.1} parent=1 // pred_region
      _
    $region13: #{tpu_custom_call.1} parent=1 // pred_fallthru
      _
    // Predicated region
    $region14: #{tpu_custom_call.1} parent=1 // pred_check
      _
    $region15: #{tpu_custom_call.1} parent=1 // pred_check_branch
      %29 = sbr.rel (0) target = $region17
    $region16: #{tpu_custom_call.1} parent=1 // pred_region
      %s31 = ssub.s32 512, 512
      %32 = vsyncadd [#allocation8], %s31
      %s33 = sshll.u32 [#allocation7], 4
      %s34 = int_to_ptr.vmem [resolvable:$true] %s33
      %39 = dma.hbm_to_vmem [thread:$0]  %s3, 512, %s34, [#allocation8], 128, 128, 8
    $region17: #{tpu_custom_call.1} parent=1 // pred_fallthru
      _
    // Predicated region
    $region18: #{tpu_custom_call.1} parent=1 // pred_check
      _
    $region19: #{tpu_custom_call.1} parent=1 // pred_check_branch
      %41 = sbr.rel (0) target = $region21
    $region20: #{tpu_custom_call.1} parent=1 // pred_region
      %s43 = ssub.s32 512, 512
      %44 = vsyncadd [#allocation11], %s43
      %s45 = sshll.u32 [#allocation10], 4
      %s46 = int_to_ptr.vmem [resolvable:$true] %s45
      %51 = dma.hbm_to_vmem [thread:$0]  %s4, 512, %s46, [#allocation11], 128, 128, 8
    $region21: #{tpu_custom_call.1} parent=1 // pred_fallthru
      _
    // Predicated region
    $region22: #{tpu_custom_call.1} parent=1 // pred_check
      _
    $region23: #{tpu_custom_call.1} parent=1 // pred_check_branch
      %53 = sbr.rel (0) target = $region25
    $region24: #{tpu_custom_call.1} parent=1 // pred_region
      _
    $region25: #{tpu_custom_call.1} parent=1 // pred_fallthru
      _
    // Predicated region
    $region26: #{tpu_custom_call.1} parent=1 // pred_check
      _
    $region27: #{tpu_custom_call.1} parent=1 // pred_check_branch
      %55 = sbr.rel (0) target = $region29
    $region28: #{tpu_custom_call.1} parent=1 // pred_region
      _
    $region29: #{tpu_custom_call.1} parent=1 // pred_fallthru
      _
    // Predicated region
    $region30: #{tpu_custom_call.1} parent=1 // pred_check
      _
    $region31: #{tpu_custom_call.1} parent=1 // pred_check_branch
      %57 = sbr.rel (0) target = $region33
    $region32: #{tpu_custom_call.1} parent=1 // pred_region
      %s59 = ssub.s32 512, 512
      %60 = vsyncadd [#allocation11], %s59
      %s61 = sshll.u32 [#allocation12], 4
      %s62 = int_to_ptr.vmem [resolvable:$true] %s61
      %67 = dma.hbm_to_vmem [thread:$0]  %s7, 512, %s62, [#allocation11], 128, 128, 8
    $region33: #{tpu_custom_call.1} parent=1 // pred_fallthru
      _
    // Predicated region
    $region34: #{tpu_custom_call.1} parent=1 // pred_check
      _
    $region35: #{tpu_custom_call.1} parent=1 // pred_check_branch
      %69 = sbr.rel (0) target = $region37
    $region36: #{tpu_custom_call.1} parent=1 // pred_region
      %s71 = ssub.s32 512, 512
      %72 = vsyncadd [#allocation14], %s71
      %s73 = sshll.u32 [#allocation13], 4
      %s74 = int_to_ptr.vmem [resolvable:$true] %s73
      %79 = dma.hbm_to_vmem [thread:$0]  %s8, 512, %s74, [#allocation14], 128, 128, 8
    $region37: #{tpu_custom_call.1} parent=1 // pred_fallthru
      _
    // Predicated region
    $region38: #{tpu_custom_call.1} parent=1 // pred_check
      _
    $region39: #{tpu_custom_call.1} parent=1 // pred_check_branch
      %81 = sbr.rel (0) target = $region41
    $region40: #{tpu_custom_call.1} parent=1 // pred_region
      _
    $region41: #{tpu_custom_call.1} parent=1 // pred_fallthru
      _
    // Predicated region
    $region42: #{tpu_custom_call.1} parent=1 // pred_check
      _
    $region43: #{tpu_custom_call.1} parent=1 // pred_check_branch
      %83 = sbr.rel (0) target = $region45
    $region44: #{tpu_custom_call.1} parent=1 // pred_region
      _
    $region45: #{tpu_custom_call.1} parent=1 // pred_fallthru
      _
    // Predicated region
    $region46: #{tpu_custom_call.1} parent=1 // pred_check
      _
    $region47: #{tpu_custom_call.1} parent=1 // pred_check_branch
      %85 = sbr.rel (0) target = $region49
    $region48: #{tpu_custom_call.1} parent=1 // pred_region
      _
    $region49: #{tpu_custom_call.1} parent=1 // pred_fallthru
      _
    // Predicated region
    $region50: #{tpu_custom_call.1} parent=1 // pred_check
      _
    $region51: #{tpu_custom_call.1} parent=1 // pred_check_branch
      %87 = sbr.rel (0) target = $region53
    $region52: #{tpu_custom_call.1} parent=1 // pred_region
      _
    $region53: #{tpu_custom_call.1} parent=1 // pred_fallthru
      _
    // Predicated region
    $region54: #{tpu_custom_call.1} parent=1 // pred_check
      _
    $region55: #{tpu_custom_call.1} parent=1 // pred_check_branch
      %89 = sbr.rel (0) target = $region57
    $region56: #{tpu_custom_call.1} parent=1 // pred_region
      %90 = dma.done [#allocation8], 512
    $region57: #{tpu_custom_call.1} parent=1 // pred_fallthru
      _
    // Predicated region
    $region58: #{tpu_custom_call.1} parent=1 // pred_check
      _
    $region59: #{tpu_custom_call.1} parent=1 // pred_check_branch
      %92 = sbr.rel (0) target = $region61
    $region60: #{tpu_custom_call.1} parent=1 // pred_region
      %93 = dma.done [#allocation11], 512
    $region61: #{tpu_custom_call.1} parent=1 // pred_fallthru
      _
    // Predicated region
    $region62: #{tpu_custom_call.1} parent=1 // pred_check
      _
    $region63: #{tpu_custom_call.1} parent=1 // pred_check_branch
      %95 = sbr.rel (0) target = $region65
    $region64: #{tpu_custom_call.1} parent=1 // pred_region
      %96 = dma.done [#allocation11], 512
    $region65: #{tpu_custom_call.1} parent=1 // pred_fallthru
      _
    // Predicated region
    $region66: #{tpu_custom_call.1} parent=1 // pred_check
      _
    $region67: #{tpu_custom_call.1} parent=1 // pred_check_branch
      %98 = sbr.rel (0) target = $region69
    $region68: #{tpu_custom_call.1} parent=1 // pred_region
      %99 = dma.done [#allocation14], 512
    $region69: #{tpu_custom_call.1} parent=1 // pred_fallthru
      _
    %v100 = vld [vmem:[%s0] sm:$0xff]
    %v101 = vld [vmem:[%s1] sm:$0xff]
    %v102 = vld [vmem:[%s1 + $0x8] sm:$0xff]
    %v103 = vld [vmem:[%s1 + $0x10] sm:$0xff]
    %v104 = vld [vmem:[%s1 + $0x18] sm:$0xff]
    %v105 = vld [vmem:[%s1 + $0x20] sm:$0xff]
    %v106 = vld [vmem:[%s1 + $0x28] sm:$0xff]
    %v107 = vld [vmem:[%s1 + $0x30] sm:$0xff]
    %v108 = vld [vmem:[%s1 + $0x38] sm:$0xff]
    %v109 = vld [vmem:[%s2] sm:$0xff]
    %v110 = vld [vmem:[%s2 + $0x8] sm:$0xff]
    %v111 = vld [vmem:[%s2 + $0x10] sm:$0xff]
    %v112 = vld [vmem:[%s2 + $0x18] sm:$0xff]
    %v113 = vld [vmem:[%s5] sm:$0x3]
    %v115 = vlaneseq
    %v116 = vshrl.u32 %v115, 7
    %v117 = vsub.s32 0, %v116
    %v118 = vrot.slane %v113, %v117
    %v119 = vlaneseq
    %v120 = vshrl.u32 %v119, 7
    %v121 = vsub.s32 1, %v120
    %v122 = vrot.slane %v113, %v121
    %vm125 = vcmask 130048
    %v127 = vsel %vm125, %v101, 0
    %v130 = vsel %vm125, %v102, 0
    %v133 = vsel %vm125, %v103, 0
    %v136 = vsel %vm125, %v104, 0
    %v139 = vsel %vm125, %v105, 0
    %v142 = vsel %vm125, %v106, 0
    %v145 = vsel %vm125, %v107, 0
    %v148 = vsel %vm125, %v108, 0
    %150 = vmatprep.subr.mxu0 0.0
    %151 = vmatpush1.msra.mxu0 0.0
    %152 = vmatprep.subr.mxu0 0.0
    %153 = vmatpush1.msra.mxu0 0.0
    %154 = vmatprep.subr.mxu0 0.0
    %155 = vmatpush1.msra.mxu0 0.0
    %156 = vmatprep.subr.mxu0 0.0
    %157 = vmatpush1.msra.mxu0 0.0
    %158 = vmatprep.subr.mxu0 0.0
    %159 = vmatpush1.msra.mxu0 0.0
    %160 = vmatprep.subr.mxu0 0.0
    %161 = vmatpush1.msra.mxu0 0.0
    %162 = vmatprep.subr.mxu0 0.0
    %163 = vmatpush1.msra.mxu0 0.0
    %164 = vmatprep.subr.mxu0 0.0
    %165 = vmatpush1.msra.mxu0 0.0
    %166 = vmatprep.subr.mxu0 0.0
    %167 = vmatpush1.msra.mxu0 0.0
    %168 = vmatprep.subr.mxu0 0.0
    %169 = vmatpush1.msra.mxu0 0.0
    %170 = vmatprep.subr.mxu0 0.0
    %171 = vmatpush1.msra.mxu0 0.0
    %172 = vmatprep.subr.mxu0 0.0
    %173 = vmatpush1.msra.mxu0 0.0
    %174 = vmatprep.subr.mxu0 0.0
    %175 = vmatpush1.msra.mxu0 0.0
    %176 = vmatprep.subr.mxu0 0.0
    %177 = vmatpush1.msra.mxu0 0.0
    %178 = vmatprep.subr.mxu0 %v112
    %179 = vmatpush1.msra.mxu0 %v111
    %180 = vmatprep.subr.mxu0 %v110
    %181 = vmatpush1.msra.mxu0 %v109
    %182 = vmatprep.subr.mxu0 0.0
    %183 = vmatpush2.msra.mxu0 0.0
    %184 = vmatprep.subr.mxu0 0.0
    %185 = vmatpush2.msra.mxu0 0.0
    %186 = vmatprep.subr.mxu0 0.0
    %187 = vmatpush2.msra.mxu0 0.0
    %188 = vmatprep.subr.mxu0 0.0
    %189 = vmatpush2.msra.mxu0 0.0
    %190 = vmatprep.subr.mxu0 0.0
    %191 = vmatpush2.msra.mxu0 0.0
    %192 = vmatprep.subr.mxu0 0.0
    %193 = vmatpush2.msra.mxu0 0.0
    %194 = vmatprep.subr.mxu0 0.0
    %195 = vmatpush2.msra.mxu0 0.0
    %196 = vmatprep.subr.mxu0 0.0
    %197 = vmatpush2.msra.mxu0 0.0
    %198 = vmatprep.subr.mxu0 0.0
    %199 = vmatpush2.msra.mxu0 0.0
    %200 = vmatprep.subr.mxu0 0.0
    %201 = vmatpush2.msra.mxu0 0.0
    %202 = vmatprep.subr.mxu0 0.0
    %203 = vmatpush2.msra.mxu0 0.0
    %204 = vmatprep.subr.mxu0 0.0
    %205 = vmatpush2.msra.mxu0 0.0
    %206 = vmatprep.subr.mxu0 0.0
    %207 = vmatpush2.msra.mxu0 0.0
    %208 = vmatprep.subr.mxu0 0.0
    %209 = vmatpush2.msra.mxu0 0.0
    %210 = vmatprep.subr.mxu0 0.0
    %211 = vmatpush2.msra.mxu0 0.0
    %212 = vmatprep.subr.mxu0 0.0
    %213 = vmatpush2.msra.mxu0 0.0
    %214 = vmatprep.mubr.f32.mxu0 0.0
    %215 = vmatmul.mubr.f32.gmra.mxu0 %v127
    %v216 = vpop.f32.mrf.mxu0
    %v217 = vadd.f32 %v118, %v216
    %v218 = vpop.f32.mrf.mxu0
    %v219 = vadd.f32 %v122, %v218
    %220 = vmatprep.mubr.f32.mxu0 0.0
    %221 = vmatmul.mubr.f32.gmra.mxu0 %v130
    %v222 = vpop.f32.mrf.mxu0
    %v223 = vadd.f32 %v118, %v222
    %v224 = vpop.f32.mrf.mxu0
    %v225 = vadd.f32 %v122, %v224
    %226 = vmatprep.mubr.f32.mxu0 0.0
    %227 = vmatmul.mubr.f32.gmra.mxu0 %v133
    %v228 = vpop.f32.mrf.mxu0
    %v229 = vadd.f32 %v118, %v228
    %v230 = vpop.f32.mrf.mxu0
    %v231 = vadd.f32 %v122, %v230
    %232 = vmatprep.mubr.f32.mxu0 0.0
    %233 = vmatmul.mubr.f32.gmra.mxu0 %v136
    %v234 = vpop.f32.mrf.mxu0
    %v235 = vadd.f32 %v118, %v234
    %v236 = vpop.f32.mrf.mxu0
    %v237 = vadd.f32 %v122, %v236
    %238 = vmatprep.mubr.f32.mxu0 0.0
    %239 = vmatmul.mubr.f32.gmra.mxu0 %v139
    %v240 = vpop.f32.mrf.mxu0
    %v241 = vadd.f32 %v118, %v240
    %v242 = vpop.f32.mrf.mxu0
    %v243 = vadd.f32 %v122, %v242
    %244 = vmatprep.mubr.f32.mxu0 0.0
    %245 = vmatmul.mubr.f32.gmra.mxu0 %v142
    %v246 = vpop.f32.mrf.mxu0
    %v247 = vadd.f32 %v118, %v246
    %v248 = vpop.f32.mrf.mxu0
    %v249 = vadd.f32 %v122, %v248
    %250 = vmatprep.mubr.f32.mxu0 0.0
    %251 = vmatmul.mubr.f32.gmra.mxu0 %v145
    %v252 = vpop.f32.mrf.mxu0
    %v253 = vadd.f32 %v118, %v252
    %v254 = vpop.f32.mrf.mxu0
    %v255 = vadd.f32 %v122, %v254
    %256 = vmatprep.mubr.f32.mxu0 0.0
    %257 = vmatmul.mubr.f32.gmra.mxu0 %v148
    %v258 = vpop.f32.mrf.mxu0
    %v259 = vadd.f32 %v118, %v258
    %v260 = vpop.f32.mrf.mxu0
    %v261 = vadd.f32 %v122, %v260
    %262 = vdwg.mxu0
    %263 = vst [vmem:[#allocation2] sm:$0xff] %v217
    %264 = vst [vmem:[#allocation2 + $0x8] sm:$0xff] %v219
    %265 = vst [vmem:[#allocation2 + $0x10] sm:$0xff] %v223
    %266 = vst [vmem:[#allocation2 + $0x18] sm:$0xff] %v225
    %267 = vst [vmem:[#allocation2 + $0x20] sm:$0xff] %v229
    %268 = vst [vmem:[#allocation2 + $0x28] sm:$0xff] %v231
    %269 = vst [vmem:[#allocation2 + $0x30] sm:$0xff] %v235
    %270 = vst [vmem:[#allocation2 + $0x38] sm:$0xff] %v237
    %271 = vst [vmem:[#allocation2 + $0x40] sm:$0xff] %v241
    %272 = vst [vmem:[#allocation2 + $0x48] sm:$0xff] %v243
    %273 = vst [vmem:[#allocation2 + $0x50] sm:$0xff] %v247
    %274 = vst [vmem:[#allocation2 + $0x58] sm:$0xff] %v249
    %275 = vst [vmem:[#allocation2 + $0x60] sm:$0xff] %v253
    %276 = vst [vmem:[#allocation2 + $0x68] sm:$0xff] %v255
    %277 = vst [vmem:[#allocation2 + $0x70] sm:$0xff] %v259
    %278 = vst [vmem:[#allocation2 + $0x78] sm:$0xff] %v261
    %v279 = vld [vmem:[#allocation7] sm:$0xff]
    %v280 = vld [vmem:[#allocation7 + $0x8] sm:$0xff]
    %v281 = vld [vmem:[#allocation7 + $0x10] sm:$0xff]
    %v282 = vld [vmem:[#allocation7 + $0x18] sm:$0xff]
    %v283 = vld [vmem:[#allocation10] sm:$0xff]
    %v284 = vld [vmem:[#allocation10 + $0x8] sm:$0xff]
    %v285 = vld [vmem:[#allocation10 + $0x10] sm:$0xff]
    %v286 = vld [vmem:[#allocation10 + $0x18] sm:$0xff]
    %v287 = vld [vmem:[#allocation2] sm:$0xff]
    %vm288 = vcmask 261120
    %v290 = vsel %vm288, 0.0, 0
    %292 = vmatprep.subr.mxu0 0.0
    %293 = vmatpush1.msra.mxu0 0.0
    %294 = vmatprep.subr.mxu0 0.0
    %295 = vmatpush1.msra.mxu0 0.0
    %296 = vmatprep.subr.mxu0 0.0
    %297 = vmatpush1.msra.mxu0 0.0
    %298 = vmatprep.subr.mxu0 0.0
    %299 = vmatpush1.msra.mxu0 0.0
    %300 = vmatprep.subr.mxu0 0.0
    %301 = vmatpush1.msra.mxu0 0.0
    %302 = vmatprep.subr.mxu0 0.0
    %303 = vmatpush1.msra.mxu0 0.0
    %304 = vmatprep.subr.mxu0 0.0
    %305 = vmatpush1.msra.mxu0 0.0
    %306 = vmatprep.subr.mxu0 0.0
    %307 = vmatpush1.msra.mxu0 0.0
    %308 = vmatprep.subr.mxu0 0.0
    %309 = vmatpush1.msra.mxu0 0.0
    %310 = vmatprep.subr.mxu0 0.0
    %311 = vmatpush1.msra.mxu0 0.0
    %312 = vmatprep.subr.mxu0 0.0
    %313 = vmatpush1.msra.mxu0 0.0
    %314 = vmatprep.subr.mxu0 0.0
    %315 = vmatpush1.msra.mxu0 0.0
    %316 = vmatprep.subr.mxu0 0.0
    %317 = vmatpush1.msra.mxu0 %v282
    %318 = vmatprep.subr.mxu0 0.0
    %319 = vmatpush1.msra.mxu0 %v281
    %320 = vmatprep.subr.mxu0 0.0
    %321 = vmatpush1.msra.mxu0 %v280
    %322 = vmatprep.subr.mxu0 0.0
    %323 = vmatpush1.msra.mxu0 %v279
    %324 = vmatprep.subr.mxu0 0.0
    %325 = vmatpush2.msra.mxu0 0.0
    %326 = vmatprep.subr.mxu0 0.0
    %327 = vmatpush2.msra.mxu0 0.0
    %328 = vmatprep.subr.mxu0 0.0
    %329 = vmatpush2.msra.mxu0 0.0
    %330 = vmatprep.subr.mxu0 0.0
    %331 = vmatpush2.msra.mxu0 0.0
    %332 = vmatprep.subr.mxu0 0.0
    %333 = vmatpush2.msra.mxu0 0.0
    %334 = vmatprep.subr.mxu0 0.0
    %335 = vmatpush2.msra.mxu0 0.0
    %336 = vmatprep.subr.mxu0 0.0
    %337 = vmatpush2.msra.mxu0 0.0
    %338 = vmatprep.subr.mxu0 0.0
    %339 = vmatpush2.msra.mxu0 0.0
    %340 = vmatprep.subr.mxu0 0.0
    %341 = vmatpush2.msra.mxu0 0.0
    %342 = vmatprep.subr.mxu0 0.0
    %343 = vmatpush2.msra.mxu0 0.0
    %344 = vmatprep.subr.mxu0 0.0
    %345 = vmatpush2.msra.mxu0 0.0
    %346 = vmatprep.subr.mxu0 0.0
    %347 = vmatpush2.msra.mxu0 0.0
    %348 = vmatprep.subr.mxu0 0.0
    %349 = vmatpush2.msra.mxu0 0.0
    %350 = vmatprep.subr.mxu0 0.0
    %351 = vmatpush2.msra.mxu0 0.0
    %352 = vmatprep.subr.mxu0 0.0
    %353 = vmatpush2.msra.mxu0 0.0
    %354 = vmatprep.subr.mxu0 0.0
    %355 = vmatpush2.msra.mxu0 0.0
    %356 = vmatprep.mubr.f32.mxu0 0.0
    %357 = vmatmul.mubr.f32.gmra.mxu0 %v290
    %v358 = vpop.f32.mrf.mxu0
    %v359 = vadd.f32 0.0, %v358
    %v360 = vpop.f32.mrf.mxu0
    %361 = vdwg.mxu0
    %v362 = vadd.f32 %v287, %v359
    %v363 = vxor.u32 %v362, 2147483648
    %v364 = vmul.f32 %v363, 1.442695
    %v365 = vpow.pop %v364
    %v366 = vadd.f32 %v365, 1.0
    %v367 = vrcp.pop %v366
    %v368 = vmul.f32 1.0, %v367
    %v369 = vtanh.pop %v362
    %v370 = vmul.f32 %v368, 0.0
    %372 = vrot.lane.b32.xlu0 %v369, 64
    %v373 = vpop.permute.xlu0 %372
    %v375 = vmul.f32 %v368, %v373
    %377 = vrot.lane.b32.xlu0 %v375, 32
    %v378 = vpop.permute.xlu0 %377
    %v380 = vadd.f32 %v370, %v378
    %v381 = vtanh.pop %v380
    %383 = vrot.lane.b32.xlu0 %v381, 64
    %v384 = vpop.permute.xlu0 %383
    %v386 = vmul.f32 %v368, %v384
    %vm387 = vcmp.gt.s32.totalorder %v100, 0
    %v388 = vsel %vm387, 1, 0
    %389 = vset.pattern.permute.xlu0 0
    %390 = vperm.xlu0 %389, %v388
    %v391 = vpop.permute.xlu0 %390
    %vm392 = vcmp.eq.s32.totalorder %v391, 1
    %v393 = vsel %vm392, %v386, 0.0
    %v394 = vsel %vm392, %v380, 0.0
    %v395 = vld [vmem:[#allocation2 + $0x78] sm:$0xff]
    %396 = vmatprep.subr.mxu0 0.0
    %397 = vmatpush1.msra.mxu0 0.0
    %398 = vmatprep.subr.mxu0 0.0
    %399 = vmatpush1.msra.mxu0 0.0
    %400 = vmatprep.subr.mxu0 0.0
    %401 = vmatpush1.msra.mxu0 0.0
    %402 = vmatprep.subr.mxu0 0.0
    %403 = vmatpush1.msra.mxu0 0.0
    %404 = vmatprep.subr.mxu0 0.0
    %405 = vmatpush1.msra.mxu0 0.0
    %406 = vmatprep.subr.mxu0 0.0
    %407 = vmatpush1.msra.mxu0 0.0
    %408 = vmatprep.subr.mxu0 0.0
    %409 = vmatpush1.msra.mxu0 0.0
    %410 = vmatprep.subr.mxu0 0.0
    %411 = vmatpush1.msra.mxu0 0.0
    %412 = vmatprep.subr.mxu0 0.0
    %413 = vmatpush1.msra.mxu0 0.0
    %414 = vmatprep.subr.mxu0 0.0
    %415 = vmatpush1.msra.mxu0 0.0
    %416 = vmatprep.subr.mxu0 0.0
    %417 = vmatpush1.msra.mxu0 0.0
    %418 = vmatprep.subr.mxu0 0.0
    %419 = vmatpush1.msra.mxu0 0.0
    %420 = vmatprep.subr.mxu0 0.0
    %421 = vmatpush1.msra.mxu0 %v286
    %422 = vmatprep.subr.mxu0 0.0
    %423 = vmatpush1.msra.mxu0 %v285
    %424 = vmatprep.subr.mxu0 0.0
    %425 = vmatpush1.msra.mxu0 %v284
    %426 = vmatprep.subr.mxu0 0.0
    %427 = vmatpush1.msra.mxu0 %v283
    %428 = vmatprep.subr.mxu0 0.0
    %429 = vmatpush2.msra.mxu0 0.0
    %430 = vmatprep.subr.mxu0 0.0
    %431 = vmatpush2.msra.mxu0 0.0
    %432 = vmatprep.subr.mxu0 0.0
    %433 = vmatpush2.msra.mxu0 0.0
    %434 = vmatprep.subr.mxu0 0.0
    %435 = vmatpush2.msra.mxu0 0.0
    %436 = vmatprep.subr.mxu0 0.0
    %437 = vmatpush2.msra.mxu0 0.0
    %438 = vmatprep.subr.mxu0 0.0
    %439 = vmatpush2.msra.mxu0 0.0
    %440 = vmatprep.subr.mxu0 0.0
    %441 = vmatpush2.msra.mxu0 0.0
    %442 = vmatprep.subr.mxu0 0.0
    %443 = vmatpush2.msra.mxu0 0.0
    %444 = vmatprep.subr.mxu0 0.0
    %445 = vmatpush2.msra.mxu0 0.0
    %446 = vmatprep.subr.mxu0 0.0
    %447 = vmatpush2.msra.mxu0 0.0
    %448 = vmatprep.subr.mxu0 0.0
    %449 = vmatpush2.msra.mxu0 0.0
    %450 = vmatprep.subr.mxu0 0.0
    %451 = vmatpush2.msra.mxu0 0.0
    %452 = vmatprep.subr.mxu0 0.0
    %453 = vmatpush2.msra.mxu0 0.0
    %454 = vmatprep.subr.mxu0 0.0
    %455 = vmatpush2.msra.mxu0 0.0
    %456 = vmatprep.subr.mxu0 0.0
    %457 = vmatpush2.msra.mxu0 0.0
    %458 = vmatprep.subr.mxu0 0.0
    %459 = vmatpush2.msra.mxu0 0.0
    %460 = vmatprep.mubr.f32.mxu0 0.0
    %461 = vmatmul.mubr.f32.gmra.mxu0 %v290
    %v462 = vpop.f32.mrf.mxu0
    %v463 = vadd.f32 0.0, %v462
    %v464 = vpop.f32.mrf.mxu0
    %465 = vdwg.mxu0
    %v466 = vadd.f32 %v395, %v463
    %v467 = vxor.u32 %v466, 2147483648
    %v468 = vmul.f32 %v467, 1.442695
    %v469 = vpow.pop %v468
    %v470 = vadd.f32 %v469, 1.0
    %v471 = vrcp.pop %v470
    %v472 = vmul.f32 1.0, %v471
    %v473 = vtanh.pop %v466
    %v474 = vmul.f32 %v472, 0.0
    %476 = vrot.lane.b32.xlu0 %v473, 64
    %v477 = vpop.permute.xlu0 %476
    %v479 = vmul.f32 %v472, %v477
    %481 = vrot.lane.b32.xlu0 %v479, 32
    %v482 = vpop.permute.xlu0 %481
    %v484 = vadd.f32 %v474, %v482
    %v485 = vtanh.pop %v484
    %487 = vrot.lane.b32.xlu0 %v485, 64
    %v488 = vpop.permute.xlu0 %487
    %v490 = vmul.f32 %v472, %v488
    %vm491 = vcmp.gt.s32.totalorder %v100, 7
    %v492 = vsel %vm491, 1, 0
    %493 = vset.pattern.permute.xlu0 0
    %494 = vperm.xlu0 %493, %v492
    %v495 = vpop.permute.xlu0 %494
    %vm496 = vcmp.eq.s32.totalorder %v495, 1
    %v497 = vsel %vm496, %v490, 0.0
    %v498 = vsel %vm496, %v484, 0.0
    %500 = vrot.lane.b32.xlu0 %v393, 32
    %v501 = vpop.permute.xlu0 %500
    %503 = vst.msk [vmem:[#allocation3] sm:$0xff] %vm288, %v501
    %505 = vrot.lane.b32.xlu0 %v497, 32
    %v506 = vpop.permute.xlu0 %505
    %508 = vst.msk [vmem:[#allocation4 + $0x38] sm:$0xff] %vm288, %v506
    %v509 = vld [vmem:[#allocation2 + $0x10] sm:$0xff]
    %v510 = vsel %vm288, %v501, 0
    %512 = vmatprep.subr.mxu0 0.0
    %513 = vmatpush1.msra.mxu0 0.0
    %514 = vmatprep.subr.mxu0 0.0
    %515 = vmatpush1.msra.mxu0 0.0
    %516 = vmatprep.subr.mxu0 0.0
    %517 = vmatpush1.msra.mxu0 0.0
    %518 = vmatprep.subr.mxu0 0.0
    %519 = vmatpush1.msra.mxu0 0.0
    %520 = vmatprep.subr.mxu0 0.0
    %521 = vmatpush1.msra.mxu0 0.0
    %522 = vmatprep.subr.mxu0 0.0
    %523 = vmatpush1.msra.mxu0 0.0
    %524 = vmatprep.subr.mxu0 0.0
    %525 = vmatpush1.msra.mxu0 0.0
    %526 = vmatprep.subr.mxu0 0.0
    %527 = vmatpush1.msra.mxu0 0.0
    %528 = vmatprep.subr.mxu0 0.0
    %529 = vmatpush1.msra.mxu0 0.0
    %530 = vmatprep.subr.mxu0 0.0
    %531 = vmatpush1.msra.mxu0 0.0
    %532 = vmatprep.subr.mxu0 0.0
    %533 = vmatpush1.msra.mxu0 0.0
    %534 = vmatprep.subr.mxu0 0.0
    %535 = vmatpush1.msra.mxu0 0.0
    %536 = vmatprep.subr.mxu0 0.0
    %537 = vmatpush1.msra.mxu0 %v282
    %538 = vmatprep.subr.mxu0 0.0
    %539 = vmatpush1.msra.mxu0 %v281
    %540 = vmatprep.subr.mxu0 0.0
    %541 = vmatpush1.msra.mxu0 %v280
    %542 = vmatprep.subr.mxu0 0.0
    %543 = vmatpush1.msra.mxu0 %v279
    %544 = vmatprep.subr.mxu0 0.0
    %545 = vmatpush2.msra.mxu0 0.0
    %546 = vmatprep.subr.mxu0 0.0
    %547 = vmatpush2.msra.mxu0 0.0
    %548 = vmatprep.subr.mxu0 0.0
    %549 = vmatpush2.msra.mxu0 0.0
    %550 = vmatprep.subr.mxu0 0.0
    %551 = vmatpush2.msra.mxu0 0.0
    %552 = vmatprep.subr.mxu0 0.0
    %553 = vmatpush2.msra.mxu0 0.0
    %554 = vmatprep.subr.mxu0 0.0
    %555 = vmatpush2.msra.mxu0 0.0
    %556 = vmatprep.subr.mxu0 0.0
    %557 = vmatpush2.msra.mxu0 0.0
    %558 = vmatprep.subr.mxu0 0.0
    %559 = vmatpush2.msra.mxu0 0.0
    %560 = vmatprep.subr.mxu0 0.0
    %561 = vmatpush2.msra.mxu0 0.0
    %562 = vmatprep.subr.mxu0 0.0
    %563 = vmatpush2.msra.mxu0 0.0
    %564 = vmatprep.subr.mxu0 0.0
    %565 = vmatpush2.msra.mxu0 0.0
    %566 = vmatprep.subr.mxu0 0.0
    %567 = vmatpush2.msra.mxu0 0.0
    %568 = vmatprep.subr.mxu0 0.0
    %569 = vmatpush2.msra.mxu0 0.0
    %570 = vmatprep.subr.mxu0 0.0
    %571 = vmatpush2.msra.mxu0 0.0
    %572 = vmatprep.subr.mxu0 0.0
    %573 = vmatpush2.msra.mxu0 0.0
    %574 = vmatprep.subr.mxu0 0.0
    %575 = vmatpush2.msra.mxu0 0.0
    %576 = vmatprep.mubr.f32.mxu0 0.0
    %577 = vmatmul.mubr.f32.gmra.mxu0 %v510
    %v578 = vpop.f32.mrf.mxu0
    %v579 = vadd.f32 0.0, %v578
    %v580 = vpop.f32.mrf.mxu0
    %581 = vdwg.mxu0
    %v582 = vadd.f32 %v509, %v579
    %v583 = vxor.u32 %v582, 2147483648
    %v584 = vmul.f32 %v583, 1.442695
    %v585 = vpow.pop %v584
    %v586 = vadd.f32 %v585, 1.0
    %v587 = vrcp.pop %v586
    %v588 = vmul.f32 1.0, %v587
    %v589 = vtanh.pop %v582
    %v590 = vmul.f32 %v588, %v394
    %592 = vrot.lane.b32.xlu0 %v589, 64
    %v593 = vpop.permute.xlu0 %592
    %v595 = vmul.f32 %v588, %v593
    %597 = vrot.lane.b32.xlu0 %v595, 32
    %v598 = vpop.permute.xlu0 %597
    %v600 = vadd.f32 %v590, %v598
    %v601 = vtanh.pop %v600
    %603 = vrot.lane.b32.xlu0 %v601, 64
    %v604 = vpop.permute.xlu0 %603
    %v606 = vmul.f32 %v588, %v604
    %vm607 = vcmp.gt.s32.totalorder %v100, 1
    %v608 = vsel %vm607, 1, 0
    %609 = vset.pattern.permute.xlu0 0
    %610 = vperm.xlu0 %609, %v608
    %v611 = vpop.permute.xlu0 %610
    %vm612 = vcmp.eq.s32.totalorder %v611, 1
    %v613 = vsel %vm612, %v606, %v393
    %v614 = vsel %vm612, %v600, %v394
    %v615 = vld [vmem:[#allocation2 + $0x68] sm:$0xff]
    %v616 = vsel %vm288, %v506, 0
    %618 = vmatprep.subr.mxu0 0.0
    %619 = vmatpush1.msra.mxu0 0.0
    %620 = vmatprep.subr.mxu0 0.0
    %621 = vmatpush1.msra.mxu0 0.0
    %622 = vmatprep.subr.mxu0 0.0
    %623 = vmatpush1.msra.mxu0 0.0
    %624 = vmatprep.subr.mxu0 0.0
    %625 = vmatpush1.msra.mxu0 0.0
    %626 = vmatprep.subr.mxu0 0.0
    %627 = vmatpush1.msra.mxu0 0.0
    %628 = vmatprep.subr.mxu0 0.0
    %629 = vmatpush1.msra.mxu0 0.0
    %630 = vmatprep.subr.mxu0 0.0
    %631 = vmatpush1.msra.mxu0 0.0
    %632 = vmatprep.subr.mxu0 0.0
    %633 = vmatpush1.msra.mxu0 0.0
    %634 = vmatprep.subr.mxu0 0.0
    %635 = vmatpush1.msra.mxu0 0.0
    %636 = vmatprep.subr.mxu0 0.0
    %637 = vmatpush1.msra.mxu0 0.0
    %638 = vmatprep.subr.mxu0 0.0
    %639 = vmatpush1.msra.mxu0 0.0
    %640 = vmatprep.subr.mxu0 0.0
    %641 = vmatpush1.msra.mxu0 0.0
    %642 = vmatprep.subr.mxu0 0.0
    %643 = vmatpush1.msra.mxu0 %v286
    %644 = vmatprep.subr.mxu0 0.0
    %645 = vmatpush1.msra.mxu0 %v285
    %646 = vmatprep.subr.mxu0 0.0
    %647 = vmatpush1.msra.mxu0 %v284
    %648 = vmatprep.subr.mxu0 0.0
    %649 = vmatpush1.msra.mxu0 %v283
    %650 = vmatprep.subr.mxu0 0.0
    %651 = vmatpush2.msra.mxu0 0.0
    %652 = vmatprep.subr.mxu0 0.0
    %653 = vmatpush2.msra.mxu0 0.0
    %654 = vmatprep.subr.mxu0 0.0
    %655 = vmatpush2.msra.mxu0 0.0
    %656 = vmatprep.subr.mxu0 0.0
    %657 = vmatpush2.msra.mxu0 0.0
    %658 = vmatprep.subr.mxu0 0.0
    %659 = vmatpush2.msra.mxu0 0.0
    %660 = vmatprep.subr.mxu0 0.0
    %661 = vmatpush2.msra.mxu0 0.0
    %662 = vmatprep.subr.mxu0 0.0
    %663 = vmatpush2.msra.mxu0 0.0
    %664 = vmatprep.subr.mxu0 0.0
    %665 = vmatpush2.msra.mxu0 0.0
    %666 = vmatprep.subr.mxu0 0.0
    %667 = vmatpush2.msra.mxu0 0.0
    %668 = vmatprep.subr.mxu0 0.0
    %669 = vmatpush2.msra.mxu0 0.0
    %670 = vmatprep.subr.mxu0 0.0
    %671 = vmatpush2.msra.mxu0 0.0
    %672 = vmatprep.subr.mxu0 0.0
    %673 = vmatpush2.msra.mxu0 0.0
    %674 = vmatprep.subr.mxu0 0.0
    %675 = vmatpush2.msra.mxu0 0.0
    %676 = vmatprep.subr.mxu0 0.0
    %677 = vmatpush2.msra.mxu0 0.0
    %678 = vmatprep.subr.mxu0 0.0
    %679 = vmatpush2.msra.mxu0 0.0
    %680 = vmatprep.subr.mxu0 0.0
    %681 = vmatpush2.msra.mxu0 0.0
    %682 = vmatprep.mubr.f32.mxu0 0.0
    %683 = vmatmul.mubr.f32.gmra.mxu0 %v616
    %v684 = vpop.f32.mrf.mxu0
    %v685 = vadd.f32 0.0, %v684
    %v686 = vpop.f32.mrf.mxu0
    %687 = vdwg.mxu0
    %v688 = vadd.f32 %v615, %v685
    %v689 = vxor.u32 %v688, 2147483648
    %v690 = vmul.f32 %v689, 1.442695
    %v691 = vpow.pop %v690
    %v692 = vadd.f32 %v691, 1.0
    %v693 = vrcp.pop %v692
    %v694 = vmul.f32 1.0, %v693
    %v695 = vtanh.pop %v688
    %v696 = vmul.f32 %v694, %v498
    %698 = vrot.lane.b32.xlu0 %v695, 64
    %v699 = vpop.permute.xlu0 %698
    %v701 = vmul.f32 %v694, %v699
    %703 = vrot.lane.b32.xlu0 %v701, 32
    %v704 = vpop.permute.xlu0 %703
    %v706 = vadd.f32 %v696, %v704
    %v707 = vtanh.pop %v706
    %709 = vrot.lane.b32.xlu0 %v707, 64
    %v710 = vpop.permute.xlu0 %709
    %v712 = vmul.f32 %v694, %v710
    %vm713 = vcmp.gt.s32.totalorder %v100, 6
    %v714 = vsel %vm713, 1, 0
    %715 = vset.pattern.permute.xlu0 0
    %716 = vperm.xlu0 %715, %v714
    %v717 = vpop.permute.xlu0 %716
    %vm718 = vcmp.eq.s32.totalorder %v717, 1
    %v719 = vsel %vm718, %v712, %v497
    %v720 = vsel %vm718, %v706, %v498
    %v721 = vsel %vm612, %v606, 0.0
    %723 = vrot.lane.b32.xlu0 %v721, 32
    %v724 = vpop.permute.xlu0 %723
    %726 = vst.msk [vmem:[#allocation3 + $0x8] sm:$0xff] %vm288, %v724
    %v727 = vsel %vm718, %v712, 0.0
    %729 = vrot.lane.b32.xlu0 %v727, 32
    %v730 = vpop.permute.xlu0 %729
    %732 = vst.msk [vmem:[#allocation4 + $0x30] sm:$0xff] %vm288, %v730
    %v733 = vld [vmem:[#allocation2 + $0x20] sm:$0xff]
    %735 = vrot.lane.b32.xlu0 %v613, 32
    %v736 = vpop.permute.xlu0 %735
    %v737 = vsel %vm288, %v736, 0
    %739 = vmatprep.subr.mxu0 0.0
    %740 = vmatpush1.msra.mxu0 0.0
    %741 = vmatprep.subr.mxu0 0.0
    %742 = vmatpush1.msra.mxu0 0.0
    %743 = vmatprep.subr.mxu0 0.0
    %744 = vmatpush1.msra.mxu0 0.0
    %745 = vmatprep.subr.mxu0 0.0
    %746 = vmatpush1.msra.mxu0 0.0
    %747 = vmatprep.subr.mxu0 0.0
    %748 = vmatpush1.msra.mxu0 0.0
    %749 = vmatprep.subr.mxu0 0.0
    %750 = vmatpush1.msra.mxu0 0.0
    %751 = vmatprep.subr.mxu0 0.0
    %752 = vmatpush1.msra.mxu0 0.0
    %753 = vmatprep.subr.mxu0 0.0
    %754 = vmatpush1.msra.mxu0 0.0
    %755 = vmatprep.subr.mxu0 0.0
    %756 = vmatpush1.msra.mxu0 0.0
    %757 = vmatprep.subr.mxu0 0.0
    %758 = vmatpush1.msra.mxu0 0.0
    %759 = vmatprep.subr.mxu0 0.0
    %760 = vmatpush1.msra.mxu0 0.0
    %761 = vmatprep.subr.mxu0 0.0
    %762 = vmatpush1.msra.mxu0 0.0
    %763 = vmatprep.subr.mxu0 0.0
    %764 = vmatpush1.msra.mxu0 %v282
    %765 = vmatprep.subr.mxu0 0.0
    %766 = vmatpush1.msra.mxu0 %v281
    %767 = vmatprep.subr.mxu0 0.0
    %768 = vmatpush1.msra.mxu0 %v280
    %769 = vmatprep.subr.mxu0 0.0
    %770 = vmatpush1.msra.mxu0 %v279
    %771 = vmatprep.subr.mxu0 0.0
    %772 = vmatpush2.msra.mxu0 0.0
    %773 = vmatprep.subr.mxu0 0.0
    %774 = vmatpush2.msra.mxu0 0.0
    %775 = vmatprep.subr.mxu0 0.0
    %776 = vmatpush2.msra.mxu0 0.0
    %777 = vmatprep.subr.mxu0 0.0
    %778 = vmatpush2.msra.mxu0 0.0
    %779 = vmatprep.subr.mxu0 0.0
    %780 = vmatpush2.msra.mxu0 0.0
    %781 = vmatprep.subr.mxu0 0.0
    %782 = vmatpush2.msra.mxu0 0.0
    %783 = vmatprep.subr.mxu0 0.0
    %784 = vmatpush2.msra.mxu0 0.0
    %785 = vmatprep.subr.mxu0 0.0
    %786 = vmatpush2.msra.mxu0 0.0
    %787 = vmatprep.subr.mxu0 0.0
    %788 = vmatpush2.msra.mxu0 0.0
    %789 = vmatprep.subr.mxu0 0.0
    %790 = vmatpush2.msra.mxu0 0.0
    %791 = vmatprep.subr.mxu0 0.0
    %792 = vmatpush2.msra.mxu0 0.0
    %793 = vmatprep.subr.mxu0 0.0
    %794 = vmatpush2.msra.mxu0 0.0
    %795 = vmatprep.subr.mxu0 0.0
    %796 = vmatpush2.msra.mxu0 0.0
    %797 = vmatprep.subr.mxu0 0.0
    %798 = vmatpush2.msra.mxu0 0.0
    %799 = vmatprep.subr.mxu0 0.0
    %800 = vmatpush2.msra.mxu0 0.0
    %801 = vmatprep.subr.mxu0 0.0
    %802 = vmatpush2.msra.mxu0 0.0
    %803 = vmatprep.mubr.f32.mxu0 0.0
    %804 = vmatmul.mubr.f32.gmra.mxu0 %v737
    %v805 = vpop.f32.mrf.mxu0
    %v806 = vadd.f32 0.0, %v805
    %v807 = vpop.f32.mrf.mxu0
    %808 = vdwg.mxu0
    %v809 = vadd.f32 %v733, %v806
    %v810 = vxor.u32 %v809, 2147483648
    %v811 = vmul.f32 %v810, 1.442695
    %v812 = vpow.pop %v811
    %v813 = vadd.f32 %v812, 1.0
    %v814 = vrcp.pop %v813
    %v815 = vmul.f32 1.0, %v814
    %v816 = vtanh.pop %v809
    %v817 = vmul.f32 %v815, %v614
    %819 = vrot.lane.b32.xlu0 %v816, 64
    %v820 = vpop.permute.xlu0 %819
    %v822 = vmul.f32 %v815, %v820
    %824 = vrot.lane.b32.xlu0 %v822, 32
    %v825 = vpop.permute.xlu0 %824
    %v827 = vadd.f32 %v817, %v825
    %v828 = vtanh.pop %v827
    %830 = vrot.lane.b32.xlu0 %v828, 64
    %v831 = vpop.permute.xlu0 %830
    %v833 = vmul.f32 %v815, %v831
    %vm834 = vcmp.gt.s32.totalorder %v100, 2
    %v835 = vsel %vm834, 1, 0
    %836 = vset.pattern.permute.xlu0 0
    %837 = vperm.xlu0 %836, %v835
    %v838 = vpop.permute.xlu0 %837
    %vm839 = vcmp.eq.s32.totalorder %v838, 1
    %v840 = vsel %vm839, %v833, %v613
    %v841 = vsel %vm839, %v827, %v614
    %v842 = vld [vmem:[#allocation2 + $0x58] sm:$0xff]
    %844 = vrot.lane.b32.xlu0 %v719, 32
    %v845 = vpop.permute.xlu0 %844
    %v846 = vsel %vm288, %v845, 0
    %848 = vmatprep.subr.mxu0 0.0
    %849 = vmatpush1.msra.mxu0 0.0
    %850 = vmatprep.subr.mxu0 0.0
    %851 = vmatpush1.msra.mxu0 0.0
    %852 = vmatprep.subr.mxu0 0.0
    %853 = vmatpush1.msra.mxu0 0.0
    %854 = vmatprep.subr.mxu0 0.0
    %855 = vmatpush1.msra.mxu0 0.0
    %856 = vmatprep.subr.mxu0 0.0
    %857 = vmatpush1.msra.mxu0 0.0
    %858 = vmatprep.subr.mxu0 0.0
    %859 = vmatpush1.msra.mxu0 0.0
    %860 = vmatprep.subr.mxu0 0.0
    %861 = vmatpush1.msra.mxu0 0.0
    %862 = vmatprep.subr.mxu0 0.0
    %863 = vmatpush1.msra.mxu0 0.0
    %864 = vmatprep.subr.mxu0 0.0
    %865 = vmatpush1.msra.mxu0 0.0
    %866 = vmatprep.subr.mxu0 0.0
    %867 = vmatpush1.msra.mxu0 0.0
    %868 = vmatprep.subr.mxu0 0.0
    %869 = vmatpush1.msra.mxu0 0.0
    %870 = vmatprep.subr.mxu0 0.0
    %871 = vmatpush1.msra.mxu0 0.0
    %872 = vmatprep.subr.mxu0 0.0
    %873 = vmatpush1.msra.mxu0 %v286
    %874 = vmatprep.subr.mxu0 0.0
    %875 = vmatpush1.msra.mxu0 %v285
    %876 = vmatprep.subr.mxu0 0.0
    %877 = vmatpush1.msra.mxu0 %v284
    %878 = vmatprep.subr.mxu0 0.0
    %879 = vmatpush1.msra.mxu0 %v283
    %880 = vmatprep.subr.mxu0 0.0
    %881 = vmatpush2.msra.mxu0 0.0
    %882 = vmatprep.subr.mxu0 0.0
    %883 = vmatpush2.msra.mxu0 0.0
    %884 = vmatprep.subr.mxu0 0.0
    %885 = vmatpush2.msra.mxu0 0.0
    %886 = vmatprep.subr.mxu0 0.0
    %887 = vmatpush2.msra.mxu0 0.0
    %888 = vmatprep.subr.mxu0 0.0
    %889 = vmatpush2.msra.mxu0 0.0
    %890 = vmatprep.subr.mxu0 0.0
    %891 = vmatpush2.msra.mxu0 0.0
    %892 = vmatprep.subr.mxu0 0.0
    %893 = vmatpush2.msra.mxu0 0.0
    %894 = vmatprep.subr.mxu0 0.0
    %895 = vmatpush2.msra.mxu0 0.0
    %896 = vmatprep.subr.mxu0 0.0
    %897 = vmatpush2.msra.mxu0 0.0
    %898 = vmatprep.subr.mxu0 0.0
    %899 = vmatpush2.msra.mxu0 0.0
    %900 = vmatprep.subr.mxu0 0.0
    %901 = vmatpush2.msra.mxu0 0.0
    %902 = vmatprep.subr.mxu0 0.0
    %903 = vmatpush2.msra.mxu0 0.0
    %904 = vmatprep.subr.mxu0 0.0
    %905 = vmatpush2.msra.mxu0 0.0
    %906 = vmatprep.subr.mxu0 0.0
    %907 = vmatpush2.msra.mxu0 0.0
    %908 = vmatprep.subr.mxu0 0.0
    %909 = vmatpush2.msra.mxu0 0.0
    %910 = vmatprep.subr.mxu0 0.0
    %911 = vmatpush2.msra.mxu0 0.0
    %912 = vmatprep.mubr.f32.mxu0 0.0
    %913 = vmatmul.mubr.f32.gmra.mxu0 %v846
    %v914 = vpop.f32.mrf.mxu0
    %v915 = vadd.f32 0.0, %v914
    %v916 = vpop.f32.mrf.mxu0
    %917 = vdwg.mxu0
    %v918 = vadd.f32 %v842, %v915
    %v919 = vxor.u32 %v918, 2147483648
    %v920 = vmul.f32 %v919, 1.442695
    %v921 = vpow.pop %v920
    %v922 = vadd.f32 %v921, 1.0
    %v923 = vrcp.pop %v922
    %v924 = vmul.f32 1.0, %v923
    %v925 = vtanh.pop %v918
    %v926 = vmul.f32 %v924, %v720
    %928 = vrot.lane.b32.xlu0 %v925, 64
    %v929 = vpop.permute.xlu0 %928
    %v931 = vmul.f32 %v924, %v929
    %933 = vrot.lane.b32.xlu0 %v931, 32
    %v934 = vpop.permute.xlu0 %933
    %v936 = vadd.f32 %v926, %v934
    %v937 = vtanh.pop %v936
    %939 = vrot.lane.b32.xlu0 %v937, 64
    %v940 = vpop.permute.xlu0 %939
    %v942 = vmul.f32 %v924, %v940
    %vm943 = vcmp.gt.s32.totalorder %v100, 5
    %v944 = vsel %vm943, 1, 0
    %945 = vset.pattern.permute.xlu0 0
    %946 = vperm.xlu0 %945, %v944
    %v947 = vpop.permute.xlu0 %946
    %vm948 = vcmp.eq.s32.totalorder %v947, 1
    %v949 = vsel %vm948, %v942, %v719
    %v950 = vsel %vm948, %v936, %v720
    %v951 = vsel %vm839, %v833, 0.0
    %953 = vrot.lane.b32.xlu0 %v951, 32
    %v954 = vpop.permute.xlu0 %953
    %956 = vst.msk [vmem:[#allocation3 + $0x10] sm:$0xff] %vm288, %v954
    %v957 = vsel %vm948, %v942, 0.0
    %959 = vrot.lane.b32.xlu0 %v957, 32
    %v960 = vpop.permute.xlu0 %959
    %962 = vst.msk [vmem:[#allocation4 + $0x28] sm:$0xff] %vm288, %v960
    %v963 = vld [vmem:[#allocation2 + $0x30] sm:$0xff]
    %965 = vrot.lane.b32.xlu0 %v840, 32
    %v966 = vpop.permute.xlu0 %965
    %v967 = vsel %vm288, %v966, 0
    %969 = vmatprep.subr.mxu0 0.0
    %970 = vmatpush1.msra.mxu0 0.0
    %971 = vmatprep.subr.mxu0 0.0
    %972 = vmatpush1.msra.mxu0 0.0
    %973 = vmatprep.subr.mxu0 0.0
    %974 = vmatpush1.msra.mxu0 0.0
    %975 = vmatprep.subr.mxu0 0.0
    %976 = vmatpush1.msra.mxu0 0.0
    %977 = vmatprep.subr.mxu0 0.0
    %978 = vmatpush1.msra.mxu0 0.0
    %979 = vmatprep.subr.mxu0 0.0
    %980 = vmatpush1.msra.mxu0 0.0
    %981 = vmatprep.subr.mxu0 0.0
    %982 = vmatpush1.msra.mxu0 0.0
    %983 = vmatprep.subr.mxu0 0.0
    %984 = vmatpush1.msra.mxu0 0.0
    %985 = vmatprep.subr.mxu0 0.0
    %986 = vmatpush1.msra.mxu0 0.0
    %987 = vmatprep.subr.mxu0 0.0
    %988 = vmatpush1.msra.mxu0 0.0
    %989 = vmatprep.subr.mxu0 0.0
    %990 = vmatpush1.msra.mxu0 0.0
    %991 = vmatprep.subr.mxu0 0.0
    %992 = vmatpush1.msra.mxu0 0.0
    %993 = vmatprep.subr.mxu0 0.0
    %994 = vmatpush1.msra.mxu0 %v282
    %995 = vmatprep.subr.mxu0 0.0
    %996 = vmatpush1.msra.mxu0 %v281
    %997 = vmatprep.subr.mxu0 0.0
    %998 = vmatpush1.msra.mxu0 %v280
    %999 = vmatprep.subr.mxu0 0.0
    %1000 = vmatpush1.msra.mxu0 %v279
    %1001 = vmatprep.subr.mxu0 0.0
    %1002 = vmatpush2.msra.mxu0 0.0
    %1003 = vmatprep.subr.mxu0 0.0
    %1004 = vmatpush2.msra.mxu0 0.0
    %1005 = vmatprep.subr.mxu0 0.0
    %1006 = vmatpush2.msra.mxu0 0.0
    %1007 = vmatprep.subr.mxu0 0.0
    %1008 = vmatpush2.msra.mxu0 0.0
    %1009 = vmatprep.subr.mxu0 0.0
    %1010 = vmatpush2.msra.mxu0 0.0
    %1011 = vmatprep.subr.mxu0 0.0
    %1012 = vmatpush2.msra.mxu0 0.0
    %1013 = vmatprep.subr.mxu0 0.0
    %1014 = vmatpush2.msra.mxu0 0.0
    %1015 = vmatprep.subr.mxu0 0.0
    %1016 = vmatpush2.msra.mxu0 0.0
    %1017 = vmatprep.subr.mxu0 0.0
    %1018 = vmatpush2.msra.mxu0 0.0
    %1019 = vmatprep.subr.mxu0 0.0
    %1020 = vmatpush2.msra.mxu0 0.0
    %1021 = vmatprep.subr.mxu0 0.0
    %1022 = vmatpush2.msra.mxu0 0.0
    %1023 = vmatprep.subr.mxu0 0.0
    %1024 = vmatpush2.msra.mxu0 0.0
    %1025 = vmatprep.subr.mxu0 0.0
    %1026 = vmatpush2.msra.mxu0 0.0
    %1027 = vmatprep.subr.mxu0 0.0
    %1028 = vmatpush2.msra.mxu0 0.0
    %1029 = vmatprep.subr.mxu0 0.0
    %1030 = vmatpush2.msra.mxu0 0.0
    %1031 = vmatprep.subr.mxu0 0.0
    %1032 = vmatpush2.msra.mxu0 0.0
    %1033 = vmatprep.mubr.f32.mxu0 0.0
    %1034 = vmatmul.mubr.f32.gmra.mxu0 %v967
    %v1035 = vpop.f32.mrf.mxu0
    %v1036 = vadd.f32 0.0, %v1035
    %v1037 = vpop.f32.mrf.mxu0
    %1038 = vdwg.mxu0
    %v1039 = vadd.f32 %v963, %v1036
    %v1040 = vxor.u32 %v1039, 2147483648
    %v1041 = vmul.f32 %v1040, 1.442695
    %v1042 = vpow.pop %v1041
    %v1043 = vadd.f32 %v1042, 1.0
    %v1044 = vrcp.pop %v1043
    %v1045 = vmul.f32 1.0, %v1044
    %v1046 = vtanh.pop %v1039
    %v1047 = vmul.f32 %v1045, %v841
    %1049 = vrot.lane.b32.xlu0 %v1046, 64
    %v1050 = vpop.permute.xlu0 %1049
    %v1052 = vmul.f32 %v1045, %v1050
    %1054 = vrot.lane.b32.xlu0 %v1052, 32
    %v1055 = vpop.permute.xlu0 %1054
    %v1057 = vadd.f32 %v1047, %v1055
    %v1058 = vtanh.pop %v1057
    %1060 = vrot.lane.b32.xlu0 %v1058, 64
    %v1061 = vpop.permute.xlu0 %1060
    %v1063 = vmul.f32 %v1045, %v1061
    %vm1064 = vcmp.gt.s32.totalorder %v100, 3
    %v1065 = vsel %vm1064, 1, 0
    %1066 = vset.pattern.permute.xlu0 0
    %1067 = vperm.xlu0 %1066, %v1065
    %v1068 = vpop.permute.xlu0 %1067
    %vm1069 = vcmp.eq.s32.totalorder %v1068, 1
    %v1070 = vsel %vm1069, %v1063, %v840
    %v1071 = vsel %vm1069, %v1057, %v841
    %v1072 = vld [vmem:[#allocation2 + $0x48] sm:$0xff]
    %1074 = vrot.lane.b32.xlu0 %v949, 32
    %v1075 = vpop.permute.xlu0 %1074
    %v1076 = vsel %vm288, %v1075, 0
    %1078 = vmatprep.subr.mxu0 0.0
    %1079 = vmatpush1.msra.mxu0 0.0
    %1080 = vmatprep.subr.mxu0 0.0
    %1081 = vmatpush1.msra.mxu0 0.0
    %1082 = vmatprep.subr.mxu0 0.0
    %1083 = vmatpush1.msra.mxu0 0.0
    %1084 = vmatprep.subr.mxu0 0.0
    %1085 = vmatpush1.msra.mxu0 0.0
    %1086 = vmatprep.subr.mxu0 0.0
    %1087 = vmatpush1.msra.mxu0 0.0
    %1088 = vmatprep.subr.mxu0 0.0
    %1089 = vmatpush1.msra.mxu0 0.0
    %1090 = vmatprep.subr.mxu0 0.0
    %1091 = vmatpush1.msra.mxu0 0.0
    %1092 = vmatprep.subr.mxu0 0.0
    %1093 = vmatpush1.msra.mxu0 0.0
    %1094 = vmatprep.subr.mxu0 0.0
    %1095 = vmatpush1.msra.mxu0 0.0
    %1096 = vmatprep.subr.mxu0 0.0
    %1097 = vmatpush1.msra.mxu0 0.0
    %1098 = vmatprep.subr.mxu0 0.0
    %1099 = vmatpush1.msra.mxu0 0.0
    %1100 = vmatprep.subr.mxu0 0.0
    %1101 = vmatpush1.msra.mxu0 0.0
    %1102 = vmatprep.subr.mxu0 0.0
    %1103 = vmatpush1.msra.mxu0 %v286
    %1104 = vmatprep.subr.mxu0 0.0
    %1105 = vmatpush1.msra.mxu0 %v285
    %1106 = vmatprep.subr.mxu0 0.0
    %1107 = vmatpush1.msra.mxu0 %v284
    %1108 = vmatprep.subr.mxu0 0.0
    %1109 = vmatpush1.msra.mxu0 %v283
    %1110 = vmatprep.subr.mxu0 0.0
    %1111 = vmatpush2.msra.mxu0 0.0
    %1112 = vmatprep.subr.mxu0 0.0
    %1113 = vmatpush2.msra.mxu0 0.0
    %1114 = vmatprep.subr.mxu0 0.0
    %1115 = vmatpush2.msra.mxu0 0.0
    %1116 = vmatprep.subr.mxu0 0.0
    %1117 = vmatpush2.msra.mxu0 0.0
    %1118 = vmatprep.subr.mxu0 0.0
    %1119 = vmatpush2.msra.mxu0 0.0
    %1120 = vmatprep.subr.mxu0 0.0
    %1121 = vmatpush2.msra.mxu0 0.0
    %1122 = vmatprep.subr.mxu0 0.0
    %1123 = vmatpush2.msra.mxu0 0.0
    %1124 = vmatprep.subr.mxu0 0.0
    %1125 = vmatpush2.msra.mxu0 0.0
    %1126 = vmatprep.subr.mxu0 0.0
    %1127 = vmatpush2.msra.mxu0 0.0
    %1128 = vmatprep.subr.mxu0 0.0
    %1129 = vmatpush2.msra.mxu0 0.0
    %1130 = vmatprep.subr.mxu0 0.0
    %1131 = vmatpush2.msra.mxu0 0.0
    %1132 = vmatprep.subr.mxu0 0.0
    %1133 = vmatpush2.msra.mxu0 0.0
    %1134 = vmatprep.subr.mxu0 0.0
    %1135 = vmatpush2.msra.mxu0 0.0
    %1136 = vmatprep.subr.mxu0 0.0
    %1137 = vmatpush2.msra.mxu0 0.0
    %1138 = vmatprep.subr.mxu0 0.0
    %1139 = vmatpush2.msra.mxu0 0.0
    %1140 = vmatprep.subr.mxu0 0.0
    %1141 = vmatpush2.msra.mxu0 0.0
    %1142 = vmatprep.mubr.f32.mxu0 0.0
    %1143 = vmatmul.mubr.f32.gmra.mxu0 %v1076
    %v1144 = vpop.f32.mrf.mxu0
    %v1145 = vadd.f32 0.0, %v1144
    %v1146 = vpop.f32.mrf.mxu0
    %1147 = vdwg.mxu0
    %v1148 = vadd.f32 %v1072, %v1145
    %v1149 = vxor.u32 %v1148, 2147483648
    %v1150 = vmul.f32 %v1149, 1.442695
    %v1151 = vpow.pop %v1150
    %v1152 = vadd.f32 %v1151, 1.0
    %v1153 = vrcp.pop %v1152
    %v1154 = vmul.f32 1.0, %v1153
    %v1155 = vtanh.pop %v1148
    %v1156 = vmul.f32 %v1154, %v950
    %1158 = vrot.lane.b32.xlu0 %v1155, 64
    %v1159 = vpop.permute.xlu0 %1158
    %v1161 = vmul.f32 %v1154, %v1159
    %1163 = vrot.lane.b32.xlu0 %v1161, 32
    %v1164 = vpop.permute.xlu0 %1163
    %v1166 = vadd.f32 %v1156, %v1164
    %v1167 = vtanh.pop %v1166
    %1169 = vrot.lane.b32.xlu0 %v1167, 64
    %v1170 = vpop.permute.xlu0 %1169
    %v1172 = vmul.f32 %v1154, %v1170
    %vm1173 = vcmp.gt.s32.totalorder %v100, 4
    %v1174 = vsel %vm1173, 1, 0
    %1175 = vset.pattern.permute.xlu0 0
    %1176 = vperm.xlu0 %1175, %v1174
    %v1177 = vpop.permute.xlu0 %1176
    %vm1178 = vcmp.eq.s32.totalorder %v1177, 1
    %v1179 = vsel %vm1178, %v1172, %v949
    %v1180 = vsel %vm1178, %v1166, %v950
    %v1181 = vsel %vm1069, %v1063, 0.0
    %1183 = vrot.lane.b32.xlu0 %v1181, 32
    %v1184 = vpop.permute.xlu0 %1183
    %1186 = vst.msk [vmem:[#allocation3 + $0x18] sm:$0xff] %vm288, %v1184
    %v1187 = vsel %vm1178, %v1172, 0.0
    %1189 = vrot.lane.b32.xlu0 %v1187, 32
    %v1190 = vpop.permute.xlu0 %1189
    %1192 = vst.msk [vmem:[#allocation4 + $0x20] sm:$0xff] %vm288, %v1190
    %v1193 = vld [vmem:[#allocation2 + $0x40] sm:$0xff]
    %1195 = vrot.lane.b32.xlu0 %v1070, 32
    %v1196 = vpop.permute.xlu0 %1195
    %v1197 = vsel %vm288, %v1196, 0
    %1199 = vmatprep.subr.mxu0 0.0
    %1200 = vmatpush1.msra.mxu0 0.0
    %1201 = vmatprep.subr.mxu0 0.0
    %1202 = vmatpush1.msra.mxu0 0.0
    %1203 = vmatprep.subr.mxu0 0.0
    %1204 = vmatpush1.msra.mxu0 0.0
    %1205 = vmatprep.subr.mxu0 0.0
    %1206 = vmatpush1.msra.mxu0 0.0
    %1207 = vmatprep.subr.mxu0 0.0
    %1208 = vmatpush1.msra.mxu0 0.0
    %1209 = vmatprep.subr.mxu0 0.0
    %1210 = vmatpush1.msra.mxu0 0.0
    %1211 = vmatprep.subr.mxu0 0.0
    %1212 = vmatpush1.msra.mxu0 0.0
    %1213 = vmatprep.subr.mxu0 0.0
    %1214 = vmatpush1.msra.mxu0 0.0
    %1215 = vmatprep.subr.mxu0 0.0
    %1216 = vmatpush1.msra.mxu0 0.0
    %1217 = vmatprep.subr.mxu0 0.0
    %1218 = vmatpush1.msra.mxu0 0.0
    %1219 = vmatprep.subr.mxu0 0.0
    %1220 = vmatpush1.msra.mxu0 0.0
    %1221 = vmatprep.subr.mxu0 0.0
    %1222 = vmatpush1.msra.mxu0 0.0
    %1223 = vmatprep.subr.mxu0 0.0
    %1224 = vmatpush1.msra.mxu0 %v282
    %1225 = vmatprep.subr.mxu0 0.0
    %1226 = vmatpush1.msra.mxu0 %v281
    %1227 = vmatprep.subr.mxu0 0.0
    %1228 = vmatpush1.msra.mxu0 %v280
    %1229 = vmatprep.subr.mxu0 0.0
    %1230 = vmatpush1.msra.mxu0 %v279
    %1231 = vmatprep.subr.mxu0 0.0
    %1232 = vmatpush2.msra.mxu0 0.0
    %1233 = vmatprep.subr.mxu0 0.0
    %1234 = vmatpush2.msra.mxu0 0.0
    %1235 = vmatprep.subr.mxu0 0.0
    %1236 = vmatpush2.msra.mxu0 0.0
    %1237 = vmatprep.subr.mxu0 0.0
    %1238 = vmatpush2.msra.mxu0 0.0
    %1239 = vmatprep.subr.mxu0 0.0
    %1240 = vmatpush2.msra.mxu0 0.0
    %1241 = vmatprep.subr.mxu0 0.0
    %1242 = vmatpush2.msra.mxu0 0.0
    %1243 = vmatprep.subr.mxu0 0.0
    %1244 = vmatpush2.msra.mxu0 0.0
    %1245 = vmatprep.subr.mxu0 0.0
    %1246 = vmatpush2.msra.mxu0 0.0
    %1247 = vmatprep.subr.mxu0 0.0
    %1248 = vmatpush2.msra.mxu0 0.0
    %1249 = vmatprep.subr.mxu0 0.0
    %1250 = vmatpush2.msra.mxu0 0.0
    %1251 = vmatprep.subr.mxu0 0.0
    %1252 = vmatpush2.msra.mxu0 0.0
    %1253 = vmatprep.subr.mxu0 0.0
    %1254 = vmatpush2.msra.mxu0 0.0
    %1255 = vmatprep.subr.mxu0 0.0
    %1256 = vmatpush2.msra.mxu0 0.0
    %1257 = vmatprep.subr.mxu0 0.0
    %1258 = vmatpush2.msra.mxu0 0.0
    %1259 = vmatprep.subr.mxu0 0.0
    %1260 = vmatpush2.msra.mxu0 0.0
    %1261 = vmatprep.subr.mxu0 0.0
    %1262 = vmatpush2.msra.mxu0 0.0
    %1263 = vmatprep.mubr.f32.mxu0 0.0
    %1264 = vmatmul.mubr.f32.gmra.mxu0 %v1197
    %v1265 = vpop.f32.mrf.mxu0
    %v1266 = vadd.f32 0.0, %v1265
    %v1267 = vpop.f32.mrf.mxu0
    %1268 = vdwg.mxu0
    %v1269 = vadd.f32 %v1193, %v1266
    %v1270 = vxor.u32 %v1269, 2147483648
    %v1271 = vmul.f32 %v1270, 1.442695
    %v1272 = vpow.pop %v1271
    %v1273 = vadd.f32 %v1272, 1.0
    %v1274 = vrcp.pop %v1273
    %v1275 = vmul.f32 1.0, %v1274
    %v1276 = vtanh.pop %v1269
    %v1277 = vmul.f32 %v1275, %v1071
    %1279 = vrot.lane.b32.xlu0 %v1276, 64
    %v1280 = vpop.permute.xlu0 %1279
    %v1282 = vmul.f32 %v1275, %v1280
    %1284 = vrot.lane.b32.xlu0 %v1282, 32
    %v1285 = vpop.permute.xlu0 %1284
    %v1287 = vadd.f32 %v1277, %v1285
    %v1288 = vtanh.pop %v1287
    %1290 = vrot.lane.b32.xlu0 %v1288, 64
    %v1291 = vpop.permute.xlu0 %1290
    %v1293 = vmul.f32 %v1275, %v1291
    %v1294 = vsel %vm1178, %v1293, %v1070
    %v1295 = vsel %vm1178, %v1287, %v1071
    %v1296 = vld [vmem:[#allocation2 + $0x38] sm:$0xff]
    %1298 = vrot.lane.b32.xlu0 %v1179, 32
    %v1299 = vpop.permute.xlu0 %1298
    %v1300 = vsel %vm288, %v1299, 0
    %1302 = vmatprep.subr.mxu0 0.0
    %1303 = vmatpush1.msra.mxu0 0.0
    %1304 = vmatprep.subr.mxu0 0.0
    %1305 = vmatpush1.msra.mxu0 0.0
    %1306 = vmatprep.subr.mxu0 0.0
    %1307 = vmatpush1.msra.mxu0 0.0
    %1308 = vmatprep.subr.mxu0 0.0
    %1309 = vmatpush1.msra.mxu0 0.0
    %1310 = vmatprep.subr.mxu0 0.0
    %1311 = vmatpush1.msra.mxu0 0.0
    %1312 = vmatprep.subr.mxu0 0.0
    %1313 = vmatpush1.msra.mxu0 0.0
    %1314 = vmatprep.subr.mxu0 0.0
    %1315 = vmatpush1.msra.mxu0 0.0
    %1316 = vmatprep.subr.mxu0 0.0
    %1317 = vmatpush1.msra.mxu0 0.0
    %1318 = vmatprep.subr.mxu0 0.0
    %1319 = vmatpush1.msra.mxu0 0.0
    %1320 = vmatprep.subr.mxu0 0.0
    %1321 = vmatpush1.msra.mxu0 0.0
    %1322 = vmatprep.subr.mxu0 0.0
    %1323 = vmatpush1.msra.mxu0 0.0
    %1324 = vmatprep.subr.mxu0 0.0
    %1325 = vmatpush1.msra.mxu0 0.0
    %1326 = vmatprep.subr.mxu0 0.0
    %1327 = vmatpush1.msra.mxu0 %v286
    %1328 = vmatprep.subr.mxu0 0.0
    %1329 = vmatpush1.msra.mxu0 %v285
    %1330 = vmatprep.subr.mxu0 0.0
    %1331 = vmatpush1.msra.mxu0 %v284
    %1332 = vmatprep.subr.mxu0 0.0
    %1333 = vmatpush1.msra.mxu0 %v283
    %1334 = vmatprep.subr.mxu0 0.0
    %1335 = vmatpush2.msra.mxu0 0.0
    %1336 = vmatprep.subr.mxu0 0.0
    %1337 = vmatpush2.msra.mxu0 0.0
    %1338 = vmatprep.subr.mxu0 0.0
    %1339 = vmatpush2.msra.mxu0 0.0
    %1340 = vmatprep.subr.mxu0 0.0
    %1341 = vmatpush2.msra.mxu0 0.0
    %1342 = vmatprep.subr.mxu0 0.0
    %1343 = vmatpush2.msra.mxu0 0.0
    %1344 = vmatprep.subr.mxu0 0.0
    %1345 = vmatpush2.msra.mxu0 0.0
    %1346 = vmatprep.subr.mxu0 0.0
    %1347 = vmatpush2.msra.mxu0 0.0
    %1348 = vmatprep.subr.mxu0 0.0
    %1349 = vmatpush2.msra.mxu0 0.0
    %1350 = vmatprep.subr.mxu0 0.0
    %1351 = vmatpush2.msra.mxu0 0.0
    %1352 = vmatprep.subr.mxu0 0.0
    %1353 = vmatpush2.msra.mxu0 0.0
    %1354 = vmatprep.subr.mxu0 0.0
    %1355 = vmatpush2.msra.mxu0 0.0
    %1356 = vmatprep.subr.mxu0 0.0
    %1357 = vmatpush2.msra.mxu0 0.0
    %1358 = vmatprep.subr.mxu0 0.0
    %1359 = vmatpush2.msra.mxu0 0.0
    %1360 = vmatprep.subr.mxu0 0.0
    %1361 = vmatpush2.msra.mxu0 0.0
    %1362 = vmatprep.subr.mxu0 0.0
    %1363 = vmatpush2.msra.mxu0 0.0
    %1364 = vmatprep.subr.mxu0 0.0
    %1365 = vmatpush2.msra.mxu0 0.0
    %1366 = vmatprep.mubr.f32.mxu0 0.0
    %1367 = vmatmul.mubr.f32.gmra.mxu0 %v1300
    %v1368 = vpop.f32.mrf.mxu0
    %v1369 = vadd.f32 0.0, %v1368
    %v1370 = vpop.f32.mrf.mxu0
    %1371 = vdwg.mxu0
    %v1372 = vadd.f32 %v1296, %v1369
    %v1373 = vxor.u32 %v1372, 2147483648
    %v1374 = vmul.f32 %v1373, 1.442695
    %v1375 = vpow.pop %v1374
    %v1376 = vadd.f32 %v1375, 1.0
    %v1377 = vrcp.pop %v1376
    %v1378 = vmul.f32 1.0, %v1377
    %v1379 = vtanh.pop %v1372
    %v1380 = vmul.f32 %v1378, %v1180
    %1382 = vrot.lane.b32.xlu0 %v1379, 64
    %v1383 = vpop.permute.xlu0 %1382
    %v1385 = vmul.f32 %v1378, %v1383
    %1387 = vrot.lane.b32.xlu0 %v1385, 32
    %v1388 = vpop.permute.xlu0 %1387
    %v1390 = vadd.f32 %v1380, %v1388
    %v1391 = vtanh.pop %v1390
    %1393 = vrot.lane.b32.xlu0 %v1391, 64
    %v1394 = vpop.permute.xlu0 %1393
    %v1396 = vmul.f32 %v1378, %v1394
    %v1397 = vsel %vm1069, %v1396, %v1179
    %v1398 = vsel %vm1069, %v1390, %v1180
    %v1399 = vsel %vm1178, %v1293, 0.0
    %1401 = vrot.lane.b32.xlu0 %v1399, 32
    %v1402 = vpop.permute.xlu0 %1401
    %1404 = vst.msk [vmem:[#allocation3 + $0x20] sm:$0xff] %vm288, %v1402
    %v1405 = vsel %vm1069, %v1396, 0.0
    %1407 = vrot.lane.b32.xlu0 %v1405, 32
    %v1408 = vpop.permute.xlu0 %1407
    %1410 = vst.msk [vmem:[#allocation4 + $0x18] sm:$0xff] %vm288, %v1408
    %v1411 = vld [vmem:[#allocation2 + $0x50] sm:$0xff]
    %1413 = vrot.lane.b32.xlu0 %v1294, 32
    %v1414 = vpop.permute.xlu0 %1413
    %v1415 = vsel %vm288, %v1414, 0
    %1417 = vmatprep.subr.mxu0 0.0
    %1418 = vmatpush1.msra.mxu0 0.0
    %1419 = vmatprep.subr.mxu0 0.0
    %1420 = vmatpush1.msra.mxu0 0.0
    %1421 = vmatprep.subr.mxu0 0.0
    %1422 = vmatpush1.msra.mxu0 0.0
    %1423 = vmatprep.subr.mxu0 0.0
    %1424 = vmatpush1.msra.mxu0 0.0
    %1425 = vmatprep.subr.mxu0 0.0
    %1426 = vmatpush1.msra.mxu0 0.0
    %1427 = vmatprep.subr.mxu0 0.0
    %1428 = vmatpush1.msra.mxu0 0.0
    %1429 = vmatprep.subr.mxu0 0.0
    %1430 = vmatpush1.msra.mxu0 0.0
    %1431 = vmatprep.subr.mxu0 0.0
    %1432 = vmatpush1.msra.mxu0 0.0
    %1433 = vmatprep.subr.mxu0 0.0
    %1434 = vmatpush1.msra.mxu0 0.0
    %1435 = vmatprep.subr.mxu0 0.0
    %1436 = vmatpush1.msra.mxu0 0.0
    %1437 = vmatprep.subr.mxu0 0.0
    %1438 = vmatpush1.msra.mxu0 0.0
    %1439 = vmatprep.subr.mxu0 0.0
    %1440 = vmatpush1.msra.mxu0 0.0
    %1441 = vmatprep.subr.mxu0 0.0
    %1442 = vmatpush1.msra.mxu0 %v282
    %1443 = vmatprep.subr.mxu0 0.0
    %1444 = vmatpush1.msra.mxu0 %v281
    %1445 = vmatprep.subr.mxu0 0.0
    %1446 = vmatpush1.msra.mxu0 %v280
    %1447 = vmatprep.subr.mxu0 0.0
    %1448 = vmatpush1.msra.mxu0 %v279
    %1449 = vmatprep.subr.mxu0 0.0
    %1450 = vmatpush2.msra.mxu0 0.0
    %1451 = vmatprep.subr.mxu0 0.0
    %1452 = vmatpush2.msra.mxu0 0.0
    %1453 = vmatprep.subr.mxu0 0.0
    %1454 = vmatpush2.msra.mxu0 0.0
    %1455 = vmatprep.subr.mxu0 0.0
    %1456 = vmatpush2.msra.mxu0 0.0
    %1457 = vmatprep.subr.mxu0 0.0
    %1458 = vmatpush2.msra.mxu0 0.0
    %1459 = vmatprep.subr.mxu0 0.0
    %1460 = vmatpush2.msra.mxu0 0.0
    %1461 = vmatprep.subr.mxu0 0.0
    %1462 = vmatpush2.msra.mxu0 0.0
    %1463 = vmatprep.subr.mxu0 0.0
    %1464 = vmatpush2.msra.mxu0 0.0
    %1465 = vmatprep.subr.mxu0 0.0
    %1466 = vmatpush2.msra.mxu0 0.0
    %1467 = vmatprep.subr.mxu0 0.0
    %1468 = vmatpush2.msra.mxu0 0.0
    %1469 = vmatprep.subr.mxu0 0.0
    %1470 = vmatpush2.msra.mxu0 0.0
    %1471 = vmatprep.subr.mxu0 0.0
    %1472 = vmatpush2.msra.mxu0 0.0
    %1473 = vmatprep.subr.mxu0 0.0
    %1474 = vmatpush2.msra.mxu0 0.0
    %1475 = vmatprep.subr.mxu0 0.0
    %1476 = vmatpush2.msra.mxu0 0.0
    %1477 = vmatprep.subr.mxu0 0.0
    %1478 = vmatpush2.msra.mxu0 0.0
    %1479 = vmatprep.subr.mxu0 0.0
    %1480 = vmatpush2.msra.mxu0 0.0
    %1481 = vmatprep.mubr.f32.mxu0 0.0
    %1482 = vmatmul.mubr.f32.gmra.mxu0 %v1415
    %v1483 = vpop.f32.mrf.mxu0
    %v1484 = vadd.f32 0.0, %v1483
    %v1485 = vpop.f32.mrf.mxu0
    %1486 = vdwg.mxu0
    %v1487 = vadd.f32 %v1411, %v1484
    %v1488 = vxor.u32 %v1487, 2147483648
    %v1489 = vmul.f32 %v1488, 1.442695
    %v1490 = vpow.pop %v1489
    %v1491 = vadd.f32 %v1490, 1.0
    %v1492 = vrcp.pop %v1491
    %v1493 = vmul.f32 1.0, %v1492
    %v1494 = vtanh.pop %v1487
    %v1495 = vmul.f32 %v1493, %v1295
    %1497 = vrot.lane.b32.xlu0 %v1494, 64
    %v1498 = vpop.permute.xlu0 %1497
    %v1500 = vmul.f32 %v1493, %v1498
    %1502 = vrot.lane.b32.xlu0 %v1500, 32
    %v1503 = vpop.permute.xlu0 %1502
    %v1505 = vadd.f32 %v1495, %v1503
    %v1506 = vtanh.pop %v1505
    %1508 = vrot.lane.b32.xlu0 %v1506, 64
    %v1509 = vpop.permute.xlu0 %1508
    %v1511 = vmul.f32 %v1493, %v1509
    %v1512 = vsel %vm948, %v1511, %v1294
    %v1513 = vsel %vm948, %v1505, %v1295
    %v1514 = vld [vmem:[#allocation2 + $0x28] sm:$0xff]
    %1516 = vrot.lane.b32.xlu0 %v1397, 32
    %v1517 = vpop.permute.xlu0 %1516
    %v1518 = vsel %vm288, %v1517, 0
    %1520 = vmatprep.subr.mxu0 0.0
    %1521 = vmatpush1.msra.mxu0 0.0
    %1522 = vmatprep.subr.mxu0 0.0
    %1523 = vmatpush1.msra.mxu0 0.0
    %1524 = vmatprep.subr.mxu0 0.0
    %1525 = vmatpush1.msra.mxu0 0.0
    %1526 = vmatprep.subr.mxu0 0.0
    %1527 = vmatpush1.msra.mxu0 0.0
    %1528 = vmatprep.subr.mxu0 0.0
    %1529 = vmatpush1.msra.mxu0 0.0
    %1530 = vmatprep.subr.mxu0 0.0
    %1531 = vmatpush1.msra.mxu0 0.0
    %1532 = vmatprep.subr.mxu0 0.0
    %1533 = vmatpush1.msra.mxu0 0.0
    %1534 = vmatprep.subr.mxu0 0.0
    %1535 = vmatpush1.msra.mxu0 0.0
    %1536 = vmatprep.subr.mxu0 0.0
    %1537 = vmatpush1.msra.mxu0 0.0
    %1538 = vmatprep.subr.mxu0 0.0
    %1539 = vmatpush1.msra.mxu0 0.0
    %1540 = vmatprep.subr.mxu0 0.0
    %1541 = vmatpush1.msra.mxu0 0.0
    %1542 = vmatprep.subr.mxu0 0.0
    %1543 = vmatpush1.msra.mxu0 0.0
    %1544 = vmatprep.subr.mxu0 0.0
    %1545 = vmatpush1.msra.mxu0 %v286
    %1546 = vmatprep.subr.mxu0 0.0
    %1547 = vmatpush1.msra.mxu0 %v285
    %1548 = vmatprep.subr.mxu0 0.0
    %1549 = vmatpush1.msra.mxu0 %v284
    %1550 = vmatprep.subr.mxu0 0.0
    %1551 = vmatpush1.msra.mxu0 %v283
    %1552 = vmatprep.subr.mxu0 0.0
    %1553 = vmatpush2.msra.mxu0 0.0
    %1554 = vmatprep.subr.mxu0 0.0
    %1555 = vmatpush2.msra.mxu0 0.0
    %1556 = vmatprep.subr.mxu0 0.0
    %1557 = vmatpush2.msra.mxu0 0.0
    %1558 = vmatprep.subr.mxu0 0.0
    %1559 = vmatpush2.msra.mxu0 0.0
    %1560 = vmatprep.subr.mxu0 0.0
    %1561 = vmatpush2.msra.mxu0 0.0
    %1562 = vmatprep.subr.mxu0 0.0
    %1563 = vmatpush2.msra.mxu0 0.0
    %1564 = vmatprep.subr.mxu0 0.0
    %1565 = vmatpush2.msra.mxu0 0.0
    %1566 = vmatprep.subr.mxu0 0.0
    %1567 = vmatpush2.msra.mxu0 0.0
    %1568 = vmatprep.subr.mxu0 0.0
    %1569 = vmatpush2.msra.mxu0 0.0
    %1570 = vmatprep.subr.mxu0 0.0
    %1571 = vmatpush2.msra.mxu0 0.0
    %1572 = vmatprep.subr.mxu0 0.0
    %1573 = vmatpush2.msra.mxu0 0.0
    %1574 = vmatprep.subr.mxu0 0.0
    %1575 = vmatpush2.msra.mxu0 0.0
    %1576 = vmatprep.subr.mxu0 0.0
    %1577 = vmatpush2.msra.mxu0 0.0
    %1578 = vmatprep.subr.mxu0 0.0
    %1579 = vmatpush2.msra.mxu0 0.0
    %1580 = vmatprep.subr.mxu0 0.0
    %1581 = vmatpush2.msra.mxu0 0.0
    %1582 = vmatprep.subr.mxu0 0.0
    %1583 = vmatpush2.msra.mxu0 0.0
    %1584 = vmatprep.mubr.f32.mxu0 0.0
    %1585 = vmatmul.mubr.f32.gmra.mxu0 %v1518
    %v1586 = vpop.f32.mrf.mxu0
    %v1587 = vadd.f32 0.0, %v1586
    %v1588 = vpop.f32.mrf.mxu0
    %1589 = vdwg.mxu0
    %v1590 = vadd.f32 %v1514, %v1587
    %v1591 = vxor.u32 %v1590, 2147483648
    %v1592 = vmul.f32 %v1591, 1.442695
    %v1593 = vpow.pop %v1592
    %v1594 = vadd.f32 %v1593, 1.0
    %v1595 = vrcp.pop %v1594
    %v1596 = vmul.f32 1.0, %v1595
    %v1597 = vtanh.pop %v1590
    %v1598 = vmul.f32 %v1596, %v1398
    %1600 = vrot.lane.b32.xlu0 %v1597, 64
    %v1601 = vpop.permute.xlu0 %1600
    %v1603 = vmul.f32 %v1596, %v1601
    %1605 = vrot.lane.b32.xlu0 %v1603, 32
    %v1606 = vpop.permute.xlu0 %1605
    %v1608 = vadd.f32 %v1598, %v1606
    %v1609 = vtanh.pop %v1608
    %1611 = vrot.lane.b32.xlu0 %v1609, 64
    %v1612 = vpop.permute.xlu0 %1611
    %v1614 = vmul.f32 %v1596, %v1612
    %v1615 = vsel %vm839, %v1614, %v1397
    %v1616 = vsel %vm839, %v1608, %v1398
    %v1617 = vsel %vm948, %v1511, 0.0
    %1619 = vrot.lane.b32.xlu0 %v1617, 32
    %v1620 = vpop.permute.xlu0 %1619
    %1622 = vst.msk [vmem:[#allocation3 + $0x28] sm:$0xff] %vm288, %v1620
    %v1623 = vsel %vm839, %v1614, 0.0
    %1625 = vrot.lane.b32.xlu0 %v1623, 32
    %v1626 = vpop.permute.xlu0 %1625
    %1628 = vst.msk [vmem:[#allocation4 + $0x10] sm:$0xff] %vm288, %v1626
    %v1629 = vld [vmem:[#allocation2 + $0x60] sm:$0xff]
    %1631 = vrot.lane.b32.xlu0 %v1512, 32
    %v1632 = vpop.permute.xlu0 %1631
    %v1633 = vsel %vm288, %v1632, 0
    %1635 = vmatprep.subr.mxu0 0.0
    %1636 = vmatpush1.msra.mxu0 0.0
    %1637 = vmatprep.subr.mxu0 0.0
    %1638 = vmatpush1.msra.mxu0 0.0
    %1639 = vmatprep.subr.mxu0 0.0
    %1640 = vmatpush1.msra.mxu0 0.0
    %1641 = vmatprep.subr.mxu0 0.0
    %1642 = vmatpush1.msra.mxu0 0.0
    %1643 = vmatprep.subr.mxu0 0.0
    %1644 = vmatpush1.msra.mxu0 0.0
    %1645 = vmatprep.subr.mxu0 0.0
    %1646 = vmatpush1.msra.mxu0 0.0
    %1647 = vmatprep.subr.mxu0 0.0
    %1648 = vmatpush1.msra.mxu0 0.0
    %1649 = vmatprep.subr.mxu0 0.0
    %1650 = vmatpush1.msra.mxu0 0.0
    %1651 = vmatprep.subr.mxu0 0.0
    %1652 = vmatpush1.msra.mxu0 0.0
    %1653 = vmatprep.subr.mxu0 0.0
    %1654 = vmatpush1.msra.mxu0 0.0
    %1655 = vmatprep.subr.mxu0 0.0
    %1656 = vmatpush1.msra.mxu0 0.0
    %1657 = vmatprep.subr.mxu0 0.0
    %1658 = vmatpush1.msra.mxu0 0.0
    %1659 = vmatprep.subr.mxu0 0.0
    %1660 = vmatpush1.msra.mxu0 %v282
    %1661 = vmatprep.subr.mxu0 0.0
    %1662 = vmatpush1.msra.mxu0 %v281
    %1663 = vmatprep.subr.mxu0 0.0
    %1664 = vmatpush1.msra.mxu0 %v280
    %1665 = vmatprep.subr.mxu0 0.0
    %1666 = vmatpush1.msra.mxu0 %v279
    %1667 = vmatprep.subr.mxu0 0.0
    %1668 = vmatpush2.msra.mxu0 0.0
    %1669 = vmatprep.subr.mxu0 0.0
    %1670 = vmatpush2.msra.mxu0 0.0
    %1671 = vmatprep.subr.mxu0 0.0
    %1672 = vmatpush2.msra.mxu0 0.0
    %1673 = vmatprep.subr.mxu0 0.0
    %1674 = vmatpush2.msra.mxu0 0.0
    %1675 = vmatprep.subr.mxu0 0.0
    %1676 = vmatpush2.msra.mxu0 0.0
    %1677 = vmatprep.subr.mxu0 0.0
    %1678 = vmatpush2.msra.mxu0 0.0
    %1679 = vmatprep.subr.mxu0 0.0
    %1680 = vmatpush2.msra.mxu0 0.0
    %1681 = vmatprep.subr.mxu0 0.0
    %1682 = vmatpush2.msra.mxu0 0.0
    %1683 = vmatprep.subr.mxu0 0.0
    %1684 = vmatpush2.msra.mxu0 0.0
    %1685 = vmatprep.subr.mxu0 0.0
    %1686 = vmatpush2.msra.mxu0 0.0
    %1687 = vmatprep.subr.mxu0 0.0
    %1688 = vmatpush2.msra.mxu0 0.0
    %1689 = vmatprep.subr.mxu0 0.0
    %1690 = vmatpush2.msra.mxu0 0.0
    %1691 = vmatprep.subr.mxu0 0.0
    %1692 = vmatpush2.msra.mxu0 0.0
    %1693 = vmatprep.subr.mxu0 0.0
    %1694 = vmatpush2.msra.mxu0 0.0
    %1695 = vmatprep.subr.mxu0 0.0
    %1696 = vmatpush2.msra.mxu0 0.0
    %1697 = vmatprep.subr.mxu0 0.0
    %1698 = vmatpush2.msra.mxu0 0.0
    %1699 = vmatprep.mubr.f32.mxu0 0.0
    %1700 = vmatmul.mubr.f32.gmra.mxu0 %v1633
    %v1701 = vpop.f32.mrf.mxu0
    %v1702 = vadd.f32 0.0, %v1701
    %v1703 = vpop.f32.mrf.mxu0
    %1704 = vdwg.mxu0
    %v1705 = vadd.f32 %v1629, %v1702
    %v1706 = vxor.u32 %v1705, 2147483648
    %v1707 = vmul.f32 %v1706, 1.442695
    %v1708 = vpow.pop %v1707
    %v1709 = vadd.f32 %v1708, 1.0
    %v1710 = vrcp.pop %v1709
    %v1711 = vmul.f32 1.0, %v1710
    %v1712 = vtanh.pop %v1705
    %v1713 = vmul.f32 %v1711, %v1513
    %1715 = vrot.lane.b32.xlu0 %v1712, 64
    %v1716 = vpop.permute.xlu0 %1715
    %v1718 = vmul.f32 %v1711, %v1716
    %1720 = vrot.lane.b32.xlu0 %v1718, 32
    %v1721 = vpop.permute.xlu0 %1720
    %v1723 = vadd.f32 %v1713, %v1721
    %v1724 = vtanh.pop %v1723
    %1726 = vrot.lane.b32.xlu0 %v1724, 64
    %v1727 = vpop.permute.xlu0 %1726
    %v1729 = vmul.f32 %v1711, %v1727
    %v1730 = vsel %vm718, %v1729, %v1512
    %v1731 = vsel %vm718, %v1723, %v1513
    %v1732 = vld [vmem:[#allocation2 + $0x18] sm:$0xff]
    %1734 = vrot.lane.b32.xlu0 %v1615, 32
    %v1735 = vpop.permute.xlu0 %1734
    %v1736 = vsel %vm288, %v1735, 0
    %1738 = vmatprep.subr.mxu0 0.0
    %1739 = vmatpush1.msra.mxu0 0.0
    %1740 = vmatprep.subr.mxu0 0.0
    %1741 = vmatpush1.msra.mxu0 0.0
    %1742 = vmatprep.subr.mxu0 0.0
    %1743 = vmatpush1.msra.mxu0 0.0
    %1744 = vmatprep.subr.mxu0 0.0
    %1745 = vmatpush1.msra.mxu0 0.0
    %1746 = vmatprep.subr.mxu0 0.0
    %1747 = vmatpush1.msra.mxu0 0.0
    %1748 = vmatprep.subr.mxu0 0.0
    %1749 = vmatpush1.msra.mxu0 0.0
    %1750 = vmatprep.subr.mxu0 0.0
    %1751 = vmatpush1.msra.mxu0 0.0
    %1752 = vmatprep.subr.mxu0 0.0
    %1753 = vmatpush1.msra.mxu0 0.0
    %1754 = vmatprep.subr.mxu0 0.0
    %1755 = vmatpush1.msra.mxu0 0.0
    %1756 = vmatprep.subr.mxu0 0.0
    %1757 = vmatpush1.msra.mxu0 0.0
    %1758 = vmatprep.subr.mxu0 0.0
    %1759 = vmatpush1.msra.mxu0 0.0
    %1760 = vmatprep.subr.mxu0 0.0
    %1761 = vmatpush1.msra.mxu0 0.0
    %1762 = vmatprep.subr.mxu0 0.0
    %1763 = vmatpush1.msra.mxu0 %v286
    %1764 = vmatprep.subr.mxu0 0.0
    %1765 = vmatpush1.msra.mxu0 %v285
    %1766 = vmatprep.subr.mxu0 0.0
    %1767 = vmatpush1.msra.mxu0 %v284
    %1768 = vmatprep.subr.mxu0 0.0
    %1769 = vmatpush1.msra.mxu0 %v283
    %1770 = vmatprep.subr.mxu0 0.0
    %1771 = vmatpush2.msra.mxu0 0.0
    %1772 = vmatprep.subr.mxu0 0.0
    %1773 = vmatpush2.msra.mxu0 0.0
    %1774 = vmatprep.subr.mxu0 0.0
    %1775 = vmatpush2.msra.mxu0 0.0
    %1776 = vmatprep.subr.mxu0 0.0
    %1777 = vmatpush2.msra.mxu0 0.0
    %1778 = vmatprep.subr.mxu0 0.0
    %1779 = vmatpush2.msra.mxu0 0.0
    %1780 = vmatprep.subr.mxu0 0.0
    %1781 = vmatpush2.msra.mxu0 0.0
    %1782 = vmatprep.subr.mxu0 0.0
    %1783 = vmatpush2.msra.mxu0 0.0
    %1784 = vmatprep.subr.mxu0 0.0
    %1785 = vmatpush2.msra.mxu0 0.0
    %1786 = vmatprep.subr.mxu0 0.0
    %1787 = vmatpush2.msra.mxu0 0.0
    %1788 = vmatprep.subr.mxu0 0.0
    %1789 = vmatpush2.msra.mxu0 0.0
    %1790 = vmatprep.subr.mxu0 0.0
    %1791 = vmatpush2.msra.mxu0 0.0
    %1792 = vmatprep.subr.mxu0 0.0
    %1793 = vmatpush2.msra.mxu0 0.0
    %1794 = vmatprep.subr.mxu0 0.0
    %1795 = vmatpush2.msra.mxu0 0.0
    %1796 = vmatprep.subr.mxu0 0.0
    %1797 = vmatpush2.msra.mxu0 0.0
    %1798 = vmatprep.subr.mxu0 0.0
    %1799 = vmatpush2.msra.mxu0 0.0
    %1800 = vmatprep.subr.mxu0 0.0
    %1801 = vmatpush2.msra.mxu0 0.0
    %1802 = vmatprep.mubr.f32.mxu0 0.0
    %1803 = vmatmul.mubr.f32.gmra.mxu0 %v1736
    %v1804 = vpop.f32.mrf.mxu0
    %v1805 = vadd.f32 0.0, %v1804
    %v1806 = vpop.f32.mrf.mxu0
    %1807 = vdwg.mxu0
    %v1808 = vadd.f32 %v1732, %v1805
    %v1809 = vxor.u32 %v1808, 2147483648
    %v1810 = vmul.f32 %v1809, 1.442695
    %v1811 = vpow.pop %v1810
    %v1812 = vadd.f32 %v1811, 1.0
    %v1813 = vrcp.pop %v1812
    %v1814 = vmul.f32 1.0, %v1813
    %v1815 = vtanh.pop %v1808
    %v1816 = vmul.f32 %v1814, %v1616
    %1818 = vrot.lane.b32.xlu0 %v1815, 64
    %v1819 = vpop.permute.xlu0 %1818
    %v1821 = vmul.f32 %v1814, %v1819
    %1823 = vrot.lane.b32.xlu0 %v1821, 32
    %v1824 = vpop.permute.xlu0 %1823
    %v1826 = vadd.f32 %v1816, %v1824
    %v1827 = vtanh.pop %v1826
    %1829 = vrot.lane.b32.xlu0 %v1827, 64
    %v1830 = vpop.permute.xlu0 %1829
    %v1832 = vmul.f32 %v1814, %v1830
    %v1833 = vsel %vm612, %v1832, %v1615
    %v1834 = vsel %vm612, %v1826, %v1616
    %v1835 = vsel %vm718, %v1729, 0.0
    %1837 = vrot.lane.b32.xlu0 %v1835, 32
    %v1838 = vpop.permute.xlu0 %1837
    %1840 = vst.msk [vmem:[#allocation3 + $0x30] sm:$0xff] %vm288, %v1838
    %v1841 = vsel %vm612, %v1832, 0.0
    %1843 = vrot.lane.b32.xlu0 %v1841, 32
    %v1844 = vpop.permute.xlu0 %1843
    %1846 = vst.msk [vmem:[#allocation4 + $0x8] sm:$0xff] %vm288, %v1844
    %v1847 = vld [vmem:[#allocation2 + $0x70] sm:$0xff]
    %1849 = vrot.lane.b32.xlu0 %v1730, 32
    %v1850 = vpop.permute.xlu0 %1849
    %v1851 = vsel %vm288, %v1850, 0
    %1853 = vmatprep.subr.mxu0 0.0
    %1854 = vmatpush1.msra.mxu0 0.0
    %1855 = vmatprep.subr.mxu0 0.0
    %1856 = vmatpush1.msra.mxu0 0.0
    %1857 = vmatprep.subr.mxu0 0.0
    %1858 = vmatpush1.msra.mxu0 0.0
    %1859 = vmatprep.subr.mxu0 0.0
    %1860 = vmatpush1.msra.mxu0 0.0
    %1861 = vmatprep.subr.mxu0 0.0
    %1862 = vmatpush1.msra.mxu0 0.0
    %1863 = vmatprep.subr.mxu0 0.0
    %1864 = vmatpush1.msra.mxu0 0.0
    %1865 = vmatprep.subr.mxu0 0.0
    %1866 = vmatpush1.msra.mxu0 0.0
    %1867 = vmatprep.subr.mxu0 0.0
    %1868 = vmatpush1.msra.mxu0 0.0
    %1869 = vmatprep.subr.mxu0 0.0
    %1870 = vmatpush1.msra.mxu0 0.0
    %1871 = vmatprep.subr.mxu0 0.0
    %1872 = vmatpush1.msra.mxu0 0.0
    %1873 = vmatprep.subr.mxu0 0.0
    %1874 = vmatpush1.msra.mxu0 0.0
    %1875 = vmatprep.subr.mxu0 0.0
    %1876 = vmatpush1.msra.mxu0 0.0
    %1877 = vmatprep.subr.mxu0 0.0
    %1878 = vmatpush1.msra.mxu0 %v282
    %1879 = vmatprep.subr.mxu0 0.0
    %1880 = vmatpush1.msra.mxu0 %v281
    %1881 = vmatprep.subr.mxu0 0.0
    %1882 = vmatpush1.msra.mxu0 %v280
    %1883 = vmatprep.subr.mxu0 0.0
    %1884 = vmatpush1.msra.mxu0 %v279
    %1885 = vmatprep.subr.mxu0 0.0
    %1886 = vmatpush2.msra.mxu0 0.0
    %1887 = vmatprep.subr.mxu0 0.0
    %1888 = vmatpush2.msra.mxu0 0.0
    %1889 = vmatprep.subr.mxu0 0.0
    %1890 = vmatpush2.msra.mxu0 0.0
    %1891 = vmatprep.subr.mxu0 0.0
    %1892 = vmatpush2.msra.mxu0 0.0
    %1893 = vmatprep.subr.mxu0 0.0
    %1894 = vmatpush2.msra.mxu0 0.0
    %1895 = vmatprep.subr.mxu0 0.0
    %1896 = vmatpush2.msra.mxu0 0.0
    %1897 = vmatprep.subr.mxu0 0.0
    %1898 = vmatpush2.msra.mxu0 0.0
    %1899 = vmatprep.subr.mxu0 0.0
    %1900 = vmatpush2.msra.mxu0 0.0
    %1901 = vmatprep.subr.mxu0 0.0
    %1902 = vmatpush2.msra.mxu0 0.0
    %1903 = vmatprep.subr.mxu0 0.0
    %1904 = vmatpush2.msra.mxu0 0.0
    %1905 = vmatprep.subr.mxu0 0.0
    %1906 = vmatpush2.msra.mxu0 0.0
    %1907 = vmatprep.subr.mxu0 0.0
    %1908 = vmatpush2.msra.mxu0 0.0
    %1909 = vmatprep.subr.mxu0 0.0
    %1910 = vmatpush2.msra.mxu0 0.0
    %1911 = vmatprep.subr.mxu0 0.0
    %1912 = vmatpush2.msra.mxu0 0.0
    %1913 = vmatprep.subr.mxu0 0.0
    %1914 = vmatpush2.msra.mxu0 0.0
    %1915 = vmatprep.subr.mxu0 0.0
    %1916 = vmatpush2.msra.mxu0 0.0
    %1917 = vmatprep.mubr.f32.mxu0 0.0
    %1918 = vmatmul.mubr.f32.gmra.mxu0 %v1851
    %v1919 = vpop.f32.mrf.mxu0
    %v1920 = vadd.f32 0.0, %v1919
    %v1921 = vpop.f32.mrf.mxu0
    %1922 = vdwg.mxu0
    %v1923 = vadd.f32 %v1847, %v1920
    %v1924 = vxor.u32 %v1923, 2147483648
    %v1925 = vmul.f32 %v1924, 1.442695
    %v1926 = vpow.pop %v1925
    %v1927 = vadd.f32 %v1926, 1.0
    %v1928 = vrcp.pop %v1927
    %v1929 = vmul.f32 1.0, %v1928
    %v1930 = vtanh.pop %v1923
    %v1931 = vmul.f32 %v1929, %v1731
    %1933 = vrot.lane.b32.xlu0 %v1930, 64
    %v1934 = vpop.permute.xlu0 %1933
    %v1936 = vmul.f32 %v1929, %v1934
    %1938 = vrot.lane.b32.xlu0 %v1936, 32
    %v1939 = vpop.permute.xlu0 %1938
    %v1941 = vadd.f32 %v1931, %v1939
    %v1942 = vtanh.pop %v1941
    %1944 = vrot.lane.b32.xlu0 %v1942, 64
    %v1945 = vpop.permute.xlu0 %1944
    %v1947 = vmul.f32 %v1929, %v1945
    %v1948 = vld [vmem:[#allocation2 + $0x8] sm:$0xff]
    %1950 = vrot.lane.b32.xlu0 %v1833, 32
    %v1951 = vpop.permute.xlu0 %1950
    %v1952 = vsel %vm288, %v1951, 0
    %1954 = vmatprep.subr.mxu0 0.0
    %1955 = vmatpush1.msra.mxu0 0.0
    %1956 = vmatprep.subr.mxu0 0.0
    %1957 = vmatpush1.msra.mxu0 0.0
    %1958 = vmatprep.subr.mxu0 0.0
    %1959 = vmatpush1.msra.mxu0 0.0
    %1960 = vmatprep.subr.mxu0 0.0
    %1961 = vmatpush1.msra.mxu0 0.0
    %1962 = vmatprep.subr.mxu0 0.0
    %1963 = vmatpush1.msra.mxu0 0.0
    %1964 = vmatprep.subr.mxu0 0.0
    %1965 = vmatpush1.msra.mxu0 0.0
    %1966 = vmatprep.subr.mxu0 0.0
    %1967 = vmatpush1.msra.mxu0 0.0
    %1968 = vmatprep.subr.mxu0 0.0
    %1969 = vmatpush1.msra.mxu0 0.0
    %1970 = vmatprep.subr.mxu0 0.0
    %1971 = vmatpush1.msra.mxu0 0.0
    %1972 = vmatprep.subr.mxu0 0.0
    %1973 = vmatpush1.msra.mxu0 0.0
    %1974 = vmatprep.subr.mxu0 0.0
    %1975 = vmatpush1.msra.mxu0 0.0
    %1976 = vmatprep.subr.mxu0 0.0
    %1977 = vmatpush1.msra.mxu0 0.0
    %1978 = vmatprep.subr.mxu0 0.0
    %1979 = vmatpush1.msra.mxu0 %v286
    %1980 = vmatprep.subr.mxu0 0.0
    %1981 = vmatpush1.msra.mxu0 %v285
    %1982 = vmatprep.subr.mxu0 0.0
    %1983 = vmatpush1.msra.mxu0 %v284
    %1984 = vmatprep.subr.mxu0 0.0
    %1985 = vmatpush1.msra.mxu0 %v283
    %1986 = vmatprep.subr.mxu0 0.0
    %1987 = vmatpush2.msra.mxu0 0.0
    %1988 = vmatprep.subr.mxu0 0.0
    %1989 = vmatpush2.msra.mxu0 0.0
    %1990 = vmatprep.subr.mxu0 0.0
    %1991 = vmatpush2.msra.mxu0 0.0
    %1992 = vmatprep.subr.mxu0 0.0
    %1993 = vmatpush2.msra.mxu0 0.0
    %1994 = vmatprep.subr.mxu0 0.0
    %1995 = vmatpush2.msra.mxu0 0.0
    %1996 = vmatprep.subr.mxu0 0.0
    %1997 = vmatpush2.msra.mxu0 0.0
    %1998 = vmatprep.subr.mxu0 0.0
    %1999 = vmatpush2.msra.mxu0 0.0
    %2000 = vmatprep.subr.mxu0 0.0
    %2001 = vmatpush2.msra.mxu0 0.0
    %2002 = vmatprep.subr.mxu0 0.0
    %2003 = vmatpush2.msra.mxu0 0.0
    %2004 = vmatprep.subr.mxu0 0.0
    %2005 = vmatpush2.msra.mxu0 0.0
    %2006 = vmatprep.subr.mxu0 0.0
    %2007 = vmatpush2.msra.mxu0 0.0
    %2008 = vmatprep.subr.mxu0 0.0
    %2009 = vmatpush2.msra.mxu0 0.0
    %2010 = vmatprep.subr.mxu0 0.0
    %2011 = vmatpush2.msra.mxu0 0.0
    %2012 = vmatprep.subr.mxu0 0.0
    %2013 = vmatpush2.msra.mxu0 0.0
    %2014 = vmatprep.subr.mxu0 0.0
    %2015 = vmatpush2.msra.mxu0 0.0
    %2016 = vmatprep.subr.mxu0 0.0
    %2017 = vmatpush2.msra.mxu0 0.0
    %2018 = vmatprep.mubr.f32.mxu0 0.0
    %2019 = vmatmul.mubr.f32.gmra.mxu0 %v1952
    %v2020 = vpop.f32.mrf.mxu0
    %v2021 = vadd.f32 0.0, %v2020
    %v2022 = vpop.f32.mrf.mxu0
    %2023 = vdwg.mxu0
    %v2024 = vadd.f32 %v1948, %v2021
    %v2025 = vxor.u32 %v2024, 2147483648
    %v2026 = vmul.f32 %v2025, 1.442695
    %v2027 = vpow.pop %v2026
    %v2028 = vadd.f32 %v2027, 1.0
    %v2029 = vrcp.pop %v2028
    %v2030 = vmul.f32 1.0, %v2029
    %v2031 = vtanh.pop %v2024
    %v2032 = vmul.f32 %v2030, %v1834
    %2034 = vrot.lane.b32.xlu0 %v2031, 64
    %v2035 = vpop.permute.xlu0 %2034
    %v2037 = vmul.f32 %v2030, %v2035
    %2039 = vrot.lane.b32.xlu0 %v2037, 32
    %v2040 = vpop.permute.xlu0 %2039
    %v2042 = vadd.f32 %v2032, %v2040
    %v2043 = vtanh.pop %v2042
    %2045 = vrot.lane.b32.xlu0 %v2043, 64
    %v2046 = vpop.permute.xlu0 %2045
    %v2048 = vmul.f32 %v2030, %v2046
    %v2049 = vsel %vm496, %v1947, 0.0
    %2051 = vrot.lane.b32.xlu0 %v2049, 32
    %v2052 = vpop.permute.xlu0 %2051
    %2054 = vst.msk [vmem:[#allocation3 + $0x38] sm:$0xff] %vm288, %v2052
    %v2055 = vsel %vm392, %v2048, 0.0
    %2057 = vrot.lane.b32.xlu0 %v2055, 32
    %v2058 = vpop.permute.xlu0 %2057
    %2060 = vst.msk [vmem:[#allocation4] sm:$0xff] %vm288, %v2058
    %v2061 = vld [vmem:[#allocation3] sm:$0xff]
    %v2062 = vld [vmem:[#allocation3 + $0x8] sm:$0xff]
    %v2063 = vld [vmem:[#allocation3 + $0x10] sm:$0xff]
    %v2064 = vld [vmem:[#allocation3 + $0x18] sm:$0xff]
    %v2065 = vld [vmem:[#allocation3 + $0x20] sm:$0xff]
    %v2066 = vld [vmem:[#allocation3 + $0x28] sm:$0xff]
    %v2067 = vld [vmem:[#allocation3 + $0x30] sm:$0xff]
    %v2068 = vld [vmem:[#allocation3 + $0x38] sm:$0xff]
    %v2069 = vld [vmem:[%s6] sm:$0xff]
    %v2070 = vld [vmem:[%s6 + $0x8] sm:$0xff]
    %v2071 = vld [vmem:[%s6 + $0x10] sm:$0xff]
    %v2072 = vld [vmem:[%s6 + $0x18] sm:$0xff]
    %v2073 = vld [vmem:[%s6 + $0x20] sm:$0xff]
    %v2074 = vld [vmem:[%s6 + $0x28] sm:$0xff]
    %v2075 = vld [vmem:[%s6 + $0x30] sm:$0xff]
    %v2076 = vld [vmem:[%s6 + $0x38] sm:$0xff]
    %v2077 = vld [vmem:[#allocation4] sm:$0xff]
    %v2078 = vld [vmem:[#allocation4 + $0x8] sm:$0xff]
    %v2079 = vld [vmem:[#allocation4 + $0x10] sm:$0xff]
    %v2080 = vld [vmem:[#allocation4 + $0x18] sm:$0xff]
    %v2081 = vld [vmem:[#allocation4 + $0x20] sm:$0xff]
    %v2082 = vld [vmem:[#allocation4 + $0x28] sm:$0xff]
    %v2083 = vld [vmem:[#allocation4 + $0x30] sm:$0xff]
    %v2084 = vld [vmem:[#allocation4 + $0x38] sm:$0xff]
    %v2085 = vld [vmem:[%s6 + $0x40] sm:$0xff]
    %v2086 = vld [vmem:[%s6 + $0x48] sm:$0xff]
    %v2087 = vld [vmem:[%s6 + $0x50] sm:$0xff]
    %v2088 = vld [vmem:[%s6 + $0x58] sm:$0xff]
    %v2089 = vld [vmem:[%s6 + $0x60] sm:$0xff]
    %v2090 = vld [vmem:[%s6 + $0x68] sm:$0xff]
    %v2091 = vld [vmem:[%s6 + $0x70] sm:$0xff]
    %v2092 = vld [vmem:[%s6 + $0x78] sm:$0xff]
    %v2094 = vsel %vm288, %v2077, 0
    %v2097 = vsel %vm288, %v2078, 0
    %v2100 = vsel %vm288, %v2079, 0
    %v2103 = vsel %vm288, %v2080, 0
    %v2106 = vsel %vm288, %v2081, 0
    %v2109 = vsel %vm288, %v2082, 0
    %v2112 = vsel %vm288, %v2083, 0
    %v2115 = vsel %vm288, %v2084, 0
    %2117 = vmatprep.subr.mxu0 0.0
    %2118 = vmatpush1.msra.mxu0 0.0
    %2119 = vmatprep.subr.mxu0 0.0
    %2120 = vmatpush1.msra.mxu0 0.0
    %2121 = vmatprep.subr.mxu0 0.0
    %2122 = vmatpush1.msra.mxu0 0.0
    %2123 = vmatprep.subr.mxu0 0.0
    %2124 = vmatpush1.msra.mxu0 0.0
    %2125 = vmatprep.subr.mxu0 0.0
    %2126 = vmatpush1.msra.mxu0 0.0
    %2127 = vmatprep.subr.mxu0 0.0
    %2128 = vmatpush1.msra.mxu0 0.0
    %2129 = vmatprep.subr.mxu0 0.0
    %2130 = vmatpush1.msra.mxu0 0.0
    %2131 = vmatprep.subr.mxu0 0.0
    %2132 = vmatpush1.msra.mxu0 0.0
    %2133 = vmatprep.subr.mxu0 0.0
    %2134 = vmatpush1.msra.mxu0 0.0
    %2135 = vmatprep.subr.mxu0 0.0
    %2136 = vmatpush1.msra.mxu0 0.0
    %2137 = vmatprep.subr.mxu0 0.0
    %2138 = vmatpush1.msra.mxu0 0.0
    %2139 = vmatprep.subr.mxu0 0.0
    %2140 = vmatpush1.msra.mxu0 0.0
    %2141 = vmatprep.subr.mxu0 %v2092
    %2142 = vmatpush1.msra.mxu0 %v2091
    %2143 = vmatprep.subr.mxu0 %v2090
    %2144 = vmatpush1.msra.mxu0 %v2089
    %2145 = vmatprep.subr.mxu0 %v2088
    %2146 = vmatpush1.msra.mxu0 %v2087
    %2147 = vmatprep.subr.mxu0 %v2086
    %2148 = vmatpush1.msra.mxu0 %v2085
    %2149 = vmatprep.subr.mxu0 0.0
    %2150 = vmatpush2.msra.mxu0 0.0
    %2151 = vmatprep.subr.mxu0 0.0
    %2152 = vmatpush2.msra.mxu0 0.0
    %2153 = vmatprep.subr.mxu0 0.0
    %2154 = vmatpush2.msra.mxu0 0.0
    %2155 = vmatprep.subr.mxu0 0.0
    %2156 = vmatpush2.msra.mxu0 0.0
    %2157 = vmatprep.subr.mxu0 0.0
    %2158 = vmatpush2.msra.mxu0 0.0
    %2159 = vmatprep.subr.mxu0 0.0
    %2160 = vmatpush2.msra.mxu0 0.0
    %2161 = vmatprep.subr.mxu0 0.0
    %2162 = vmatpush2.msra.mxu0 0.0
    %2163 = vmatprep.subr.mxu0 0.0
    %2164 = vmatpush2.msra.mxu0 0.0
    %2165 = vmatprep.subr.mxu0 0.0
    %2166 = vmatpush2.msra.mxu0 0.0
    %2167 = vmatprep.subr.mxu0 0.0
    %2168 = vmatpush2.msra.mxu0 0.0
    %2169 = vmatprep.subr.mxu0 0.0
    %2170 = vmatpush2.msra.mxu0 0.0
    %2171 = vmatprep.subr.mxu0 0.0
    %2172 = vmatpush2.msra.mxu0 0.0
    %2173 = vmatprep.subr.mxu0 0.0
    %2174 = vmatpush2.msra.mxu0 0.0
    %2175 = vmatprep.subr.mxu0 0.0
    %2176 = vmatpush2.msra.mxu0 0.0
    %2177 = vmatprep.subr.mxu0 0.0
    %2178 = vmatpush2.msra.mxu0 0.0
    %2179 = vmatprep.subr.mxu0 0.0
    %2180 = vmatpush2.msra.mxu0 0.0
    %2181 = vmatprep.mubr.f32.mxu0 0.0
    %2182 = vmatmul.mubr.f32.gmra.mxu0 %v2094
    %v2183 = vpop.f32.mrf.mxu0
    %v2184 = vadd.f32 0.0, %v2183
    %v2185 = vpop.f32.mrf.mxu0
    %v2186 = vadd.f32 0.0, %v2185
    %2187 = vmatprep.mubr.f32.mxu0 0.0
    %2188 = vmatmul.mubr.f32.gmra.mxu0 %v2097
    %v2189 = vpop.f32.mrf.mxu0
    %v2190 = vadd.f32 0.0, %v2189
    %v2191 = vpop.f32.mrf.mxu0
    %v2192 = vadd.f32 0.0, %v2191
    %2193 = vmatprep.mubr.f32.mxu0 0.0
    %2194 = vmatmul.mubr.f32.gmra.mxu0 %v2100
    %v2195 = vpop.f32.mrf.mxu0
    %v2196 = vadd.f32 0.0, %v2195
    %v2197 = vpop.f32.mrf.mxu0
    %v2198 = vadd.f32 0.0, %v2197
    %2199 = vmatprep.mubr.f32.mxu0 0.0
    %2200 = vmatmul.mubr.f32.gmra.mxu0 %v2103
    %v2201 = vpop.f32.mrf.mxu0
    %v2202 = vadd.f32 0.0, %v2201
    %v2203 = vpop.f32.mrf.mxu0
    %v2204 = vadd.f32 0.0, %v2203
    %2205 = vmatprep.mubr.f32.mxu0 0.0
    %2206 = vmatmul.mubr.f32.gmra.mxu0 %v2106
    %v2207 = vpop.f32.mrf.mxu0
    %v2208 = vadd.f32 0.0, %v2207
    %v2209 = vpop.f32.mrf.mxu0
    %v2210 = vadd.f32 0.0, %v2209
    %2211 = vmatprep.mubr.f32.mxu0 0.0
    %2212 = vmatmul.mubr.f32.gmra.mxu0 %v2109
    %v2213 = vpop.f32.mrf.mxu0
    %v2214 = vadd.f32 0.0, %v2213
    %v2215 = vpop.f32.mrf.mxu0
    %v2216 = vadd.f32 0.0, %v2215
    %2217 = vmatprep.mubr.f32.mxu0 0.0
    %2218 = vmatmul.mubr.f32.gmra.mxu0 %v2112
    %v2219 = vpop.f32.mrf.mxu0
    %v2220 = vadd.f32 0.0, %v2219
    %v2221 = vpop.f32.mrf.mxu0
    %v2222 = vadd.f32 0.0, %v2221
    %2223 = vmatprep.mubr.f32.mxu0 0.0
    %2224 = vmatmul.mubr.f32.gmra.mxu0 %v2115
    %v2225 = vpop.f32.mrf.mxu0
    %v2226 = vadd.f32 0.0, %v2225
    %v2227 = vpop.f32.mrf.mxu0
    %v2228 = vadd.f32 0.0, %v2227
    %2229 = vdwg.mxu0
    %v2231 = vsel %vm288, %v2061, 0
    %v2234 = vsel %vm288, %v2062, 0
    %v2237 = vsel %vm288, %v2063, 0
    %v2240 = vsel %vm288, %v2064, 0
    %v2243 = vsel %vm288, %v2065, 0
    %v2246 = vsel %vm288, %v2066, 0
    %v2249 = vsel %vm288, %v2067, 0
    %v2252 = vsel %vm288, %v2068, 0
    %2254 = vmatprep.subr.mxu0 0.0
    %2255 = vmatpush1.msra.mxu0 0.0
    %2256 = vmatprep.subr.mxu0 0.0
    %2257 = vmatpush1.msra.mxu0 0.0
    %2258 = vmatprep.subr.mxu0 0.0
    %2259 = vmatpush1.msra.mxu0 0.0
    %2260 = vmatprep.subr.mxu0 0.0
    %2261 = vmatpush1.msra.mxu0 0.0
    %2262 = vmatprep.subr.mxu0 0.0
    %2263 = vmatpush1.msra.mxu0 0.0
    %2264 = vmatprep.subr.mxu0 0.0
    %2265 = vmatpush1.msra.mxu0 0.0
    %2266 = vmatprep.subr.mxu0 0.0
    %2267 = vmatpush1.msra.mxu0 0.0
    %2268 = vmatprep.subr.mxu0 0.0
    %2269 = vmatpush1.msra.mxu0 0.0
    %2270 = vmatprep.subr.mxu0 0.0
    %2271 = vmatpush1.msra.mxu0 0.0
    %2272 = vmatprep.subr.mxu0 0.0
    %2273 = vmatpush1.msra.mxu0 0.0
    %2274 = vmatprep.subr.mxu0 0.0
    %2275 = vmatpush1.msra.mxu0 0.0
    %2276 = vmatprep.subr.mxu0 0.0
    %2277 = vmatpush1.msra.mxu0 0.0
    %2278 = vmatprep.subr.mxu0 %v2076
    %2279 = vmatpush1.msra.mxu0 %v2075
    %2280 = vmatprep.subr.mxu0 %v2074
    %2281 = vmatpush1.msra.mxu0 %v2073
    %2282 = vmatprep.subr.mxu0 %v2072
    %2283 = vmatpush1.msra.mxu0 %v2071
    %2284 = vmatprep.subr.mxu0 %v2070
    %2285 = vmatpush1.msra.mxu0 %v2069
    %2286 = vmatprep.subr.mxu0 0.0
    %2287 = vmatpush2.msra.mxu0 0.0
    %2288 = vmatprep.subr.mxu0 0.0
    %2289 = vmatpush2.msra.mxu0 0.0
    %2290 = vmatprep.subr.mxu0 0.0
    %2291 = vmatpush2.msra.mxu0 0.0
    %2292 = vmatprep.subr.mxu0 0.0
    %2293 = vmatpush2.msra.mxu0 0.0
    %2294 = vmatprep.subr.mxu0 0.0
    %2295 = vmatpush2.msra.mxu0 0.0
    %2296 = vmatprep.subr.mxu0 0.0
    %2297 = vmatpush2.msra.mxu0 0.0
    %2298 = vmatprep.subr.mxu0 0.0
    %2299 = vmatpush2.msra.mxu0 0.0
    %2300 = vmatprep.subr.mxu0 0.0
    %2301 = vmatpush2.msra.mxu0 0.0
    %2302 = vmatprep.subr.mxu0 0.0
    %2303 = vmatpush2.msra.mxu0 0.0
    %2304 = vmatprep.subr.mxu0 0.0
    %2305 = vmatpush2.msra.mxu0 0.0
    %2306 = vmatprep.subr.mxu0 0.0
    %2307 = vmatpush2.msra.mxu0 0.0
    %2308 = vmatprep.subr.mxu0 0.0
    %2309 = vmatpush2.msra.mxu0 0.0
    %2310 = vmatprep.subr.mxu0 0.0
    %2311 = vmatpush2.msra.mxu0 0.0
    %2312 = vmatprep.subr.mxu0 0.0
    %2313 = vmatpush2.msra.mxu0 0.0
    %2314 = vmatprep.subr.mxu0 0.0
    %2315 = vmatpush2.msra.mxu0 0.0
    %2316 = vmatprep.subr.mxu0 0.0
    %2317 = vmatpush2.msra.mxu0 0.0
    %2318 = vmatprep.mubr.f32.mxu0 0.0
    %2319 = vmatmul.mubr.f32.gmra.mxu0 %v2231
    %v2320 = vpop.f32.mrf.mxu0
    %v2321 = vadd.f32 %v2184, %v2320
    %v2322 = vpop.f32.mrf.mxu0
    %v2323 = vadd.f32 %v2186, %v2322
    %2324 = vmatprep.mubr.f32.mxu0 0.0
    %2325 = vmatmul.mubr.f32.gmra.mxu0 %v2234
    %v2326 = vpop.f32.mrf.mxu0
    %v2327 = vadd.f32 %v2190, %v2326
    %v2328 = vpop.f32.mrf.mxu0
    %v2329 = vadd.f32 %v2192, %v2328
    %2330 = vmatprep.mubr.f32.mxu0 0.0
    %2331 = vmatmul.mubr.f32.gmra.mxu0 %v2237
    %v2332 = vpop.f32.mrf.mxu0
    %v2333 = vadd.f32 %v2196, %v2332
    %v2334 = vpop.f32.mrf.mxu0
    %v2335 = vadd.f32 %v2198, %v2334
    %2336 = vmatprep.mubr.f32.mxu0 0.0
    %2337 = vmatmul.mubr.f32.gmra.mxu0 %v2240
    %v2338 = vpop.f32.mrf.mxu0
    %v2339 = vadd.f32 %v2202, %v2338
    %v2340 = vpop.f32.mrf.mxu0
    %v2341 = vadd.f32 %v2204, %v2340
    %2342 = vmatprep.mubr.f32.mxu0 0.0
    %2343 = vmatmul.mubr.f32.gmra.mxu0 %v2243
    %v2344 = vpop.f32.mrf.mxu0
    %v2345 = vadd.f32 %v2208, %v2344
    %v2346 = vpop.f32.mrf.mxu0
    %v2347 = vadd.f32 %v2210, %v2346
    %2348 = vmatprep.mubr.f32.mxu0 0.0
    %2349 = vmatmul.mubr.f32.gmra.mxu0 %v2246
    %v2350 = vpop.f32.mrf.mxu0
    %v2351 = vadd.f32 %v2214, %v2350
    %v2352 = vpop.f32.mrf.mxu0
    %v2353 = vadd.f32 %v2216, %v2352
    %2354 = vmatprep.mubr.f32.mxu0 0.0
    %2355 = vmatmul.mubr.f32.gmra.mxu0 %v2249
    %v2356 = vpop.f32.mrf.mxu0
    %v2357 = vadd.f32 %v2220, %v2356
    %v2358 = vpop.f32.mrf.mxu0
    %v2359 = vadd.f32 %v2222, %v2358
    %2360 = vmatprep.mubr.f32.mxu0 0.0
    %2361 = vmatmul.mubr.f32.gmra.mxu0 %v2252
    %v2362 = vpop.f32.mrf.mxu0
    %v2363 = vadd.f32 %v2226, %v2362
    %v2364 = vpop.f32.mrf.mxu0
    %v2365 = vadd.f32 %v2228, %v2364
    %2366 = vdwg.mxu0
    %v2367 = vld [vmem:[%s9] sm:$0x3]
    %v2369 = vlaneseq
    %v2370 = vshrl.u32 %v2369, 7
    %v2371 = vsub.s32 0, %v2370
    %v2372 = vrot.slane %v2367, %v2371
    %v2373 = vlaneseq
    %v2374 = vshrl.u32 %v2373, 7
    %v2375 = vsub.s32 1, %v2374
    %v2376 = vrot.slane %v2367, %v2375
    %v2379 = vadd.f32 %v2321, %v2372
    %v2380 = vadd.f32 %v2323, %v2376
    %v2381 = vadd.f32 %v2327, %v2372
    %v2382 = vadd.f32 %v2329, %v2376
    %v2383 = vadd.f32 %v2333, %v2372
    %v2384 = vadd.f32 %v2335, %v2376
    %v2385 = vadd.f32 %v2339, %v2372
    %v2386 = vadd.f32 %v2341, %v2376
    %v2387 = vadd.f32 %v2345, %v2372
    %v2388 = vadd.f32 %v2347, %v2376
    %v2389 = vadd.f32 %v2351, %v2372
    %v2390 = vadd.f32 %v2353, %v2376
    %v2391 = vadd.f32 %v2357, %v2372
    %v2392 = vadd.f32 %v2359, %v2376
    %v2393 = vadd.f32 %v2363, %v2372
    %v2394 = vadd.f32 %v2365, %v2376
    %2395 = vst [vmem:[#allocation2] sm:$0xff] %v2379
    %2396 = vst [vmem:[#allocation2 + $0x8] sm:$0xff] %v2380
    %2397 = vst [vmem:[#allocation2 + $0x10] sm:$0xff] %v2381
    %2398 = vst [vmem:[#allocation2 + $0x18] sm:$0xff] %v2382
    %2399 = vst [vmem:[#allocation2 + $0x20] sm:$0xff] %v2383
    %2400 = vst [vmem:[#allocation2 + $0x28] sm:$0xff] %v2384
    %2401 = vst [vmem:[#allocation2 + $0x30] sm:$0xff] %v2385
    %2402 = vst [vmem:[#allocation2 + $0x38] sm:$0xff] %v2386
    %2403 = vst [vmem:[#allocation2 + $0x40] sm:$0xff] %v2387
    %2404 = vst [vmem:[#allocation2 + $0x48] sm:$0xff] %v2388
    %2405 = vst [vmem:[#allocation2 + $0x50] sm:$0xff] %v2389
    %2406 = vst [vmem:[#allocation2 + $0x58] sm:$0xff] %v2390
    %2407 = vst [vmem:[#allocation2 + $0x60] sm:$0xff] %v2391
    %2408 = vst [vmem:[#allocation2 + $0x68] sm:$0xff] %v2392
    %2409 = vst [vmem:[#allocation2 + $0x70] sm:$0xff] %v2393
    %2410 = vst [vmem:[#allocation2 + $0x78] sm:$0xff] %v2394
    %v2411 = vld [vmem:[#allocation12] sm:$0xff]
    %v2412 = vld [vmem:[#allocation12 + $0x8] sm:$0xff]
    %v2413 = vld [vmem:[#allocation12 + $0x10] sm:$0xff]
    %v2414 = vld [vmem:[#allocation12 + $0x18] sm:$0xff]
    %v2415 = vld [vmem:[#allocation13] sm:$0xff]
    %v2416 = vld [vmem:[#allocation13 + $0x8] sm:$0xff]
    %v2417 = vld [vmem:[#allocation13 + $0x10] sm:$0xff]
    %v2418 = vld [vmem:[#allocation13 + $0x18] sm:$0xff]
    %v2419 = vld [vmem:[#allocation2] sm:$0xff]
    %2420 = vmatprep.subr.mxu0 0.0
    %2421 = vmatpush1.msra.mxu0 0.0
    %2422 = vmatprep.subr.mxu0 0.0
    %2423 = vmatpush1.msra.mxu0 0.0
    %2424 = vmatprep.subr.mxu0 0.0
    %2425 = vmatpush1.msra.mxu0 0.0
    %2426 = vmatprep.subr.mxu0 0.0
    %2427 = vmatpush1.msra.mxu0 0.0
    %2428 = vmatprep.subr.mxu0 0.0
    %2429 = vmatpush1.msra.mxu0 0.0
    %2430 = vmatprep.subr.mxu0 0.0
    %2431 = vmatpush1.msra.mxu0 0.0
    %2432 = vmatprep.subr.mxu0 0.0
    %2433 = vmatpush1.msra.mxu0 0.0
    %2434 = vmatprep.subr.mxu0 0.0
    %2435 = vmatpush1.msra.mxu0 0.0
    %2436 = vmatprep.subr.mxu0 0.0
    %2437 = vmatpush1.msra.mxu0 0.0
    %2438 = vmatprep.subr.mxu0 0.0
    %2439 = vmatpush1.msra.mxu0 0.0
    %2440 = vmatprep.subr.mxu0 0.0
    %2441 = vmatpush1.msra.mxu0 0.0
    %2442 = vmatprep.subr.mxu0 0.0
    %2443 = vmatpush1.msra.mxu0 0.0
    %2444 = vmatprep.subr.mxu0 0.0
    %2445 = vmatpush1.msra.mxu0 %v2414
    %2446 = vmatprep.subr.mxu0 0.0
    %2447 = vmatpush1.msra.mxu0 %v2413
    %2448 = vmatprep.subr.mxu0 0.0
    %2449 = vmatpush1.msra.mxu0 %v2412
    %2450 = vmatprep.subr.mxu0 0.0
    %2451 = vmatpush1.msra.mxu0 %v2411
    %2452 = vmatprep.subr.mxu0 0.0
    %2453 = vmatpush2.msra.mxu0 0.0
    %2454 = vmatprep.subr.mxu0 0.0
    %2455 = vmatpush2.msra.mxu0 0.0
    %2456 = vmatprep.subr.mxu0 0.0
    %2457 = vmatpush2.msra.mxu0 0.0
    %2458 = vmatprep.subr.mxu0 0.0
    %2459 = vmatpush2.msra.mxu0 0.0
    %2460 = vmatprep.subr.mxu0 0.0
    %2461 = vmatpush2.msra.mxu0 0.0
    %2462 = vmatprep.subr.mxu0 0.0
    %2463 = vmatpush2.msra.mxu0 0.0
    %2464 = vmatprep.subr.mxu0 0.0
    %2465 = vmatpush2.msra.mxu0 0.0
    %2466 = vmatprep.subr.mxu0 0.0
    %2467 = vmatpush2.msra.mxu0 0.0
    %2468 = vmatprep.subr.mxu0 0.0
    %2469 = vmatpush2.msra.mxu0 0.0
    %2470 = vmatprep.subr.mxu0 0.0
    %2471 = vmatpush2.msra.mxu0 0.0
    %2472 = vmatprep.subr.mxu0 0.0
    %2473 = vmatpush2.msra.mxu0 0.0
    %2474 = vmatprep.subr.mxu0 0.0
    %2475 = vmatpush2.msra.mxu0 0.0
    %2476 = vmatprep.subr.mxu0 0.0
    %2477 = vmatpush2.msra.mxu0 0.0
    %2478 = vmatprep.subr.mxu0 0.0
    %2479 = vmatpush2.msra.mxu0 0.0
    %2480 = vmatprep.subr.mxu0 0.0
    %2481 = vmatpush2.msra.mxu0 0.0
    %2482 = vmatprep.subr.mxu0 0.0
    %2483 = vmatpush2.msra.mxu0 0.0
    %2484 = vmatprep.mubr.f32.mxu0 0.0
    %2485 = vmatmul.mubr.f32.gmra.mxu0 %v290
    %v2486 = vpop.f32.mrf.mxu0
    %v2487 = vadd.f32 0.0, %v2486
    %v2488 = vpop.f32.mrf.mxu0
    %2489 = vdwg.mxu0
    %v2490 = vadd.f32 %v2419, %v2487
    %v2491 = vxor.u32 %v2490, 2147483648
    %v2492 = vmul.f32 %v2491, 1.442695
    %v2493 = vpow.pop %v2492
    %v2494 = vadd.f32 %v2493, 1.0
    %v2495 = vrcp.pop %v2494
    %v2496 = vmul.f32 1.0, %v2495
    %v2497 = vtanh.pop %v2490
    %v2498 = vmul.f32 %v2496, 0.0
    %2500 = vrot.lane.b32.xlu0 %v2497, 64
    %v2501 = vpop.permute.xlu0 %2500
    %v2503 = vmul.f32 %v2496, %v2501
    %2505 = vrot.lane.b32.xlu0 %v2503, 32
    %v2506 = vpop.permute.xlu0 %2505
    %v2508 = vadd.f32 %v2498, %v2506
    %v2509 = vtanh.pop %v2508
    %2511 = vrot.lane.b32.xlu0 %v2509, 64
    %v2512 = vpop.permute.xlu0 %2511
    %v2514 = vmul.f32 %v2496, %v2512
    %v2515 = vsel %vm392, %v2514, 0.0
    %v2516 = vsel %vm392, %v2508, 0.0
    %v2517 = vld [vmem:[#allocation2 + $0x78] sm:$0xff]
    %2518 = vmatprep.subr.mxu0 0.0
    %2519 = vmatpush1.msra.mxu0 0.0
    %2520 = vmatprep.subr.mxu0 0.0
    %2521 = vmatpush1.msra.mxu0 0.0
    %2522 = vmatprep.subr.mxu0 0.0
    %2523 = vmatpush1.msra.mxu0 0.0
    %2524 = vmatprep.subr.mxu0 0.0
    %2525 = vmatpush1.msra.mxu0 0.0
    %2526 = vmatprep.subr.mxu0 0.0
    %2527 = vmatpush1.msra.mxu0 0.0
    %2528 = vmatprep.subr.mxu0 0.0
    %2529 = vmatpush1.msra.mxu0 0.0
    %2530 = vmatprep.subr.mxu0 0.0
    %2531 = vmatpush1.msra.mxu0 0.0
    %2532 = vmatprep.subr.mxu0 0.0
    %2533 = vmatpush1.msra.mxu0 0.0
    %2534 = vmatprep.subr.mxu0 0.0
    %2535 = vmatpush1.msra.mxu0 0.0
    %2536 = vmatprep.subr.mxu0 0.0
    %2537 = vmatpush1.msra.mxu0 0.0
    %2538 = vmatprep.subr.mxu0 0.0
    %2539 = vmatpush1.msra.mxu0 0.0
    %2540 = vmatprep.subr.mxu0 0.0
    %2541 = vmatpush1.msra.mxu0 0.0
    %2542 = vmatprep.subr.mxu0 0.0
    %2543 = vmatpush1.msra.mxu0 %v2418
    %2544 = vmatprep.subr.mxu0 0.0
    %2545 = vmatpush1.msra.mxu0 %v2417
    %2546 = vmatprep.subr.mxu0 0.0
    %2547 = vmatpush1.msra.mxu0 %v2416
    %2548 = vmatprep.subr.mxu0 0.0
    %2549 = vmatpush1.msra.mxu0 %v2415
    %2550 = vmatprep.subr.mxu0 0.0
    %2551 = vmatpush2.msra.mxu0 0.0
    %2552 = vmatprep.subr.mxu0 0.0
    %2553 = vmatpush2.msra.mxu0 0.0
    %2554 = vmatprep.subr.mxu0 0.0
    %2555 = vmatpush2.msra.mxu0 0.0
    %2556 = vmatprep.subr.mxu0 0.0
    %2557 = vmatpush2.msra.mxu0 0.0
    %2558 = vmatprep.subr.mxu0 0.0
    %2559 = vmatpush2.msra.mxu0 0.0
    %2560 = vmatprep.subr.mxu0 0.0
    %2561 = vmatpush2.msra.mxu0 0.0
    %2562 = vmatprep.subr.mxu0 0.0
    %2563 = vmatpush2.msra.mxu0 0.0
    %2564 = vmatprep.subr.mxu0 0.0
    %2565 = vmatpush2.msra.mxu0 0.0
    %2566 = vmatprep.subr.mxu0 0.0
    %2567 = vmatpush2.msra.mxu0 0.0
    %2568 = vmatprep.subr.mxu0 0.0
    %2569 = vmatpush2.msra.mxu0 0.0
    %2570 = vmatprep.subr.mxu0 0.0
    %2571 = vmatpush2.msra.mxu0 0.0
    %2572 = vmatprep.subr.mxu0 0.0
    %2573 = vmatpush2.msra.mxu0 0.0
    %2574 = vmatprep.subr.mxu0 0.0
    %2575 = vmatpush2.msra.mxu0 0.0
    %2576 = vmatprep.subr.mxu0 0.0
    %2577 = vmatpush2.msra.mxu0 0.0
    %2578 = vmatprep.subr.mxu0 0.0
    %2579 = vmatpush2.msra.mxu0 0.0
    %2580 = vmatprep.subr.mxu0 0.0
    %2581 = vmatpush2.msra.mxu0 0.0
    %2582 = vmatprep.mubr.f32.mxu0 0.0
    %2583 = vmatmul.mubr.f32.gmra.mxu0 %v290
    %v2584 = vpop.f32.mrf.mxu0
    %v2585 = vadd.f32 0.0, %v2584
    %v2586 = vpop.f32.mrf.mxu0
    %2587 = vdwg.mxu0
    %v2588 = vadd.f32 %v2517, %v2585
    %v2589 = vxor.u32 %v2588, 2147483648
    %v2590 = vmul.f32 %v2589, 1.442695
    %v2591 = vpow.pop %v2590
    %v2592 = vadd.f32 %v2591, 1.0
    %v2593 = vrcp.pop %v2592
    %v2594 = vmul.f32 1.0, %v2593
    %v2595 = vtanh.pop %v2588
    %v2596 = vmul.f32 %v2594, 0.0
    %2598 = vrot.lane.b32.xlu0 %v2595, 64
    %v2599 = vpop.permute.xlu0 %2598
    %v2601 = vmul.f32 %v2594, %v2599
    %2603 = vrot.lane.b32.xlu0 %v2601, 32
    %v2604 = vpop.permute.xlu0 %2603
    %v2606 = vadd.f32 %v2596, %v2604
    %v2607 = vtanh.pop %v2606
    %2609 = vrot.lane.b32.xlu0 %v2607, 64
    %v2610 = vpop.permute.xlu0 %2609
    %v2612 = vmul.f32 %v2594, %v2610
    %v2613 = vsel %vm496, %v2612, 0.0
    %v2614 = vsel %vm496, %v2606, 0.0
    %v2615 = vld [vmem:[#allocation2 + $0x10] sm:$0xff]
    %2617 = vrot.lane.b32.xlu0 %v2515, 32
    %v2618 = vpop.permute.xlu0 %2617
    %v2619 = vsel %vm288, %v2618, 0
    %2621 = vmatprep.subr.mxu0 0.0
    %2622 = vmatpush1.msra.mxu0 0.0
    %2623 = vmatprep.subr.mxu0 0.0
    %2624 = vmatpush1.msra.mxu0 0.0
    %2625 = vmatprep.subr.mxu0 0.0
    %2626 = vmatpush1.msra.mxu0 0.0
    %2627 = vmatprep.subr.mxu0 0.0
    %2628 = vmatpush1.msra.mxu0 0.0
    %2629 = vmatprep.subr.mxu0 0.0
    %2630 = vmatpush1.msra.mxu0 0.0
    %2631 = vmatprep.subr.mxu0 0.0
    %2632 = vmatpush1.msra.mxu0 0.0
    %2633 = vmatprep.subr.mxu0 0.0
    %2634 = vmatpush1.msra.mxu0 0.0
    %2635 = vmatprep.subr.mxu0 0.0
    %2636 = vmatpush1.msra.mxu0 0.0
    %2637 = vmatprep.subr.mxu0 0.0
    %2638 = vmatpush1.msra.mxu0 0.0
    %2639 = vmatprep.subr.mxu0 0.0
    %2640 = vmatpush1.msra.mxu0 0.0
    %2641 = vmatprep.subr.mxu0 0.0
    %2642 = vmatpush1.msra.mxu0 0.0
    %2643 = vmatprep.subr.mxu0 0.0
    %2644 = vmatpush1.msra.mxu0 0.0
    %2645 = vmatprep.subr.mxu0 0.0
    %2646 = vmatpush1.msra.mxu0 %v2414
    %2647 = vmatprep.subr.mxu0 0.0
    %2648 = vmatpush1.msra.mxu0 %v2413
    %2649 = vmatprep.subr.mxu0 0.0
    %2650 = vmatpush1.msra.mxu0 %v2412
    %2651 = vmatprep.subr.mxu0 0.0
    %2652 = vmatpush1.msra.mxu0 %v2411
    %2653 = vmatprep.subr.mxu0 0.0
    %2654 = vmatpush2.msra.mxu0 0.0
    %2655 = vmatprep.subr.mxu0 0.0
    %2656 = vmatpush2.msra.mxu0 0.0
    %2657 = vmatprep.subr.mxu0 0.0
    %2658 = vmatpush2.msra.mxu0 0.0
    %2659 = vmatprep.subr.mxu0 0.0
    %2660 = vmatpush2.msra.mxu0 0.0
    %2661 = vmatprep.subr.mxu0 0.0
    %2662 = vmatpush2.msra.mxu0 0.0
    %2663 = vmatprep.subr.mxu0 0.0
    %2664 = vmatpush2.msra.mxu0 0.0
    %2665 = vmatprep.subr.mxu0 0.0
    %2666 = vmatpush2.msra.mxu0 0.0
    %2667 = vmatprep.subr.mxu0 0.0
    %2668 = vmatpush2.msra.mxu0 0.0
    %2669 = vmatprep.subr.mxu0 0.0
    %2670 = vmatpush2.msra.mxu0 0.0
    %2671 = vmatprep.subr.mxu0 0.0
    %2672 = vmatpush2.msra.mxu0 0.0
    %2673 = vmatprep.subr.mxu0 0.0
    %2674 = vmatpush2.msra.mxu0 0.0
    %2675 = vmatprep.subr.mxu0 0.0
    %2676 = vmatpush2.msra.mxu0 0.0
    %2677 = vmatprep.subr.mxu0 0.0
    %2678 = vmatpush2.msra.mxu0 0.0
    %2679 = vmatprep.subr.mxu0 0.0
    %2680 = vmatpush2.msra.mxu0 0.0
    %2681 = vmatprep.subr.mxu0 0.0
    %2682 = vmatpush2.msra.mxu0 0.0
    %2683 = vmatprep.subr.mxu0 0.0
    %2684 = vmatpush2.msra.mxu0 0.0
    %2685 = vmatprep.mubr.f32.mxu0 0.0
    %2686 = vmatmul.mubr.f32.gmra.mxu0 %v2619
    %v2687 = vpop.f32.mrf.mxu0
    %v2688 = vadd.f32 0.0, %v2687
    %v2689 = vpop.f32.mrf.mxu0
    %2690 = vdwg.mxu0
    %v2691 = vadd.f32 %v2615, %v2688
    %v2692 = vxor.u32 %v2691, 2147483648
    %v2693 = vmul.f32 %v2692, 1.442695
    %v2694 = vpow.pop %v2693
    %v2695 = vadd.f32 %v2694, 1.0
    %v2696 = vrcp.pop %v2695
    %v2697 = vmul.f32 1.0, %v2696
    %v2698 = vtanh.pop %v2691
    %v2699 = vmul.f32 %v2697, %v2516
    %2701 = vrot.lane.b32.xlu0 %v2698, 64
    %v2702 = vpop.permute.xlu0 %2701
    %v2704 = vmul.f32 %v2697, %v2702
    %2706 = vrot.lane.b32.xlu0 %v2704, 32
    %v2707 = vpop.permute.xlu0 %2706
    %v2709 = vadd.f32 %v2699, %v2707
    %v2710 = vtanh.pop %v2709
    %2712 = vrot.lane.b32.xlu0 %v2710, 64
    %v2713 = vpop.permute.xlu0 %2712
    %v2715 = vmul.f32 %v2697, %v2713
    %v2716 = vsel %vm612, %v2715, %v2515
    %v2717 = vsel %vm612, %v2709, %v2516
    %v2718 = vld [vmem:[#allocation2 + $0x68] sm:$0xff]
    %2720 = vrot.lane.b32.xlu0 %v2613, 32
    %v2721 = vpop.permute.xlu0 %2720
    %v2722 = vsel %vm288, %v2721, 0
    %2724 = vmatprep.subr.mxu0 0.0
    %2725 = vmatpush1.msra.mxu0 0.0
    %2726 = vmatprep.subr.mxu0 0.0
    %2727 = vmatpush1.msra.mxu0 0.0
    %2728 = vmatprep.subr.mxu0 0.0
    %2729 = vmatpush1.msra.mxu0 0.0
    %2730 = vmatprep.subr.mxu0 0.0
    %2731 = vmatpush1.msra.mxu0 0.0
    %2732 = vmatprep.subr.mxu0 0.0
    %2733 = vmatpush1.msra.mxu0 0.0
    %2734 = vmatprep.subr.mxu0 0.0
    %2735 = vmatpush1.msra.mxu0 0.0
    %2736 = vmatprep.subr.mxu0 0.0
    %2737 = vmatpush1.msra.mxu0 0.0
    %2738 = vmatprep.subr.mxu0 0.0
    %2739 = vmatpush1.msra.mxu0 0.0
    %2740 = vmatprep.subr.mxu0 0.0
    %2741 = vmatpush1.msra.mxu0 0.0
    %2742 = vmatprep.subr.mxu0 0.0
    %2743 = vmatpush1.msra.mxu0 0.0
    %2744 = vmatprep.subr.mxu0 0.0
    %2745 = vmatpush1.msra.mxu0 0.0
    %2746 = vmatprep.subr.mxu0 0.0
    %2747 = vmatpush1.msra.mxu0 0.0
    %2748 = vmatprep.subr.mxu0 0.0
    %2749 = vmatpush1.msra.mxu0 %v2418
    %2750 = vmatprep.subr.mxu0 0.0
    %2751 = vmatpush1.msra.mxu0 %v2417
    %2752 = vmatprep.subr.mxu0 0.0
    %2753 = vmatpush1.msra.mxu0 %v2416
    %2754 = vmatprep.subr.mxu0 0.0
    %2755 = vmatpush1.msra.mxu0 %v2415
    %2756 = vmatprep.subr.mxu0 0.0
    %2757 = vmatpush2.msra.mxu0 0.0
    %2758 = vmatprep.subr.mxu0 0.0
    %2759 = vmatpush2.msra.mxu0 0.0
    %2760 = vmatprep.subr.mxu0 0.0
    %2761 = vmatpush2.msra.mxu0 0.0
    %2762 = vmatprep.subr.mxu0 0.0
    %2763 = vmatpush2.msra.mxu0 0.0
    %2764 = vmatprep.subr.mxu0 0.0
    %2765 = vmatpush2.msra.mxu0 0.0
    %2766 = vmatprep.subr.mxu0 0.0
    %2767 = vmatpush2.msra.mxu0 0.0
    %2768 = vmatprep.subr.mxu0 0.0
    %2769 = vmatpush2.msra.mxu0 0.0
    %2770 = vmatprep.subr.mxu0 0.0
    %2771 = vmatpush2.msra.mxu0 0.0
    %2772 = vmatprep.subr.mxu0 0.0
    %2773 = vmatpush2.msra.mxu0 0.0
    %2774 = vmatprep.subr.mxu0 0.0
    %2775 = vmatpush2.msra.mxu0 0.0
    %2776 = vmatprep.subr.mxu0 0.0
    %2777 = vmatpush2.msra.mxu0 0.0
    %2778 = vmatprep.subr.mxu0 0.0
    %2779 = vmatpush2.msra.mxu0 0.0
    %2780 = vmatprep.subr.mxu0 0.0
    %2781 = vmatpush2.msra.mxu0 0.0
    %2782 = vmatprep.subr.mxu0 0.0
    %2783 = vmatpush2.msra.mxu0 0.0
    %2784 = vmatprep.subr.mxu0 0.0
    %2785 = vmatpush2.msra.mxu0 0.0
    %2786 = vmatprep.subr.mxu0 0.0
    %2787 = vmatpush2.msra.mxu0 0.0
    %2788 = vmatprep.mubr.f32.mxu0 0.0
    %2789 = vmatmul.mubr.f32.gmra.mxu0 %v2722
    %v2790 = vpop.f32.mrf.mxu0
    %v2791 = vadd.f32 0.0, %v2790
    %v2792 = vpop.f32.mrf.mxu0
    %2793 = vdwg.mxu0
    %v2794 = vadd.f32 %v2718, %v2791
    %v2795 = vxor.u32 %v2794, 2147483648
    %v2796 = vmul.f32 %v2795, 1.442695
    %v2797 = vpow.pop %v2796
    %v2798 = vadd.f32 %v2797, 1.0
    %v2799 = vrcp.pop %v2798
    %v2800 = vmul.f32 1.0, %v2799
    %v2801 = vtanh.pop %v2794
    %v2802 = vmul.f32 %v2800, %v2614
    %2804 = vrot.lane.b32.xlu0 %v2801, 64
    %v2805 = vpop.permute.xlu0 %2804
    %v2807 = vmul.f32 %v2800, %v2805
    %2809 = vrot.lane.b32.xlu0 %v2807, 32
    %v2810 = vpop.permute.xlu0 %2809
    %v2812 = vadd.f32 %v2802, %v2810
    %v2813 = vtanh.pop %v2812
    %2815 = vrot.lane.b32.xlu0 %v2813, 64
    %v2816 = vpop.permute.xlu0 %2815
    %v2818 = vmul.f32 %v2800, %v2816
    %v2819 = vsel %vm718, %v2818, %v2613
    %v2820 = vsel %vm718, %v2812, %v2614
    %v2821 = vld [vmem:[#allocation2 + $0x20] sm:$0xff]
    %2823 = vrot.lane.b32.xlu0 %v2716, 32
    %v2824 = vpop.permute.xlu0 %2823
    %v2825 = vsel %vm288, %v2824, 0
    %2827 = vmatprep.subr.mxu0 0.0
    %2828 = vmatpush1.msra.mxu0 0.0
    %2829 = vmatprep.subr.mxu0 0.0
    %2830 = vmatpush1.msra.mxu0 0.0
    %2831 = vmatprep.subr.mxu0 0.0
    %2832 = vmatpush1.msra.mxu0 0.0
    %2833 = vmatprep.subr.mxu0 0.0
    %2834 = vmatpush1.msra.mxu0 0.0
    %2835 = vmatprep.subr.mxu0 0.0
    %2836 = vmatpush1.msra.mxu0 0.0
    %2837 = vmatprep.subr.mxu0 0.0
    %2838 = vmatpush1.msra.mxu0 0.0
    %2839 = vmatprep.subr.mxu0 0.0
    %2840 = vmatpush1.msra.mxu0 0.0
    %2841 = vmatprep.subr.mxu0 0.0
    %2842 = vmatpush1.msra.mxu0 0.0
    %2843 = vmatprep.subr.mxu0 0.0
    %2844 = vmatpush1.msra.mxu0 0.0
    %2845 = vmatprep.subr.mxu0 0.0
    %2846 = vmatpush1.msra.mxu0 0.0
    %2847 = vmatprep.subr.mxu0 0.0
    %2848 = vmatpush1.msra.mxu0 0.0
    %2849 = vmatprep.subr.mxu0 0.0
    %2850 = vmatpush1.msra.mxu0 0.0
    %2851 = vmatprep.subr.mxu0 0.0
    %2852 = vmatpush1.msra.mxu0 %v2414
    %2853 = vmatprep.subr.mxu0 0.0
    %2854 = vmatpush1.msra.mxu0 %v2413
    %2855 = vmatprep.subr.mxu0 0.0
    %2856 = vmatpush1.msra.mxu0 %v2412
    %2857 = vmatprep.subr.mxu0 0.0
    %2858 = vmatpush1.msra.mxu0 %v2411
    %2859 = vmatprep.subr.mxu0 0.0
    %2860 = vmatpush2.msra.mxu0 0.0
    %2861 = vmatprep.subr.mxu0 0.0
    %2862 = vmatpush2.msra.mxu0 0.0
    %2863 = vmatprep.subr.mxu0 0.0
    %2864 = vmatpush2.msra.mxu0 0.0
    %2865 = vmatprep.subr.mxu0 0.0
    %2866 = vmatpush2.msra.mxu0 0.0
    %2867 = vmatprep.subr.mxu0 0.0
    %2868 = vmatpush2.msra.mxu0 0.0
    %2869 = vmatprep.subr.mxu0 0.0
    %2870 = vmatpush2.msra.mxu0 0.0
    %2871 = vmatprep.subr.mxu0 0.0
    %2872 = vmatpush2.msra.mxu0 0.0
    %2873 = vmatprep.subr.mxu0 0.0
    %2874 = vmatpush2.msra.mxu0 0.0
    %2875 = vmatprep.subr.mxu0 0.0
    %2876 = vmatpush2.msra.mxu0 0.0
    %2877 = vmatprep.subr.mxu0 0.0
    %2878 = vmatpush2.msra.mxu0 0.0
    %2879 = vmatprep.subr.mxu0 0.0
    %2880 = vmatpush2.msra.mxu0 0.0
    %2881 = vmatprep.subr.mxu0 0.0
    %2882 = vmatpush2.msra.mxu0 0.0
    %2883 = vmatprep.subr.mxu0 0.0
    %2884 = vmatpush2.msra.mxu0 0.0
    %2885 = vmatprep.subr.mxu0 0.0
    %2886 = vmatpush2.msra.mxu0 0.0
    %2887 = vmatprep.subr.mxu0 0.0
    %2888 = vmatpush2.msra.mxu0 0.0
    %2889 = vmatprep.subr.mxu0 0.0
    %2890 = vmatpush2.msra.mxu0 0.0
    %2891 = vmatprep.mubr.f32.mxu0 0.0
    %2892 = vmatmul.mubr.f32.gmra.mxu0 %v2825
    %v2893 = vpop.f32.mrf.mxu0
    %v2894 = vadd.f32 0.0, %v2893
    %v2895 = vpop.f32.mrf.mxu0
    %2896 = vdwg.mxu0
    %v2897 = vadd.f32 %v2821, %v2894
    %v2898 = vxor.u32 %v2897, 2147483648
    %v2899 = vmul.f32 %v2898, 1.442695
    %v2900 = vpow.pop %v2899
    %v2901 = vadd.f32 %v2900, 1.0
    %v2902 = vrcp.pop %v2901
    %v2903 = vmul.f32 1.0, %v2902
    %v2904 = vtanh.pop %v2897
    %v2905 = vmul.f32 %v2903, %v2717
    %2907 = vrot.lane.b32.xlu0 %v2904, 64
    %v2908 = vpop.permute.xlu0 %2907
    %v2910 = vmul.f32 %v2903, %v2908
    %2912 = vrot.lane.b32.xlu0 %v2910, 32
    %v2913 = vpop.permute.xlu0 %2912
    %v2915 = vadd.f32 %v2905, %v2913
    %v2916 = vtanh.pop %v2915
    %2918 = vrot.lane.b32.xlu0 %v2916, 64
    %v2919 = vpop.permute.xlu0 %2918
    %v2921 = vmul.f32 %v2903, %v2919
    %v2922 = vsel %vm839, %v2921, %v2716
    %v2923 = vsel %vm839, %v2915, %v2717
    %v2924 = vld [vmem:[#allocation2 + $0x58] sm:$0xff]
    %2926 = vrot.lane.b32.xlu0 %v2819, 32
    %v2927 = vpop.permute.xlu0 %2926
    %v2928 = vsel %vm288, %v2927, 0
    %2930 = vmatprep.subr.mxu0 0.0
    %2931 = vmatpush1.msra.mxu0 0.0
    %2932 = vmatprep.subr.mxu0 0.0
    %2933 = vmatpush1.msra.mxu0 0.0
    %2934 = vmatprep.subr.mxu0 0.0
    %2935 = vmatpush1.msra.mxu0 0.0
    %2936 = vmatprep.subr.mxu0 0.0
    %2937 = vmatpush1.msra.mxu0 0.0
    %2938 = vmatprep.subr.mxu0 0.0
    %2939 = vmatpush1.msra.mxu0 0.0
    %2940 = vmatprep.subr.mxu0 0.0
    %2941 = vmatpush1.msra.mxu0 0.0
    %2942 = vmatprep.subr.mxu0 0.0
    %2943 = vmatpush1.msra.mxu0 0.0
    %2944 = vmatprep.subr.mxu0 0.0
    %2945 = vmatpush1.msra.mxu0 0.0
    %2946 = vmatprep.subr.mxu0 0.0
    %2947 = vmatpush1.msra.mxu0 0.0
    %2948 = vmatprep.subr.mxu0 0.0
    %2949 = vmatpush1.msra.mxu0 0.0
    %2950 = vmatprep.subr.mxu0 0.0
    %2951 = vmatpush1.msra.mxu0 0.0
    %2952 = vmatprep.subr.mxu0 0.0
    %2953 = vmatpush1.msra.mxu0 0.0
    %2954 = vmatprep.subr.mxu0 0.0
    %2955 = vmatpush1.msra.mxu0 %v2418
    %2956 = vmatprep.subr.mxu0 0.0
    %2957 = vmatpush1.msra.mxu0 %v2417
    %2958 = vmatprep.subr.mxu0 0.0
    %2959 = vmatpush1.msra.mxu0 %v2416
    %2960 = vmatprep.subr.mxu0 0.0
    %2961 = vmatpush1.msra.mxu0 %v2415
    %2962 = vmatprep.subr.mxu0 0.0
    %2963 = vmatpush2.msra.mxu0 0.0
    %2964 = vmatprep.subr.mxu0 0.0
    %2965 = vmatpush2.msra.mxu0 0.0
    %2966 = vmatprep.subr.mxu0 0.0
    %2967 = vmatpush2.msra.mxu0 0.0
    %2968 = vmatprep.subr.mxu0 0.0
    %2969 = vmatpush2.msra.mxu0 0.0
    %2970 = vmatprep.subr.mxu0 0.0
    %2971 = vmatpush2.msra.mxu0 0.0
    %2972 = vmatprep.subr.mxu0 0.0
    %2973 = vmatpush2.msra.mxu0 0.0
    %2974 = vmatprep.subr.mxu0 0.0
    %2975 = vmatpush2.msra.mxu0 0.0
    %2976 = vmatprep.subr.mxu0 0.0
    %2977 = vmatpush2.msra.mxu0 0.0
    %2978 = vmatprep.subr.mxu0 0.0
    %2979 = vmatpush2.msra.mxu0 0.0
    %2980 = vmatprep.subr.mxu0 0.0
    %2981 = vmatpush2.msra.mxu0 0.0
    %2982 = vmatprep.subr.mxu0 0.0
    %2983 = vmatpush2.msra.mxu0 0.0
    %2984 = vmatprep.subr.mxu0 0.0
    %2985 = vmatpush2.msra.mxu0 0.0
    %2986 = vmatprep.subr.mxu0 0.0
    %2987 = vmatpush2.msra.mxu0 0.0
    %2988 = vmatprep.subr.mxu0 0.0
    %2989 = vmatpush2.msra.mxu0 0.0
    %2990 = vmatprep.subr.mxu0 0.0
    %2991 = vmatpush2.msra.mxu0 0.0
    %2992 = vmatprep.subr.mxu0 0.0
    %2993 = vmatpush2.msra.mxu0 0.0
    %2994 = vmatprep.mubr.f32.mxu0 0.0
    %2995 = vmatmul.mubr.f32.gmra.mxu0 %v2928
    %v2996 = vpop.f32.mrf.mxu0
    %v2997 = vadd.f32 0.0, %v2996
    %v2998 = vpop.f32.mrf.mxu0
    %2999 = vdwg.mxu0
    %v3000 = vadd.f32 %v2924, %v2997
    %v3001 = vxor.u32 %v3000, 2147483648
    %v3002 = vmul.f32 %v3001, 1.442695
    %v3003 = vpow.pop %v3002
    %v3004 = vadd.f32 %v3003, 1.0
    %v3005 = vrcp.pop %v3004
    %v3006 = vmul.f32 1.0, %v3005
    %v3007 = vtanh.pop %v3000
    %v3008 = vmul.f32 %v3006, %v2820
    %3010 = vrot.lane.b32.xlu0 %v3007, 64
    %v3011 = vpop.permute.xlu0 %3010
    %v3013 = vmul.f32 %v3006, %v3011
    %3015 = vrot.lane.b32.xlu0 %v3013, 32
    %v3016 = vpop.permute.xlu0 %3015
    %v3018 = vadd.f32 %v3008, %v3016
    %v3019 = vtanh.pop %v3018
    %3021 = vrot.lane.b32.xlu0 %v3019, 64
    %v3022 = vpop.permute.xlu0 %3021
    %v3024 = vmul.f32 %v3006, %v3022
    %v3025 = vsel %vm948, %v3024, %v2819
    %v3026 = vsel %vm948, %v3018, %v2820
    %v3027 = vld [vmem:[#allocation2 + $0x30] sm:$0xff]
    %3029 = vrot.lane.b32.xlu0 %v2922, 32
    %v3030 = vpop.permute.xlu0 %3029
    %v3031 = vsel %vm288, %v3030, 0
    %3033 = vmatprep.subr.mxu0 0.0
    %3034 = vmatpush1.msra.mxu0 0.0
    %3035 = vmatprep.subr.mxu0 0.0
    %3036 = vmatpush1.msra.mxu0 0.0
    %3037 = vmatprep.subr.mxu0 0.0
    %3038 = vmatpush1.msra.mxu0 0.0
    %3039 = vmatprep.subr.mxu0 0.0
    %3040 = vmatpush1.msra.mxu0 0.0
    %3041 = vmatprep.subr.mxu0 0.0
    %3042 = vmatpush1.msra.mxu0 0.0
    %3043 = vmatprep.subr.mxu0 0.0
    %3044 = vmatpush1.msra.mxu0 0.0
    %3045 = vmatprep.subr.mxu0 0.0
    %3046 = vmatpush1.msra.mxu0 0.0
    %3047 = vmatprep.subr.mxu0 0.0
    %3048 = vmatpush1.msra.mxu0 0.0
    %3049 = vmatprep.subr.mxu0 0.0
    %3050 = vmatpush1.msra.mxu0 0.0
    %3051 = vmatprep.subr.mxu0 0.0
    %3052 = vmatpush1.msra.mxu0 0.0
    %3053 = vmatprep.subr.mxu0 0.0
    %3054 = vmatpush1.msra.mxu0 0.0
    %3055 = vmatprep.subr.mxu0 0.0
    %3056 = vmatpush1.msra.mxu0 0.0
    %3057 = vmatprep.subr.mxu0 0.0
    %3058 = vmatpush1.msra.mxu0 %v2414
    %3059 = vmatprep.subr.mxu0 0.0
    %3060 = vmatpush1.msra.mxu0 %v2413
    %3061 = vmatprep.subr.mxu0 0.0
    %3062 = vmatpush1.msra.mxu0 %v2412
    %3063 = vmatprep.subr.mxu0 0.0
    %3064 = vmatpush1.msra.mxu0 %v2411
    %3065 = vmatprep.subr.mxu0 0.0
    %3066 = vmatpush2.msra.mxu0 0.0
    %3067 = vmatprep.subr.mxu0 0.0
    %3068 = vmatpush2.msra.mxu0 0.0
    %3069 = vmatprep.subr.mxu0 0.0
    %3070 = vmatpush2.msra.mxu0 0.0
    %3071 = vmatprep.subr.mxu0 0.0
    %3072 = vmatpush2.msra.mxu0 0.0
    %3073 = vmatprep.subr.mxu0 0.0
    %3074 = vmatpush2.msra.mxu0 0.0
    %3075 = vmatprep.subr.mxu0 0.0
    %3076 = vmatpush2.msra.mxu0 0.0
    %3077 = vmatprep.subr.mxu0 0.0
    %3078 = vmatpush2.msra.mxu0 0.0
    %3079 = vmatprep.subr.mxu0 0.0
    %3080 = vmatpush2.msra.mxu0 0.0
    %3081 = vmatprep.subr.mxu0 0.0
    %3082 = vmatpush2.msra.mxu0 0.0
    %3083 = vmatprep.subr.mxu0 0.0
    %3084 = vmatpush2.msra.mxu0 0.0
    %3085 = vmatprep.subr.mxu0 0.0
    %3086 = vmatpush2.msra.mxu0 0.0
    %3087 = vmatprep.subr.mxu0 0.0
    %3088 = vmatpush2.msra.mxu0 0.0
    %3089 = vmatprep.subr.mxu0 0.0
    %3090 = vmatpush2.msra.mxu0 0.0
    %3091 = vmatprep.subr.mxu0 0.0
    %3092 = vmatpush2.msra.mxu0 0.0
    %3093 = vmatprep.subr.mxu0 0.0
    %3094 = vmatpush2.msra.mxu0 0.0
    %3095 = vmatprep.subr.mxu0 0.0
    %3096 = vmatpush2.msra.mxu0 0.0
    %3097 = vmatprep.mubr.f32.mxu0 0.0
    %3098 = vmatmul.mubr.f32.gmra.mxu0 %v3031
    %v3099 = vpop.f32.mrf.mxu0
    %v3100 = vadd.f32 0.0, %v3099
    %v3101 = vpop.f32.mrf.mxu0
    %3102 = vdwg.mxu0
    %v3103 = vadd.f32 %v3027, %v3100
    %v3104 = vxor.u32 %v3103, 2147483648
    %v3105 = vmul.f32 %v3104, 1.442695
    %v3106 = vpow.pop %v3105
    %v3107 = vadd.f32 %v3106, 1.0
    %v3108 = vrcp.pop %v3107
    %v3109 = vmul.f32 1.0, %v3108
    %v3110 = vtanh.pop %v3103
    %v3111 = vmul.f32 %v3109, %v2923
    %3113 = vrot.lane.b32.xlu0 %v3110, 64
    %v3114 = vpop.permute.xlu0 %3113
    %v3116 = vmul.f32 %v3109, %v3114
    %3118 = vrot.lane.b32.xlu0 %v3116, 32
    %v3119 = vpop.permute.xlu0 %3118
    %v3121 = vadd.f32 %v3111, %v3119
    %v3122 = vtanh.pop %v3121
    %3124 = vrot.lane.b32.xlu0 %v3122, 64
    %v3125 = vpop.permute.xlu0 %3124
    %v3127 = vmul.f32 %v3109, %v3125
    %v3128 = vsel %vm1069, %v3127, %v2922
    %v3129 = vsel %vm1069, %v3121, %v2923
    %v3130 = vld [vmem:[#allocation2 + $0x48] sm:$0xff]
    %3132 = vrot.lane.b32.xlu0 %v3025, 32
    %v3133 = vpop.permute.xlu0 %3132
    %v3134 = vsel %vm288, %v3133, 0
    %3136 = vmatprep.subr.mxu0 0.0
    %3137 = vmatpush1.msra.mxu0 0.0
    %3138 = vmatprep.subr.mxu0 0.0
    %3139 = vmatpush1.msra.mxu0 0.0
    %3140 = vmatprep.subr.mxu0 0.0
    %3141 = vmatpush1.msra.mxu0 0.0
    %3142 = vmatprep.subr.mxu0 0.0
    %3143 = vmatpush1.msra.mxu0 0.0
    %3144 = vmatprep.subr.mxu0 0.0
    %3145 = vmatpush1.msra.mxu0 0.0
    %3146 = vmatprep.subr.mxu0 0.0
    %3147 = vmatpush1.msra.mxu0 0.0
    %3148 = vmatprep.subr.mxu0 0.0
    %3149 = vmatpush1.msra.mxu0 0.0
    %3150 = vmatprep.subr.mxu0 0.0
    %3151 = vmatpush1.msra.mxu0 0.0
    %3152 = vmatprep.subr.mxu0 0.0
    %3153 = vmatpush1.msra.mxu0 0.0
    %3154 = vmatprep.subr.mxu0 0.0
    %3155 = vmatpush1.msra.mxu0 0.0
    %3156 = vmatprep.subr.mxu0 0.0
    %3157 = vmatpush1.msra.mxu0 0.0
    %3158 = vmatprep.subr.mxu0 0.0
    %3159 = vmatpush1.msra.mxu0 0.0
    %3160 = vmatprep.subr.mxu0 0.0
    %3161 = vmatpush1.msra.mxu0 %v2418
    %3162 = vmatprep.subr.mxu0 0.0
    %3163 = vmatpush1.msra.mxu0 %v2417
    %3164 = vmatprep.subr.mxu0 0.0
    %3165 = vmatpush1.msra.mxu0 %v2416
    %3166 = vmatprep.subr.mxu0 0.0
    %3167 = vmatpush1.msra.mxu0 %v2415
    %3168 = vmatprep.subr.mxu0 0.0
    %3169 = vmatpush2.msra.mxu0 0.0
    %3170 = vmatprep.subr.mxu0 0.0
    %3171 = vmatpush2.msra.mxu0 0.0
    %3172 = vmatprep.subr.mxu0 0.0
    %3173 = vmatpush2.msra.mxu0 0.0
    %3174 = vmatprep.subr.mxu0 0.0
    %3175 = vmatpush2.msra.mxu0 0.0
    %3176 = vmatprep.subr.mxu0 0.0
    %3177 = vmatpush2.msra.mxu0 0.0
    %3178 = vmatprep.subr.mxu0 0.0
    %3179 = vmatpush2.msra.mxu0 0.0
    %3180 = vmatprep.subr.mxu0 0.0
    %3181 = vmatpush2.msra.mxu0 0.0
    %3182 = vmatprep.subr.mxu0 0.0
    %3183 = vmatpush2.msra.mxu0 0.0
    %3184 = vmatprep.subr.mxu0 0.0
    %3185 = vmatpush2.msra.mxu0 0.0
    %3186 = vmatprep.subr.mxu0 0.0
    %3187 = vmatpush2.msra.mxu0 0.0
    %3188 = vmatprep.subr.mxu0 0.0
    %3189 = vmatpush2.msra.mxu0 0.0
    %3190 = vmatprep.subr.mxu0 0.0
    %3191 = vmatpush2.msra.mxu0 0.0
    %3192 = vmatprep.subr.mxu0 0.0
    %3193 = vmatpush2.msra.mxu0 0.0
    %3194 = vmatprep.subr.mxu0 0.0
    %3195 = vmatpush2.msra.mxu0 0.0
    %3196 = vmatprep.subr.mxu0 0.0
    %3197 = vmatpush2.msra.mxu0 0.0
    %3198 = vmatprep.subr.mxu0 0.0
    %3199 = vmatpush2.msra.mxu0 0.0
    %3200 = vmatprep.mubr.f32.mxu0 0.0
    %3201 = vmatmul.mubr.f32.gmra.mxu0 %v3134
    %v3202 = vpop.f32.mrf.mxu0
    %v3203 = vadd.f32 0.0, %v3202
    %v3204 = vpop.f32.mrf.mxu0
    %3205 = vdwg.mxu0
    %v3206 = vadd.f32 %v3130, %v3203
    %v3207 = vxor.u32 %v3206, 2147483648
    %v3208 = vmul.f32 %v3207, 1.442695
    %v3209 = vpow.pop %v3208
    %v3210 = vadd.f32 %v3209, 1.0
    %v3211 = vrcp.pop %v3210
    %v3212 = vmul.f32 1.0, %v3211
    %v3213 = vtanh.pop %v3206
    %v3214 = vmul.f32 %v3212, %v3026
    %3216 = vrot.lane.b32.xlu0 %v3213, 64
    %v3217 = vpop.permute.xlu0 %3216
    %v3219 = vmul.f32 %v3212, %v3217
    %3221 = vrot.lane.b32.xlu0 %v3219, 32
    %v3222 = vpop.permute.xlu0 %3221
    %v3224 = vadd.f32 %v3214, %v3222
    %v3225 = vtanh.pop %v3224
    %3227 = vrot.lane.b32.xlu0 %v3225, 64
    %v3228 = vpop.permute.xlu0 %3227
    %v3230 = vmul.f32 %v3212, %v3228
    %v3231 = vsel %vm1178, %v3230, %v3025
    %v3232 = vsel %vm1178, %v3224, %v3026
    %v3233 = vld [vmem:[#allocation2 + $0x40] sm:$0xff]
    %3235 = vrot.lane.b32.xlu0 %v3128, 32
    %v3236 = vpop.permute.xlu0 %3235
    %v3237 = vsel %vm288, %v3236, 0
    %3239 = vmatprep.subr.mxu0 0.0
    %3240 = vmatpush1.msra.mxu0 0.0
    %3241 = vmatprep.subr.mxu0 0.0
    %3242 = vmatpush1.msra.mxu0 0.0
    %3243 = vmatprep.subr.mxu0 0.0
    %3244 = vmatpush1.msra.mxu0 0.0
    %3245 = vmatprep.subr.mxu0 0.0
    %3246 = vmatpush1.msra.mxu0 0.0
    %3247 = vmatprep.subr.mxu0 0.0
    %3248 = vmatpush1.msra.mxu0 0.0
    %3249 = vmatprep.subr.mxu0 0.0
    %3250 = vmatpush1.msra.mxu0 0.0
    %3251 = vmatprep.subr.mxu0 0.0
    %3252 = vmatpush1.msra.mxu0 0.0
    %3253 = vmatprep.subr.mxu0 0.0
    %3254 = vmatpush1.msra.mxu0 0.0
    %3255 = vmatprep.subr.mxu0 0.0
    %3256 = vmatpush1.msra.mxu0 0.0
    %3257 = vmatprep.subr.mxu0 0.0
    %3258 = vmatpush1.msra.mxu0 0.0
    %3259 = vmatprep.subr.mxu0 0.0
    %3260 = vmatpush1.msra.mxu0 0.0
    %3261 = vmatprep.subr.mxu0 0.0
    %3262 = vmatpush1.msra.mxu0 0.0
    %3263 = vmatprep.subr.mxu0 0.0
    %3264 = vmatpush1.msra.mxu0 %v2414
    %3265 = vmatprep.subr.mxu0 0.0
    %3266 = vmatpush1.msra.mxu0 %v2413
    %3267 = vmatprep.subr.mxu0 0.0
    %3268 = vmatpush1.msra.mxu0 %v2412
    %3269 = vmatprep.subr.mxu0 0.0
    %3270 = vmatpush1.msra.mxu0 %v2411
    %3271 = vmatprep.subr.mxu0 0.0
    %3272 = vmatpush2.msra.mxu0 0.0
    %3273 = vmatprep.subr.mxu0 0.0
    %3274 = vmatpush2.msra.mxu0 0.0
    %3275 = vmatprep.subr.mxu0 0.0
    %3276 = vmatpush2.msra.mxu0 0.0
    %3277 = vmatprep.subr.mxu0 0.0
    %3278 = vmatpush2.msra.mxu0 0.0
    %3279 = vmatprep.subr.mxu0 0.0
    %3280 = vmatpush2.msra.mxu0 0.0
    %3281 = vmatprep.subr.mxu0 0.0
    %3282 = vmatpush2.msra.mxu0 0.0
    %3283 = vmatprep.subr.mxu0 0.0
    %3284 = vmatpush2.msra.mxu0 0.0
    %3285 = vmatprep.subr.mxu0 0.0
    %3286 = vmatpush2.msra.mxu0 0.0
    %3287 = vmatprep.subr.mxu0 0.0
    %3288 = vmatpush2.msra.mxu0 0.0
    %3289 = vmatprep.subr.mxu0 0.0
    %3290 = vmatpush2.msra.mxu0 0.0
    %3291 = vmatprep.subr.mxu0 0.0
    %3292 = vmatpush2.msra.mxu0 0.0
    %3293 = vmatprep.subr.mxu0 0.0
    %3294 = vmatpush2.msra.mxu0 0.0
    %3295 = vmatprep.subr.mxu0 0.0
    %3296 = vmatpush2.msra.mxu0 0.0
    %3297 = vmatprep.subr.mxu0 0.0
    %3298 = vmatpush2.msra.mxu0 0.0
    %3299 = vmatprep.subr.mxu0 0.0
    %3300 = vmatpush2.msra.mxu0 0.0
    %3301 = vmatprep.subr.mxu0 0.0
    %3302 = vmatpush2.msra.mxu0 0.0
    %3303 = vmatprep.mubr.f32.mxu0 0.0
    %3304 = vmatmul.mubr.f32.gmra.mxu0 %v3237
    %v3305 = vpop.f32.mrf.mxu0
    %v3306 = vadd.f32 0.0, %v3305
    %v3307 = vpop.f32.mrf.mxu0
    %3308 = vdwg.mxu0
    %v3309 = vadd.f32 %v3233, %v3306
    %v3310 = vxor.u32 %v3309, 2147483648
    %v3311 = vmul.f32 %v3310, 1.442695
    %v3312 = vpow.pop %v3311
    %v3313 = vadd.f32 %v3312, 1.0
    %v3314 = vrcp.pop %v3313
    %v3315 = vmul.f32 1.0, %v3314
    %v3316 = vtanh.pop %v3309
    %v3317 = vmul.f32 %v3315, %v3129
    %3319 = vrot.lane.b32.xlu0 %v3316, 64
    %v3320 = vpop.permute.xlu0 %3319
    %v3322 = vmul.f32 %v3315, %v3320
    %3324 = vrot.lane.b32.xlu0 %v3322, 32
    %v3325 = vpop.permute.xlu0 %3324
    %v3327 = vadd.f32 %v3317, %v3325
    %v3328 = vtanh.pop %v3327
    %3330 = vrot.lane.b32.xlu0 %v3328, 64
    %v3331 = vpop.permute.xlu0 %3330
    %v3333 = vmul.f32 %v3315, %v3331
    %v3334 = vsel %vm1178, %v3333, %v3128
    %v3335 = vsel %vm1178, %v3327, %v3129
    %v3336 = vld [vmem:[#allocation2 + $0x38] sm:$0xff]
    %3338 = vrot.lane.b32.xlu0 %v3231, 32
    %v3339 = vpop.permute.xlu0 %3338
    %v3340 = vsel %vm288, %v3339, 0
    %3342 = vmatprep.subr.mxu0 0.0
    %3343 = vmatpush1.msra.mxu0 0.0
    %3344 = vmatprep.subr.mxu0 0.0
    %3345 = vmatpush1.msra.mxu0 0.0
    %3346 = vmatprep.subr.mxu0 0.0
    %3347 = vmatpush1.msra.mxu0 0.0
    %3348 = vmatprep.subr.mxu0 0.0
    %3349 = vmatpush1.msra.mxu0 0.0
    %3350 = vmatprep.subr.mxu0 0.0
    %3351 = vmatpush1.msra.mxu0 0.0
    %3352 = vmatprep.subr.mxu0 0.0
    %3353 = vmatpush1.msra.mxu0 0.0
    %3354 = vmatprep.subr.mxu0 0.0
    %3355 = vmatpush1.msra.mxu0 0.0
    %3356 = vmatprep.subr.mxu0 0.0
    %3357 = vmatpush1.msra.mxu0 0.0
    %3358 = vmatprep.subr.mxu0 0.0
    %3359 = vmatpush1.msra.mxu0 0.0
    %3360 = vmatprep.subr.mxu0 0.0
    %3361 = vmatpush1.msra.mxu0 0.0
    %3362 = vmatprep.subr.mxu0 0.0
    %3363 = vmatpush1.msra.mxu0 0.0
    %3364 = vmatprep.subr.mxu0 0.0
    %3365 = vmatpush1.msra.mxu0 0.0
    %3366 = vmatprep.subr.mxu0 0.0
    %3367 = vmatpush1.msra.mxu0 %v2418
    %3368 = vmatprep.subr.mxu0 0.0
    %3369 = vmatpush1.msra.mxu0 %v2417
    %3370 = vmatprep.subr.mxu0 0.0
    %3371 = vmatpush1.msra.mxu0 %v2416
    %3372 = vmatprep.subr.mxu0 0.0
    %3373 = vmatpush1.msra.mxu0 %v2415
    %3374 = vmatprep.subr.mxu0 0.0
    %3375 = vmatpush2.msra.mxu0 0.0
    %3376 = vmatprep.subr.mxu0 0.0
    %3377 = vmatpush2.msra.mxu0 0.0
    %3378 = vmatprep.subr.mxu0 0.0
    %3379 = vmatpush2.msra.mxu0 0.0
    %3380 = vmatprep.subr.mxu0 0.0
    %3381 = vmatpush2.msra.mxu0 0.0
    %3382 = vmatprep.subr.mxu0 0.0
    %3383 = vmatpush2.msra.mxu0 0.0
    %3384 = vmatprep.subr.mxu0 0.0
    %3385 = vmatpush2.msra.mxu0 0.0
    %3386 = vmatprep.subr.mxu0 0.0
    %3387 = vmatpush2.msra.mxu0 0.0
    %3388 = vmatprep.subr.mxu0 0.0
    %3389 = vmatpush2.msra.mxu0 0.0
    %3390 = vmatprep.subr.mxu0 0.0
    %3391 = vmatpush2.msra.mxu0 0.0
    %3392 = vmatprep.subr.mxu0 0.0
    %3393 = vmatpush2.msra.mxu0 0.0
    %3394 = vmatprep.subr.mxu0 0.0
    %3395 = vmatpush2.msra.mxu0 0.0
    %3396 = vmatprep.subr.mxu0 0.0
    %3397 = vmatpush2.msra.mxu0 0.0
    %3398 = vmatprep.subr.mxu0 0.0
    %3399 = vmatpush2.msra.mxu0 0.0
    %3400 = vmatprep.subr.mxu0 0.0
    %3401 = vmatpush2.msra.mxu0 0.0
    %3402 = vmatprep.subr.mxu0 0.0
    %3403 = vmatpush2.msra.mxu0 0.0
    %3404 = vmatprep.subr.mxu0 0.0
    %3405 = vmatpush2.msra.mxu0 0.0
    %3406 = vmatprep.mubr.f32.mxu0 0.0
    %3407 = vmatmul.mubr.f32.gmra.mxu0 %v3340
    %v3408 = vpop.f32.mrf.mxu0
    %v3409 = vadd.f32 0.0, %v3408
    %v3410 = vpop.f32.mrf.mxu0
    %3411 = vdwg.mxu0
    %v3412 = vadd.f32 %v3336, %v3409
    %v3413 = vxor.u32 %v3412, 2147483648
    %v3414 = vmul.f32 %v3413, 1.442695
    %v3415 = vpow.pop %v3414
    %v3416 = vadd.f32 %v3415, 1.0
    %v3417 = vrcp.pop %v3416
    %v3418 = vmul.f32 1.0, %v3417
    %v3419 = vtanh.pop %v3412
    %v3420 = vmul.f32 %v3418, %v3232
    %3422 = vrot.lane.b32.xlu0 %v3419, 64
    %v3423 = vpop.permute.xlu0 %3422
    %v3425 = vmul.f32 %v3418, %v3423
    %3427 = vrot.lane.b32.xlu0 %v3425, 32
    %v3428 = vpop.permute.xlu0 %3427
    %v3430 = vadd.f32 %v3420, %v3428
    %v3431 = vtanh.pop %v3430
    %3433 = vrot.lane.b32.xlu0 %v3431, 64
    %v3434 = vpop.permute.xlu0 %3433
    %v3436 = vmul.f32 %v3418, %v3434
    %v3437 = vsel %vm1069, %v3436, %v3231
    %v3438 = vsel %vm1069, %v3430, %v3232
    %v3439 = vld [vmem:[#allocation2 + $0x50] sm:$0xff]
    %3441 = vrot.lane.b32.xlu0 %v3334, 32
    %v3442 = vpop.permute.xlu0 %3441
    %v3443 = vsel %vm288, %v3442, 0
    %3445 = vmatprep.subr.mxu0 0.0
    %3446 = vmatpush1.msra.mxu0 0.0
    %3447 = vmatprep.subr.mxu0 0.0
    %3448 = vmatpush1.msra.mxu0 0.0
    %3449 = vmatprep.subr.mxu0 0.0
    %3450 = vmatpush1.msra.mxu0 0.0
    %3451 = vmatprep.subr.mxu0 0.0
    %3452 = vmatpush1.msra.mxu0 0.0
    %3453 = vmatprep.subr.mxu0 0.0
    %3454 = vmatpush1.msra.mxu0 0.0
    %3455 = vmatprep.subr.mxu0 0.0
    %3456 = vmatpush1.msra.mxu0 0.0
    %3457 = vmatprep.subr.mxu0 0.0
    %3458 = vmatpush1.msra.mxu0 0.0
    %3459 = vmatprep.subr.mxu0 0.0
    %3460 = vmatpush1.msra.mxu0 0.0
    %3461 = vmatprep.subr.mxu0 0.0
    %3462 = vmatpush1.msra.mxu0 0.0
    %3463 = vmatprep.subr.mxu0 0.0
    %3464 = vmatpush1.msra.mxu0 0.0
    %3465 = vmatprep.subr.mxu0 0.0
    %3466 = vmatpush1.msra.mxu0 0.0
    %3467 = vmatprep.subr.mxu0 0.0
    %3468 = vmatpush1.msra.mxu0 0.0
    %3469 = vmatprep.subr.mxu0 0.0
    %3470 = vmatpush1.msra.mxu0 %v2414
    %3471 = vmatprep.subr.mxu0 0.0
    %3472 = vmatpush1.msra.mxu0 %v2413
    %3473 = vmatprep.subr.mxu0 0.0
    %3474 = vmatpush1.msra.mxu0 %v2412
    %3475 = vmatprep.subr.mxu0 0.0
    %3476 = vmatpush1.msra.mxu0 %v2411
    %3477 = vmatprep.subr.mxu0 0.0
    %3478 = vmatpush2.msra.mxu0 0.0
    %3479 = vmatprep.subr.mxu0 0.0
    %3480 = vmatpush2.msra.mxu0 0.0
    %3481 = vmatprep.subr.mxu0 0.0
    %3482 = vmatpush2.msra.mxu0 0.0
    %3483 = vmatprep.subr.mxu0 0.0
    %3484 = vmatpush2.msra.mxu0 0.0
    %3485 = vmatprep.subr.mxu0 0.0
    %3486 = vmatpush2.msra.mxu0 0.0
    %3487 = vmatprep.subr.mxu0 0.0
    %3488 = vmatpush2.msra.mxu0 0.0
    %3489 = vmatprep.subr.mxu0 0.0
    %3490 = vmatpush2.msra.mxu0 0.0
    %3491 = vmatprep.subr.mxu0 0.0
    %3492 = vmatpush2.msra.mxu0 0.0
    %3493 = vmatprep.subr.mxu0 0.0
    %3494 = vmatpush2.msra.mxu0 0.0
    %3495 = vmatprep.subr.mxu0 0.0
    %3496 = vmatpush2.msra.mxu0 0.0
    %3497 = vmatprep.subr.mxu0 0.0
    %3498 = vmatpush2.msra.mxu0 0.0
    %3499 = vmatprep.subr.mxu0 0.0
    %3500 = vmatpush2.msra.mxu0 0.0
    %3501 = vmatprep.subr.mxu0 0.0
    %3502 = vmatpush2.msra.mxu0 0.0
    %3503 = vmatprep.subr.mxu0 0.0
    %3504 = vmatpush2.msra.mxu0 0.0
    %3505 = vmatprep.subr.mxu0 0.0
    %3506 = vmatpush2.msra.mxu0 0.0
    %3507 = vmatprep.subr.mxu0 0.0
    %3508 = vmatpush2.msra.mxu0 0.0
    %3509 = vmatprep.mubr.f32.mxu0 0.0
    %3510 = vmatmul.mubr.f32.gmra.mxu0 %v3443
    %v3511 = vpop.f32.mrf.mxu0
    %v3512 = vadd.f32 0.0, %v3511
    %v3513 = vpop.f32.mrf.mxu0
    %3514 = vdwg.mxu0
    %v3515 = vadd.f32 %v3439, %v3512
    %v3516 = vxor.u32 %v3515, 2147483648
    %v3517 = vmul.f32 %v3516, 1.442695
    %v3518 = vpow.pop %v3517
    %v3519 = vadd.f32 %v3518, 1.0
    %v3520 = vrcp.pop %v3519
    %v3521 = vmul.f32 1.0, %v3520
    %v3522 = vtanh.pop %v3515
    %v3523 = vmul.f32 %v3521, %v3335
    %3525 = vrot.lane.b32.xlu0 %v3522, 64
    %v3526 = vpop.permute.xlu0 %3525
    %v3528 = vmul.f32 %v3521, %v3526
    %3530 = vrot.lane.b32.xlu0 %v3528, 32
    %v3531 = vpop.permute.xlu0 %3530
    %v3533 = vadd.f32 %v3523, %v3531
    %v3534 = vtanh.pop %v3533
    %3536 = vrot.lane.b32.xlu0 %v3534, 64
    %v3537 = vpop.permute.xlu0 %3536
    %v3539 = vmul.f32 %v3521, %v3537
    %v3540 = vsel %vm948, %v3539, %v3334
    %v3541 = vsel %vm948, %v3533, %v3335
    %v3542 = vld [vmem:[#allocation2 + $0x28] sm:$0xff]
    %3544 = vrot.lane.b32.xlu0 %v3437, 32
    %v3545 = vpop.permute.xlu0 %3544
    %v3546 = vsel %vm288, %v3545, 0
    %3548 = vmatprep.subr.mxu0 0.0
    %3549 = vmatpush1.msra.mxu0 0.0
    %3550 = vmatprep.subr.mxu0 0.0
    %3551 = vmatpush1.msra.mxu0 0.0
    %3552 = vmatprep.subr.mxu0 0.0
    %3553 = vmatpush1.msra.mxu0 0.0
    %3554 = vmatprep.subr.mxu0 0.0
    %3555 = vmatpush1.msra.mxu0 0.0
    %3556 = vmatprep.subr.mxu0 0.0
    %3557 = vmatpush1.msra.mxu0 0.0
    %3558 = vmatprep.subr.mxu0 0.0
    %3559 = vmatpush1.msra.mxu0 0.0
    %3560 = vmatprep.subr.mxu0 0.0
    %3561 = vmatpush1.msra.mxu0 0.0
    %3562 = vmatprep.subr.mxu0 0.0
    %3563 = vmatpush1.msra.mxu0 0.0
    %3564 = vmatprep.subr.mxu0 0.0
    %3565 = vmatpush1.msra.mxu0 0.0
    %3566 = vmatprep.subr.mxu0 0.0
    %3567 = vmatpush1.msra.mxu0 0.0
    %3568 = vmatprep.subr.mxu0 0.0
    %3569 = vmatpush1.msra.mxu0 0.0
    %3570 = vmatprep.subr.mxu0 0.0
    %3571 = vmatpush1.msra.mxu0 0.0
    %3572 = vmatprep.subr.mxu0 0.0
    %3573 = vmatpush1.msra.mxu0 %v2418
    %3574 = vmatprep.subr.mxu0 0.0
    %3575 = vmatpush1.msra.mxu0 %v2417
    %3576 = vmatprep.subr.mxu0 0.0
    %3577 = vmatpush1.msra.mxu0 %v2416
    %3578 = vmatprep.subr.mxu0 0.0
    %3579 = vmatpush1.msra.mxu0 %v2415
    %3580 = vmatprep.subr.mxu0 0.0
    %3581 = vmatpush2.msra.mxu0 0.0
    %3582 = vmatprep.subr.mxu0 0.0
    %3583 = vmatpush2.msra.mxu0 0.0
    %3584 = vmatprep.subr.mxu0 0.0
    %3585 = vmatpush2.msra.mxu0 0.0
    %3586 = vmatprep.subr.mxu0 0.0
    %3587 = vmatpush2.msra.mxu0 0.0
    %3588 = vmatprep.subr.mxu0 0.0
    %3589 = vmatpush2.msra.mxu0 0.0
    %3590 = vmatprep.subr.mxu0 0.0
    %3591 = vmatpush2.msra.mxu0 0.0
    %3592 = vmatprep.subr.mxu0 0.0
    %3593 = vmatpush2.msra.mxu0 0.0
    %3594 = vmatprep.subr.mxu0 0.0
    %3595 = vmatpush2.msra.mxu0 0.0
    %3596 = vmatprep.subr.mxu0 0.0
    %3597 = vmatpush2.msra.mxu0 0.0
    %3598 = vmatprep.subr.mxu0 0.0
    %3599 = vmatpush2.msra.mxu0 0.0
    %3600 = vmatprep.subr.mxu0 0.0
    %3601 = vmatpush2.msra.mxu0 0.0
    %3602 = vmatprep.subr.mxu0 0.0
    %3603 = vmatpush2.msra.mxu0 0.0
    %3604 = vmatprep.subr.mxu0 0.0
    %3605 = vmatpush2.msra.mxu0 0.0
    %3606 = vmatprep.subr.mxu0 0.0
    %3607 = vmatpush2.msra.mxu0 0.0
    %3608 = vmatprep.subr.mxu0 0.0
    %3609 = vmatpush2.msra.mxu0 0.0
    %3610 = vmatprep.subr.mxu0 0.0
    %3611 = vmatpush2.msra.mxu0 0.0
    %3612 = vmatprep.mubr.f32.mxu0 0.0
    %3613 = vmatmul.mubr.f32.gmra.mxu0 %v3546
    %v3614 = vpop.f32.mrf.mxu0
    %v3615 = vadd.f32 0.0, %v3614
    %v3616 = vpop.f32.mrf.mxu0
    %3617 = vdwg.mxu0
    %v3618 = vadd.f32 %v3542, %v3615
    %v3619 = vxor.u32 %v3618, 2147483648
    %v3620 = vmul.f32 %v3619, 1.442695
    %v3621 = vpow.pop %v3620
    %v3622 = vadd.f32 %v3621, 1.0
    %v3623 = vrcp.pop %v3622
    %v3624 = vmul.f32 1.0, %v3623
    %v3625 = vtanh.pop %v3618
    %v3626 = vmul.f32 %v3624, %v3438
    %3628 = vrot.lane.b32.xlu0 %v3625, 64
    %v3629 = vpop.permute.xlu0 %3628
    %v3631 = vmul.f32 %v3624, %v3629
    %3633 = vrot.lane.b32.xlu0 %v3631, 32
    %v3634 = vpop.permute.xlu0 %3633
    %v3636 = vadd.f32 %v3626, %v3634
    %v3637 = vtanh.pop %v3636
    %3639 = vrot.lane.b32.xlu0 %v3637, 64
    %v3640 = vpop.permute.xlu0 %3639
    %v3642 = vmul.f32 %v3624, %v3640
    %v3643 = vsel %vm839, %v3642, %v3437
    %v3644 = vsel %vm839, %v3636, %v3438
    %v3645 = vld [vmem:[#allocation2 + $0x60] sm:$0xff]
    %3647 = vrot.lane.b32.xlu0 %v3540, 32
    %v3648 = vpop.permute.xlu0 %3647
    %v3649 = vsel %vm288, %v3648, 0
    %3651 = vmatprep.subr.mxu0 0.0
    %3652 = vmatpush1.msra.mxu0 0.0
    %3653 = vmatprep.subr.mxu0 0.0
    %3654 = vmatpush1.msra.mxu0 0.0
    %3655 = vmatprep.subr.mxu0 0.0
    %3656 = vmatpush1.msra.mxu0 0.0
    %3657 = vmatprep.subr.mxu0 0.0
    %3658 = vmatpush1.msra.mxu0 0.0
    %3659 = vmatprep.subr.mxu0 0.0
    %3660 = vmatpush1.msra.mxu0 0.0
    %3661 = vmatprep.subr.mxu0 0.0
    %3662 = vmatpush1.msra.mxu0 0.0
    %3663 = vmatprep.subr.mxu0 0.0
    %3664 = vmatpush1.msra.mxu0 0.0
    %3665 = vmatprep.subr.mxu0 0.0
    %3666 = vmatpush1.msra.mxu0 0.0
    %3667 = vmatprep.subr.mxu0 0.0
    %3668 = vmatpush1.msra.mxu0 0.0
    %3669 = vmatprep.subr.mxu0 0.0
    %3670 = vmatpush1.msra.mxu0 0.0
    %3671 = vmatprep.subr.mxu0 0.0
    %3672 = vmatpush1.msra.mxu0 0.0
    %3673 = vmatprep.subr.mxu0 0.0
    %3674 = vmatpush1.msra.mxu0 0.0
    %3675 = vmatprep.subr.mxu0 0.0
    %3676 = vmatpush1.msra.mxu0 %v2414
    %3677 = vmatprep.subr.mxu0 0.0
    %3678 = vmatpush1.msra.mxu0 %v2413
    %3679 = vmatprep.subr.mxu0 0.0
    %3680 = vmatpush1.msra.mxu0 %v2412
    %3681 = vmatprep.subr.mxu0 0.0
    %3682 = vmatpush1.msra.mxu0 %v2411
    %3683 = vmatprep.subr.mxu0 0.0
    %3684 = vmatpush2.msra.mxu0 0.0
    %3685 = vmatprep.subr.mxu0 0.0
    %3686 = vmatpush2.msra.mxu0 0.0
    %3687 = vmatprep.subr.mxu0 0.0
    %3688 = vmatpush2.msra.mxu0 0.0
    %3689 = vmatprep.subr.mxu0 0.0
    %3690 = vmatpush2.msra.mxu0 0.0
    %3691 = vmatprep.subr.mxu0 0.0
    %3692 = vmatpush2.msra.mxu0 0.0
    %3693 = vmatprep.subr.mxu0 0.0
    %3694 = vmatpush2.msra.mxu0 0.0
    %3695 = vmatprep.subr.mxu0 0.0
    %3696 = vmatpush2.msra.mxu0 0.0
    %3697 = vmatprep.subr.mxu0 0.0
    %3698 = vmatpush2.msra.mxu0 0.0
    %3699 = vmatprep.subr.mxu0 0.0
    %3700 = vmatpush2.msra.mxu0 0.0
    %3701 = vmatprep.subr.mxu0 0.0
    %3702 = vmatpush2.msra.mxu0 0.0
    %3703 = vmatprep.subr.mxu0 0.0
    %3704 = vmatpush2.msra.mxu0 0.0
    %3705 = vmatprep.subr.mxu0 0.0
    %3706 = vmatpush2.msra.mxu0 0.0
    %3707 = vmatprep.subr.mxu0 0.0
    %3708 = vmatpush2.msra.mxu0 0.0
    %3709 = vmatprep.subr.mxu0 0.0
    %3710 = vmatpush2.msra.mxu0 0.0
    %3711 = vmatprep.subr.mxu0 0.0
    %3712 = vmatpush2.msra.mxu0 0.0
    %3713 = vmatprep.subr.mxu0 0.0
    %3714 = vmatpush2.msra.mxu0 0.0
    %3715 = vmatprep.mubr.f32.mxu0 0.0
    %3716 = vmatmul.mubr.f32.gmra.mxu0 %v3649
    %v3717 = vpop.f32.mrf.mxu0
    %v3718 = vadd.f32 0.0, %v3717
    %v3719 = vpop.f32.mrf.mxu0
    %3720 = vdwg.mxu0
    %v3721 = vadd.f32 %v3645, %v3718
    %v3722 = vxor.u32 %v3721, 2147483648
    %v3723 = vmul.f32 %v3722, 1.442695
    %v3724 = vpow.pop %v3723
    %v3725 = vadd.f32 %v3724, 1.0
    %v3726 = vrcp.pop %v3725
    %v3727 = vmul.f32 1.0, %v3726
    %v3728 = vtanh.pop %v3721
    %v3729 = vmul.f32 %v3727, %v3541
    %3731 = vrot.lane.b32.xlu0 %v3728, 64
    %v3732 = vpop.permute.xlu0 %3731
    %v3734 = vmul.f32 %v3727, %v3732
    %3736 = vrot.lane.b32.xlu0 %v3734, 32
    %v3737 = vpop.permute.xlu0 %3736
    %v3739 = vadd.f32 %v3729, %v3737
    %v3740 = vtanh.pop %v3739
    %3742 = vrot.lane.b32.xlu0 %v3740, 64
    %v3743 = vpop.permute.xlu0 %3742
    %v3745 = vmul.f32 %v3727, %v3743
    %v3746 = vsel %vm718, %v3745, %v3540
    %v3747 = vsel %vm718, %v3739, %v3541
    %v3748 = vld [vmem:[#allocation2 + $0x18] sm:$0xff]
    %3750 = vrot.lane.b32.xlu0 %v3643, 32
    %v3751 = vpop.permute.xlu0 %3750
    %v3752 = vsel %vm288, %v3751, 0
    %3754 = vmatprep.subr.mxu0 0.0
    %3755 = vmatpush1.msra.mxu0 0.0
    %3756 = vmatprep.subr.mxu0 0.0
    %3757 = vmatpush1.msra.mxu0 0.0
    %3758 = vmatprep.subr.mxu0 0.0
    %3759 = vmatpush1.msra.mxu0 0.0
    %3760 = vmatprep.subr.mxu0 0.0
    %3761 = vmatpush1.msra.mxu0 0.0
    %3762 = vmatprep.subr.mxu0 0.0
    %3763 = vmatpush1.msra.mxu0 0.0
    %3764 = vmatprep.subr.mxu0 0.0
    %3765 = vmatpush1.msra.mxu0 0.0
    %3766 = vmatprep.subr.mxu0 0.0
    %3767 = vmatpush1.msra.mxu0 0.0
    %3768 = vmatprep.subr.mxu0 0.0
    %3769 = vmatpush1.msra.mxu0 0.0
    %3770 = vmatprep.subr.mxu0 0.0
    %3771 = vmatpush1.msra.mxu0 0.0
    %3772 = vmatprep.subr.mxu0 0.0
    %3773 = vmatpush1.msra.mxu0 0.0
    %3774 = vmatprep.subr.mxu0 0.0
    %3775 = vmatpush1.msra.mxu0 0.0
    %3776 = vmatprep.subr.mxu0 0.0
    %3777 = vmatpush1.msra.mxu0 0.0
    %3778 = vmatprep.subr.mxu0 0.0
    %3779 = vmatpush1.msra.mxu0 %v2418
    %3780 = vmatprep.subr.mxu0 0.0
    %3781 = vmatpush1.msra.mxu0 %v2417
    %3782 = vmatprep.subr.mxu0 0.0
    %3783 = vmatpush1.msra.mxu0 %v2416
    %3784 = vmatprep.subr.mxu0 0.0
    %3785 = vmatpush1.msra.mxu0 %v2415
    %3786 = vmatprep.subr.mxu0 0.0
    %3787 = vmatpush2.msra.mxu0 0.0
    %3788 = vmatprep.subr.mxu0 0.0
    %3789 = vmatpush2.msra.mxu0 0.0
    %3790 = vmatprep.subr.mxu0 0.0
    %3791 = vmatpush2.msra.mxu0 0.0
    %3792 = vmatprep.subr.mxu0 0.0
    %3793 = vmatpush2.msra.mxu0 0.0
    %3794 = vmatprep.subr.mxu0 0.0
    %3795 = vmatpush2.msra.mxu0 0.0
    %3796 = vmatprep.subr.mxu0 0.0
    %3797 = vmatpush2.msra.mxu0 0.0
    %3798 = vmatprep.subr.mxu0 0.0
    %3799 = vmatpush2.msra.mxu0 0.0
    %3800 = vmatprep.subr.mxu0 0.0
    %3801 = vmatpush2.msra.mxu0 0.0
    %3802 = vmatprep.subr.mxu0 0.0
    %3803 = vmatpush2.msra.mxu0 0.0
    %3804 = vmatprep.subr.mxu0 0.0
    %3805 = vmatpush2.msra.mxu0 0.0
    %3806 = vmatprep.subr.mxu0 0.0
    %3807 = vmatpush2.msra.mxu0 0.0
    %3808 = vmatprep.subr.mxu0 0.0
    %3809 = vmatpush2.msra.mxu0 0.0
    %3810 = vmatprep.subr.mxu0 0.0
    %3811 = vmatpush2.msra.mxu0 0.0
    %3812 = vmatprep.subr.mxu0 0.0
    %3813 = vmatpush2.msra.mxu0 0.0
    %3814 = vmatprep.subr.mxu0 0.0
    %3815 = vmatpush2.msra.mxu0 0.0
    %3816 = vmatprep.subr.mxu0 0.0
    %3817 = vmatpush2.msra.mxu0 0.0
    %3818 = vmatprep.mubr.f32.mxu0 0.0
    %3819 = vmatmul.mubr.f32.gmra.mxu0 %v3752
    %v3820 = vpop.f32.mrf.mxu0
    %v3821 = vadd.f32 0.0, %v3820
    %v3822 = vpop.f32.mrf.mxu0
    %3823 = vdwg.mxu0
    %v3824 = vadd.f32 %v3748, %v3821
    %v3825 = vxor.u32 %v3824, 2147483648
    %v3826 = vmul.f32 %v3825, 1.442695
    %v3827 = vpow.pop %v3826
    %v3828 = vadd.f32 %v3827, 1.0
    %v3829 = vrcp.pop %v3828
    %v3830 = vmul.f32 1.0, %v3829
    %v3831 = vtanh.pop %v3824
    %v3832 = vmul.f32 %v3830, %v3644
    %3834 = vrot.lane.b32.xlu0 %v3831, 64
    %v3835 = vpop.permute.xlu0 %3834
    %v3837 = vmul.f32 %v3830, %v3835
    %3839 = vrot.lane.b32.xlu0 %v3837, 32
    %v3840 = vpop.permute.xlu0 %3839
    %v3842 = vadd.f32 %v3832, %v3840
    %v3843 = vtanh.pop %v3842
    %3845 = vrot.lane.b32.xlu0 %v3843, 64
    %v3846 = vpop.permute.xlu0 %3845
    %v3848 = vmul.f32 %v3830, %v3846
    %v3849 = vsel %vm612, %v3848, %v3643
    %v3850 = vsel %vm612, %v3842, %v3644
    %v3851 = vld [vmem:[#allocation2 + $0x70] sm:$0xff]
    %3853 = vrot.lane.b32.xlu0 %v3746, 32
    %v3854 = vpop.permute.xlu0 %3853
    %v3855 = vsel %vm288, %v3854, 0
    %3857 = vmatprep.subr.mxu0 0.0
    %3858 = vmatpush1.msra.mxu0 0.0
    %3859 = vmatprep.subr.mxu0 0.0
    %3860 = vmatpush1.msra.mxu0 0.0
    %3861 = vmatprep.subr.mxu0 0.0
    %3862 = vmatpush1.msra.mxu0 0.0
    %3863 = vmatprep.subr.mxu0 0.0
    %3864 = vmatpush1.msra.mxu0 0.0
    %3865 = vmatprep.subr.mxu0 0.0
    %3866 = vmatpush1.msra.mxu0 0.0
    %3867 = vmatprep.subr.mxu0 0.0
    %3868 = vmatpush1.msra.mxu0 0.0
    %3869 = vmatprep.subr.mxu0 0.0
    %3870 = vmatpush1.msra.mxu0 0.0
    %3871 = vmatprep.subr.mxu0 0.0
    %3872 = vmatpush1.msra.mxu0 0.0
    %3873 = vmatprep.subr.mxu0 0.0
    %3874 = vmatpush1.msra.mxu0 0.0
    %3875 = vmatprep.subr.mxu0 0.0
    %3876 = vmatpush1.msra.mxu0 0.0
    %3877 = vmatprep.subr.mxu0 0.0
    %3878 = vmatpush1.msra.mxu0 0.0
    %3879 = vmatprep.subr.mxu0 0.0
    %3880 = vmatpush1.msra.mxu0 0.0
    %3881 = vmatprep.subr.mxu0 0.0
    %3882 = vmatpush1.msra.mxu0 %v2414
    %3883 = vmatprep.subr.mxu0 0.0
    %3884 = vmatpush1.msra.mxu0 %v2413
    %3885 = vmatprep.subr.mxu0 0.0
    %3886 = vmatpush1.msra.mxu0 %v2412
    %3887 = vmatprep.subr.mxu0 0.0
    %3888 = vmatpush1.msra.mxu0 %v2411
    %3889 = vmatprep.subr.mxu0 0.0
    %3890 = vmatpush2.msra.mxu0 0.0
    %3891 = vmatprep.subr.mxu0 0.0
    %3892 = vmatpush2.msra.mxu0 0.0
    %3893 = vmatprep.subr.mxu0 0.0
    %3894 = vmatpush2.msra.mxu0 0.0
    %3895 = vmatprep.subr.mxu0 0.0
    %3896 = vmatpush2.msra.mxu0 0.0
    %3897 = vmatprep.subr.mxu0 0.0
    %3898 = vmatpush2.msra.mxu0 0.0
    %3899 = vmatprep.subr.mxu0 0.0
    %3900 = vmatpush2.msra.mxu0 0.0
    %3901 = vmatprep.subr.mxu0 0.0
    %3902 = vmatpush2.msra.mxu0 0.0
    %3903 = vmatprep.subr.mxu0 0.0
    %3904 = vmatpush2.msra.mxu0 0.0
    %3905 = vmatprep.subr.mxu0 0.0
    %3906 = vmatpush2.msra.mxu0 0.0
    %3907 = vmatprep.subr.mxu0 0.0
    %3908 = vmatpush2.msra.mxu0 0.0
    %3909 = vmatprep.subr.mxu0 0.0
    %3910 = vmatpush2.msra.mxu0 0.0
    %3911 = vmatprep.subr.mxu0 0.0
    %3912 = vmatpush2.msra.mxu0 0.0
    %3913 = vmatprep.subr.mxu0 0.0
    %3914 = vmatpush2.msra.mxu0 0.0
    %3915 = vmatprep.subr.mxu0 0.0
    %3916 = vmatpush2.msra.mxu0 0.0
    %3917 = vmatprep.subr.mxu0 0.0
    %3918 = vmatpush2.msra.mxu0 0.0
    %3919 = vmatprep.subr.mxu0 0.0
    %3920 = vmatpush2.msra.mxu0 0.0
    %3921 = vmatprep.mubr.f32.mxu0 0.0
    %3922 = vmatmul.mubr.f32.gmra.mxu0 %v3855
    %v3923 = vpop.f32.mrf.mxu0
    %v3924 = vadd.f32 0.0, %v3923
    %v3925 = vpop.f32.mrf.mxu0
    %3926 = vdwg.mxu0
    %v3927 = vadd.f32 %v3851, %v3924
    %v3928 = vxor.u32 %v3927, 2147483648
    %v3929 = vmul.f32 %v3928, 1.442695
    %v3930 = vpow.pop %v3929
    %v3931 = vadd.f32 %v3930, 1.0
    %v3932 = vrcp.pop %v3931
    %v3933 = vmul.f32 1.0, %v3932
    %v3934 = vtanh.pop %v3927
    %v3935 = vmul.f32 %v3933, %v3747
    %3937 = vrot.lane.b32.xlu0 %v3934, 64
    %v3938 = vpop.permute.xlu0 %3937
    %v3940 = vmul.f32 %v3933, %v3938
    %3942 = vrot.lane.b32.xlu0 %v3940, 32
    %v3943 = vpop.permute.xlu0 %3942
    %v3945 = vadd.f32 %v3935, %v3943
    %v3946 = vtanh.pop %v3945
    %3948 = vrot.lane.b32.xlu0 %v3946, 64
    %v3949 = vpop.permute.xlu0 %3948
    %v3951 = vmul.f32 %v3933, %v3949
    %v3952 = vsel %vm496, %v3951, %v3746
    %v3953 = vld [vmem:[#allocation2 + $0x8] sm:$0xff]
    %3955 = vrot.lane.b32.xlu0 %v3849, 32
    %v3956 = vpop.permute.xlu0 %3955
    %v3957 = vsel %vm288, %v3956, 0
    %3959 = vmatprep.subr.mxu0 0.0
    %3960 = vmatpush1.msra.mxu0 0.0
    %3961 = vmatprep.subr.mxu0 0.0
    %3962 = vmatpush1.msra.mxu0 0.0
    %3963 = vmatprep.subr.mxu0 0.0
    %3964 = vmatpush1.msra.mxu0 0.0
    %3965 = vmatprep.subr.mxu0 0.0
    %3966 = vmatpush1.msra.mxu0 0.0
    %3967 = vmatprep.subr.mxu0 0.0
    %3968 = vmatpush1.msra.mxu0 0.0
    %3969 = vmatprep.subr.mxu0 0.0
    %3970 = vmatpush1.msra.mxu0 0.0
    %3971 = vmatprep.subr.mxu0 0.0
    %3972 = vmatpush1.msra.mxu0 0.0
    %3973 = vmatprep.subr.mxu0 0.0
    %3974 = vmatpush1.msra.mxu0 0.0
    %3975 = vmatprep.subr.mxu0 0.0
    %3976 = vmatpush1.msra.mxu0 0.0
    %3977 = vmatprep.subr.mxu0 0.0
    %3978 = vmatpush1.msra.mxu0 0.0
    %3979 = vmatprep.subr.mxu0 0.0
    %3980 = vmatpush1.msra.mxu0 0.0
    %3981 = vmatprep.subr.mxu0 0.0
    %3982 = vmatpush1.msra.mxu0 0.0
    %3983 = vmatprep.subr.mxu0 0.0
    %3984 = vmatpush1.msra.mxu0 %v2418
    %3985 = vmatprep.subr.mxu0 0.0
    %3986 = vmatpush1.msra.mxu0 %v2417
    %3987 = vmatprep.subr.mxu0 0.0
    %3988 = vmatpush1.msra.mxu0 %v2416
    %3989 = vmatprep.subr.mxu0 0.0
    %3990 = vmatpush1.msra.mxu0 %v2415
    %3991 = vmatprep.subr.mxu0 0.0
    %3992 = vmatpush2.msra.mxu0 0.0
    %3993 = vmatprep.subr.mxu0 0.0
    %3994 = vmatpush2.msra.mxu0 0.0
    %3995 = vmatprep.subr.mxu0 0.0
    %3996 = vmatpush2.msra.mxu0 0.0
    %3997 = vmatprep.subr.mxu0 0.0
    %3998 = vmatpush2.msra.mxu0 0.0
    %3999 = vmatprep.subr.mxu0 0.0
    %4000 = vmatpush2.msra.mxu0 0.0
    %4001 = vmatprep.subr.mxu0 0.0
    %4002 = vmatpush2.msra.mxu0 0.0
    %4003 = vmatprep.subr.mxu0 0.0
    %4004 = vmatpush2.msra.mxu0 0.0
    %4005 = vmatprep.subr.mxu0 0.0
    %4006 = vmatpush2.msra.mxu0 0.0
    %4007 = vmatprep.subr.mxu0 0.0
    %4008 = vmatpush2.msra.mxu0 0.0
    %4009 = vmatprep.subr.mxu0 0.0
    %4010 = vmatpush2.msra.mxu0 0.0
    %4011 = vmatprep.subr.mxu0 0.0
    %4012 = vmatpush2.msra.mxu0 0.0
    %4013 = vmatprep.subr.mxu0 0.0
    %4014 = vmatpush2.msra.mxu0 0.0
    %4015 = vmatprep.subr.mxu0 0.0
    %4016 = vmatpush2.msra.mxu0 0.0
    %4017 = vmatprep.subr.mxu0 0.0
    %4018 = vmatpush2.msra.mxu0 0.0
    %4019 = vmatprep.subr.mxu0 0.0
    %4020 = vmatpush2.msra.mxu0 0.0
    %4021 = vmatprep.subr.mxu0 0.0
    %4022 = vmatpush2.msra.mxu0 0.0
    %4023 = vmatprep.mubr.f32.mxu0 0.0
    %4024 = vmatmul.mubr.f32.gmra.mxu0 %v3957
    %v4025 = vpop.f32.mrf.mxu0
    %v4026 = vadd.f32 0.0, %v4025
    %v4027 = vpop.f32.mrf.mxu0
    %4028 = vdwg.mxu0
    %v4029 = vadd.f32 %v3953, %v4026
    %v4030 = vxor.u32 %v4029, 2147483648
    %v4031 = vmul.f32 %v4030, 1.442695
    %v4032 = vpow.pop %v4031
    %v4033 = vadd.f32 %v4032, 1.0
    %v4034 = vrcp.pop %v4033
    %v4035 = vmul.f32 1.0, %v4034
    %v4036 = vtanh.pop %v4029
    %v4037 = vmul.f32 %v4035, %v3850
    %4039 = vrot.lane.b32.xlu0 %v4036, 64
    %v4040 = vpop.permute.xlu0 %4039
    %v4042 = vmul.f32 %v4035, %v4040
    %4044 = vrot.lane.b32.xlu0 %v4042, 32
    %v4045 = vpop.permute.xlu0 %4044
    %v4047 = vadd.f32 %v4037, %v4045
    %v4048 = vtanh.pop %v4047
    %4050 = vrot.lane.b32.xlu0 %v4048, 64
    %v4051 = vpop.permute.xlu0 %4050
    %v4053 = vmul.f32 %v4035, %v4051
    %v4054 = vsel %vm392, %v4053, %v3849
    %v4055 = vld [vmem:[%s10] sm:$0xff]
    %v4056 = vld [vmem:[%s10 + $0x8] sm:$0xff]
    %v4057 = vld [vmem:[%s10 + $0x10] sm:$0xff]
    %v4058 = vld [vmem:[%s10 + $0x18] sm:$0xff]
    %v4059 = vld [vmem:[%s11] sm:$0xff]
    %v4060 = vld [vmem:[%s11 + $0x8] sm:$0xff]
    %v4061 = vld [vmem:[%s11 + $0x10] sm:$0xff]
    %v4062 = vld [vmem:[%s11 + $0x18] sm:$0xff]
    %4064 = vrot.lane.b32.xlu0 %v4054, 32
    %v4065 = vpop.permute.xlu0 %4064
    %v4066 = vsel %vm288, %v4065, 0
    %4068 = vmatprep.subr.mxu0 0.0
    %4069 = vmatpush1.msra.mxu0 0.0
    %4070 = vmatprep.subr.mxu0 0.0
    %4071 = vmatpush1.msra.mxu0 0.0
    %4072 = vmatprep.subr.mxu0 0.0
    %4073 = vmatpush1.msra.mxu0 0.0
    %4074 = vmatprep.subr.mxu0 0.0
    %4075 = vmatpush1.msra.mxu0 0.0
    %4076 = vmatprep.subr.mxu0 0.0
    %4077 = vmatpush1.msra.mxu0 0.0
    %4078 = vmatprep.subr.mxu0 0.0
    %4079 = vmatpush1.msra.mxu0 0.0
    %4080 = vmatprep.subr.mxu0 0.0
    %4081 = vmatpush1.msra.mxu0 0.0
    %4082 = vmatprep.subr.mxu0 0.0
    %4083 = vmatpush1.msra.mxu0 0.0
    %4084 = vmatprep.subr.mxu0 0.0
    %4085 = vmatpush1.msra.mxu0 0.0
    %4086 = vmatprep.subr.mxu0 0.0
    %4087 = vmatpush1.msra.mxu0 0.0
    %4088 = vmatprep.subr.mxu0 0.0
    %4089 = vmatpush1.msra.mxu0 0.0
    %4090 = vmatprep.subr.mxu0 0.0
    %4091 = vmatpush1.msra.mxu0 0.0
    %4092 = vmatprep.subr.mxu0 0.0
    %4093 = vmatpush1.msra.mxu0 %v4062
    %4094 = vmatprep.subr.mxu0 0.0
    %4095 = vmatpush1.msra.mxu0 %v4061
    %4096 = vmatprep.subr.mxu0 0.0
    %4097 = vmatpush1.msra.mxu0 %v4060
    %4098 = vmatprep.subr.mxu0 0.0
    %4099 = vmatpush1.msra.mxu0 %v4059
    %4100 = vmatprep.subr.mxu0 0.0
    %4101 = vmatpush2.msra.mxu0 0.0
    %4102 = vmatprep.subr.mxu0 0.0
    %4103 = vmatpush2.msra.mxu0 0.0
    %4104 = vmatprep.subr.mxu0 0.0
    %4105 = vmatpush2.msra.mxu0 0.0
    %4106 = vmatprep.subr.mxu0 0.0
    %4107 = vmatpush2.msra.mxu0 0.0
    %4108 = vmatprep.subr.mxu0 0.0
    %4109 = vmatpush2.msra.mxu0 0.0
    %4110 = vmatprep.subr.mxu0 0.0
    %4111 = vmatpush2.msra.mxu0 0.0
    %4112 = vmatprep.subr.mxu0 0.0
    %4113 = vmatpush2.msra.mxu0 0.0
    %4114 = vmatprep.subr.mxu0 0.0
    %4115 = vmatpush2.msra.mxu0 0.0
    %4116 = vmatprep.subr.mxu0 0.0
    %4117 = vmatpush2.msra.mxu0 0.0
    %4118 = vmatprep.subr.mxu0 0.0
    %4119 = vmatpush2.msra.mxu0 0.0
    %4120 = vmatprep.subr.mxu0 0.0
    %4121 = vmatpush2.msra.mxu0 0.0
    %4122 = vmatprep.subr.mxu0 0.0
    %4123 = vmatpush2.msra.mxu0 0.0
    %4124 = vmatprep.subr.mxu0 0.0
    %4125 = vmatpush2.msra.mxu0 0.0
    %4126 = vmatprep.subr.mxu0 0.0
    %4127 = vmatpush2.msra.mxu0 0.0
    %4128 = vmatprep.subr.mxu0 0.0
    %4129 = vmatpush2.msra.mxu0 0.0
    %4130 = vmatprep.subr.mxu0 0.0
    %4131 = vmatpush2.msra.mxu0 0.0
    %4132 = vmatprep.mubr.f32.mxu0 0.0
    %4133 = vmatmul.mubr.f32.gmra.mxu0 %v4066
    %v4134 = vpop.f32.mrf.mxu0
    %v4135 = vadd.f32 0.0, %v4134
    %v4136 = vpop.f32.mrf.mxu0
    %4137 = vdwg.mxu0
    %4139 = vrot.lane.b32.xlu0 %v3952, 32
    %v4140 = vpop.permute.xlu0 %4139
    %v4141 = vsel %vm288, %v4140, 0
    %4143 = vmatprep.subr.mxu0 0.0
    %4144 = vmatpush1.msra.mxu0 0.0
    %4145 = vmatprep.subr.mxu0 0.0
    %4146 = vmatpush1.msra.mxu0 0.0
    %4147 = vmatprep.subr.mxu0 0.0
    %4148 = vmatpush1.msra.mxu0 0.0
    %4149 = vmatprep.subr.mxu0 0.0
    %4150 = vmatpush1.msra.mxu0 0.0
    %4151 = vmatprep.subr.mxu0 0.0
    %4152 = vmatpush1.msra.mxu0 0.0
    %4153 = vmatprep.subr.mxu0 0.0
    %4154 = vmatpush1.msra.mxu0 0.0
    %4155 = vmatprep.subr.mxu0 0.0
    %4156 = vmatpush1.msra.mxu0 0.0
    %4157 = vmatprep.subr.mxu0 0.0
    %4158 = vmatpush1.msra.mxu0 0.0
    %4159 = vmatprep.subr.mxu0 0.0
    %4160 = vmatpush1.msra.mxu0 0.0
    %4161 = vmatprep.subr.mxu0 0.0
    %4162 = vmatpush1.msra.mxu0 0.0
    %4163 = vmatprep.subr.mxu0 0.0
    %4164 = vmatpush1.msra.mxu0 0.0
    %4165 = vmatprep.subr.mxu0 0.0
    %4166 = vmatpush1.msra.mxu0 0.0
    %4167 = vmatprep.subr.mxu0 0.0
    %4168 = vmatpush1.msra.mxu0 %v4058
    %4169 = vmatprep.subr.mxu0 0.0
    %4170 = vmatpush1.msra.mxu0 %v4057
    %4171 = vmatprep.subr.mxu0 0.0
    %4172 = vmatpush1.msra.mxu0 %v4056
    %4173 = vmatprep.subr.mxu0 0.0
    %4174 = vmatpush1.msra.mxu0 %v4055
    %4175 = vmatprep.subr.mxu0 0.0
    %4176 = vmatpush2.msra.mxu0 0.0
    %4177 = vmatprep.subr.mxu0 0.0
    %4178 = vmatpush2.msra.mxu0 0.0
    %4179 = vmatprep.subr.mxu0 0.0
    %4180 = vmatpush2.msra.mxu0 0.0
    %4181 = vmatprep.subr.mxu0 0.0
    %4182 = vmatpush2.msra.mxu0 0.0
    %4183 = vmatprep.subr.mxu0 0.0
    %4184 = vmatpush2.msra.mxu0 0.0
    %4185 = vmatprep.subr.mxu0 0.0
    %4186 = vmatpush2.msra.mxu0 0.0
    %4187 = vmatprep.subr.mxu0 0.0
    %4188 = vmatpush2.msra.mxu0 0.0
    %4189 = vmatprep.subr.mxu0 0.0
    %4190 = vmatpush2.msra.mxu0 0.0
    %4191 = vmatprep.subr.mxu0 0.0
    %4192 = vmatpush2.msra.mxu0 0.0
    %4193 = vmatprep.subr.mxu0 0.0
    %4194 = vmatpush2.msra.mxu0 0.0
    %4195 = vmatprep.subr.mxu0 0.0
    %4196 = vmatpush2.msra.mxu0 0.0
    %4197 = vmatprep.subr.mxu0 0.0
    %4198 = vmatpush2.msra.mxu0 0.0
    %4199 = vmatprep.subr.mxu0 0.0
    %4200 = vmatpush2.msra.mxu0 0.0
    %4201 = vmatprep.subr.mxu0 0.0
    %4202 = vmatpush2.msra.mxu0 0.0
    %4203 = vmatprep.subr.mxu0 0.0
    %4204 = vmatpush2.msra.mxu0 0.0
    %4205 = vmatprep.subr.mxu0 0.0
    %4206 = vmatpush2.msra.mxu0 0.0
    %4207 = vmatprep.mubr.f32.mxu0 0.0
    %4208 = vmatmul.mubr.f32.gmra.mxu0 %v4141
    %v4209 = vpop.f32.mrf.mxu0
    %v4210 = vadd.f32 %v4135, %v4209
    %v4211 = vpop.f32.mrf.mxu0
    %4212 = vdwg.mxu0
    %v4213 = vld [vmem:[%s12] sm:$0x1]
    %v4215 = vlaneseq
    %v4216 = vshrl.u32 %v4215, 7
    %v4217 = vsub.s32 0, %v4216
    %v4218 = vrot.slane %v4213, %v4217
    %v4220 = vadd.f32 %v4210, %v4218
    %vm4221 = vcmask 39936
    %4222 = vst.msk [vmem:[#allocation15] sm:$0xff] %vm4221, %v4220
    // Predicated region
    $region70: #{tpu_custom_call.1} parent=1 // pred_check
      _
    $region71: #{tpu_custom_call.1} parent=1 // pred_check_branch
      %4224 = sbr.rel (0) target = $region73
    $region72: #{tpu_custom_call.1} parent=1 // pred_region
      %s4226 = ssub.s32 128, 128
      %4227 = vsyncadd [#allocation9], %s4226
      %s4229 = sshll.u32 [#allocation15], 4
      %s4230 = int_to_ptr.vmem [resolvable:$true] %s4229
      %4232 = dma.vmem_to_hbm [thread:$0]  %s4230, 128, %s13, [#allocation9]
    $region73: #{tpu_custom_call.1} parent=1 // pred_fallthru
      _
    // Predicated region
    $region74: #{tpu_custom_call.1} parent=1 // pred_check
      _
    $region75: #{tpu_custom_call.1} parent=1 // pred_check_branch
      %4234 = sbr.rel (0) target = $region77
    $region76: #{tpu_custom_call.1} parent=1 // pred_region
      %4235 = dma.done [#allocation9], 128
    $region77: #{tpu_custom_call.1} parent=1 // pred_fallthru
      _
    %4236 = vsyncpa [#allocation8], 1
    %4237 = vsyncpa [#allocation11], 1
    %4238 = vsyncpa [#allocation14], 1
    %4239 = vsyncpa [#allocation9], 1

</llo_original>
